<compile_context>
chip_gen: v7x
topology: tpu7x:2x2x1
jax: 0.10.0
libtpu: 0.0.40
codegen_flags: <defaults>
</compile_context>

<pallas_src>
import functools
import math

import jax
import jax.numpy as jnp
from jax.experimental import pallas as pl
from jax.experimental.pallas import tpu as pltpu


# ---------------------------------------------------------------------------
# Kernel 1: ConvTranspose2d(k=4, s=2, p=1) + bias as sub-pixel GEMMs,
#           fused per-tile BatchNorm partial statistics, bf16 output in a
#           layout that is a row-major bitcast of the NHWC pixel-shuffled
#           result.
# ---------------------------------------------------------------------------
def _deconv_stats_kernel(xm_ref, h0_ref, h1_ref, w_ref, b_ref, o_ref, st_ref,
                         *, th, w, cin, cout):
    """One haloed input row tile -> interleaved output tile + BN partials.

    xm_ref : (1, th, w+2, cin)     main padded-input rows [t*th, t*th+th)
    h0_ref : (1, 1,  w+2, cin)     halo row t*th+th
    h1_ref : (1, 1,  w+2, cin)     halo row t*th+th+1
    w_ref  : (8, 2*cin, cout)      sub-pixel weights, index = 2*(2*py+px) + dy
    b_ref  : (1, cout)             deconv bias (f32)
    o_ref  : (1, th, 2, w, 2*cout) bf16 output tile (== NHWC rows 2*(t*th+m)+py)
    st_ref : (1, 1, 2, cout)       per-tile [sum, sum_of_squares] (f32)
    """
    # Haloed (th+2, w+2, cin) window, assembled in VMEM (no HBM duplication).
    xt = jnp.concatenate([xm_ref[0], h0_ref[0], h1_ref[0]], axis=0)
    bias = b_ref[...].astype(jnp.float32)                       # (1, cout)
    m = th * w

    # 9 unique shifted windows -> 6 dx-pair slabs with full-lane K = 2*cin.
    slabs = []
    for sy in range(3):
        rows = xt[sy:sy + th]                                   # (th, w+2, cin)
        s0 = rows[:, 0:w, :]
        s1 = rows[:, 1:1 + w, :]
        s2 = rows[:, 2:2 + w, :]
        slabs.append(
            (jnp.concatenate([s0, s1], axis=-1).reshape(m, 2 * cin),
             jnp.concatenate([s1, s2], axis=-1).reshape(m, 2 * cin)))

    ch_sum = jnp.zeros((1, cout), jnp.float32)
    ch_sq = jnp.zeros((1, cout), jnp.float32)

    for py in (0, 1):
        accs = []
        for px in (0, 1):
            p = 2 * py + px
            acc = jnp.dot(slabs[py][px], w_ref[2 * p],
                          preferred_element_type=jnp.float32)
            acc = acc + jnp.dot(slabs[py + 1][px], w_ref[2 * p + 1],
                                preferred_element_type=jnp.float32)
            acc = acc + bias                                    # (m, cout) f32
            ch_sum = ch_sum + jnp.sum(acc, axis=0, keepdims=True)
            ch_sq = ch_sq + jnp.sum(acc * acc, axis=0, keepdims=True)
            accs.append(acc.astype(o_ref.dtype))
        # Even/odd output-column (px) interleave is a lane concat: the (m,
        # 2*cout) result is row-major identical to (th, w, [px, c]) which is
        # exactly the declared output layout.
        o_ref[0, :, py] = jnp.concatenate(accs, axis=-1).reshape(th, w, 2 * cout)

    st_ref[0, 0] = jnp.concatenate([ch_sum, ch_sq], axis=0)     # (2, cout)


# ---------------------------------------------------------------------------
# Kernel 2: fused BatchNorm affine (precomputed scale/shift) + ReLU, on a
#           flat lane-dense (rows, 2*W*Cout) view of the bf16 intermediate.
# ---------------------------------------------------------------------------
def _bn_relu_kernel(y_ref, scale_ref, shift_ref, o_ref):
    y = y_ref[...].astype(jnp.float32)              # (RB, lane)
    o_ref[...] = jnp.maximum(y * scale_ref[...] + shift_ref[...], 0.0)


# ---------------------------------------------------------------------------
# Weight packing: ConvTranspose2d weight -> sub-pixel GEMM weights.
# ---------------------------------------------------------------------------
def _pack_subpixel_weight(weight):
    """(Cin, Cout, 4, 4) -> (8, 2*Cin, Cout), index = 2*(2*py+px) + dy.

    out[2m+py, 2n+px] = sum_{dy,dx} x[m+py+dy-1, n+px+dx-1] @ W[:, :, ky, kx]
    with ky = (3 - py) - 2*dy, kx = (3 - px) - 2*dx; the 2*Cin rows of each
    matrix are ordered (dx=0, dx=1), matching the lane order of the slabs
    built inside the kernel.
    """
    mats = []
    for py in (0, 1):
        for px in (0, 1):
            for dy in (0, 1):
                blocks = []
                for dx in (0, 1):
                    ky = (3 - py) - 2 * dy
                    kx = (3 - px) - 2 * dx
                    blocks.append(weight[:, :, ky, kx])          # (Cin, Cout)
                mats.append(jnp.concatenate(blocks, axis=0))     # (2*Cin, Cout)
    return jnp.stack(mats, axis=0)                               # (8, 2*Cin, Cout)


def _pick_row_tile(h, w_in, m_target=1024):
    """Largest divisor TH of h with TH*w_in <= m_target (prefer M % 8 == 0)."""
    best, best8 = 1, None
    for d in range(1, h + 1):
        if h % d:
            continue
        if d * w_in <= m_target:
            best = d
            if (d * w_in) % 8 == 0:
                best8 = d
    return best8 if best8 is not None else best


def _pick_rows_block(rows, bytes_per_row, budget=8 << 20):
    """Row block for the elementwise kernel: divisor of rows, %8==0, bounded."""
    cap = max(1, budget // max(bytes_per_row, 1))
    if rows <= cap:
        return rows
    best = None
    for d in range(1, rows + 1):
        if rows % d == 0 and d % 8 == 0 and d <= cap:
            best = d
    return best if best is not None else rows


# ---------------------------------------------------------------------------
# DeconvBlock forward.
# ---------------------------------------------------------------------------
def deconv_block_forward(x_nchw, weight, bias, gamma, beta, *, eps=1e-5,
                         compute_dtype=jnp.bfloat16):
    N, Cin, H, W = x_nchw.shape
    Cout = weight.shape[1]
    TH = _pick_row_tile(H, W)
    T = H // TH
    cb = jnp.dtype(compute_dtype).itemsize
    m = TH * W

    # NCHW -> NHWC, zero-pad spatially by 1 (gather form of ConvT k4 s2 p1).
    xp = jnp.pad(jnp.transpose(x_nchw, (0, 2, 3, 1)),
                 ((0, 0), (1, 1), (1, 1), (0, 0))).astype(compute_dtype)

    w_sub = _pack_subpixel_weight(weight).astype(compute_dtype)  # (8, 2Cin, Cout)
    b2 = bias.reshape(1, Cout).astype(jnp.float32)

    kern = functools.partial(_deconv_stats_kernel, th=TH, w=W, cin=Cin, cout=Cout)

    # Computed VMEM budget (double-buffered blocks + in-kernel temporaries).
    block_bytes = (TH * (W + 2) * Cin * cb + 2 * (W + 2) * Cin * cb
                   + 16 * Cin * Cout * cb + Cout * 4
                   + 4 * m * Cout * cb + 2 * Cout * 4)
    temp_bytes = ((TH + 2) * (W + 2) * Cin * cb
                  + 6 * m * 2 * Cin * cb
                  + 6 * m * Cout * 4)
    vmem1 = int(min(max(2 * (2 * block_bytes + temp_bytes), 8 << 20), 32 << 20))

    flops = 32 * N * H * W * Cin * Cout
    bytes_accessed = (N * (H + 2) * (W + 2) * Cin * cb
                      + N * T * 2 * (W + 2) * Cin * cb
                      + 16 * Cin * Cout * cb
                      + 4 * N * H * W * Cout * cb
                      + N * T * 2 * Cout * 4)

    # ---- Pallas kernel 1: deconv + bias + BN partial stats ------------------
    y, stats = pl.pallas_call(
        kern,
        out_shape=(jax.ShapeDtypeStruct((N, H, 2, W, 2 * Cout), compute_dtype),
                   jax.ShapeDtypeStruct((N, T, 2, Cout), jnp.float32)),
        grid=(N, T),
        in_specs=[
            pl.BlockSpec((1, TH, W + 2, Cin), lambda n, t: (n, t, 0, 0)),
            pl.BlockSpec((1, 1, W + 2, Cin), lambda n, t: (n, t * TH + TH, 0, 0)),
            pl.BlockSpec((1, 1, W + 2, Cin), lambda n, t: (n, t * TH + TH + 1, 0, 0)),
            pl.BlockSpec((8, 2 * Cin, Cout), lambda n, t: (0, 0, 0)),
            pl.BlockSpec((1, Cout), lambda n, t: (0, 0)),
        ],
        out_specs=(
            pl.BlockSpec((1, TH, 2, W, 2 * Cout), lambda n, t: (n, t, 0, 0, 0)),
            pl.BlockSpec((1, 1, 2, Cout), lambda n, t: (n, t, 0, 0)),
        ),
        compiler_params=pltpu.CompilerParams(
            dimension_semantics=("parallel", "parallel"),
            vmem_limit_bytes=vmem1),
        cost_estimate=pl.CostEstimate(
            flops=flops, transcendentals=0, bytes_accessed=bytes_accessed),
    )(xp, xp, xp, w_sub, b2)

    # ---- training-mode BatchNorm2d stats from the fused partials ------------
    cnt = jnp.float32(4 * N * H * W)
    ch_sum = jnp.sum(stats[:, :, 0, :], axis=(0, 1))
    ch_sq = jnp.sum(stats[:, :, 1, :], axis=(0, 1))
    mean = ch_sum / cnt
    var = jnp.maximum(ch_sq / cnt - mean * mean, 0.0)   # biased, as torch BN
    inv_std = jax.lax.rsqrt(var + eps)
    scale = gamma.astype(jnp.float32) * inv_std
    shift = beta.astype(jnp.float32) - mean * scale

    # ---- Pallas kernel 2: per-channel affine (BN) + ReLU, lane-dense --------
    rows = 2 * N * H
    lane = 2 * W * Cout
    y2 = y.reshape(rows, lane)                          # free bitcast of NHWC
    scale_t = jnp.tile(scale, 2 * W).reshape(1, lane)
    shift_t = jnp.tile(shift, 2 * W).reshape(1, lane)

    RB = _pick_rows_block(rows, lane * (cb + 4))
    vmem2 = int(min(max(4 * RB * lane * (cb + 4) + 2 * lane * 4 + (2 << 20),
                        8 << 20), 32 << 20))

    out_flat = pl.pallas_call(
        _bn_relu_kernel,
        out_shape=jax.ShapeDtypeStruct((rows, lane), jnp.float32),
        grid=(rows // RB,),
        in_specs=[
            pl.BlockSpec((RB, lane), lambda r: (r, 0)),
            pl.BlockSpec((1, lane), lambda r: (0, 0)),
            pl.BlockSpec((1, lane), lambda r: (0, 0)),
        ],
        out_specs=pl.BlockSpec((RB, lane), lambda r: (r, 0)),
        compiler_params=pltpu.CompilerParams(
            dimension_semantics=("parallel",),
            vmem_limit_bytes=vmem2),
        cost_estimate=pl.CostEstimate(
            flops=3 * rows * lane, transcendentals=0,
            bytes_accessed=rows * lane * (cb + 4) + 2 * lane * 4),
    )(y2, scale_t, shift_t)

    out_nhwc = out_flat.reshape(N, 2 * H, 2 * W, Cout)
    return jnp.transpose(out_nhwc, (0, 3, 1, 2))        # NHWC -> NCHW


# ---------------------------------------------------------------------------
# Pure-JAX reference (mirrors torch: ConvTranspose2d -> BatchNorm2d -> ReLU)
# ---------------------------------------------------------------------------
def _ref_forward(x_nchw, weight, bias, gamma, beta, eps=1e-5):
    w_flip = jnp.flip(weight, axis=(2, 3)).transpose(1, 0, 2, 3)  # (Cout, Cin, 4, 4)
    y = jax.lax.conv_general_dilated(
        x_nchw, w_flip,
        window_strides=(1, 1),
        padding=((2, 2), (2, 2)),
        lhs_dilation=(2, 2),
        dimension_numbers=("NCHW", "OIHW", "NCHW"),
        precision=jax.lax.Precision.HIGHEST)
    y = y + bias[None, :, None, None]
    mean = jnp.mean(y, axis=(0, 2, 3), keepdims=True)
    var = jnp.var(y, axis=(0, 2, 3), keepdims=True)               # biased
    yhat = (y - mean) / jnp.sqrt(var + eps)
    yhat = yhat * gamma[None, :, None, None] + beta[None, :, None, None]
    return jnp.maximum(yhat, 0.0)


if __name__ == "__main__":
    key = jax.random.PRNGKey(0)
    kx, kw, kb, kg, kbt = jax.random.split(key, 5)

    N, Cin, Cout, H, W = 2, 64, 128, 16, 16
    x = jax.random.normal(kx, (N, Cin, H, W), jnp.float32)
    bound = 1.0 / math.sqrt(Cout * 16)
    weight = jax.random.uniform(kw, (Cin, Cout, 4, 4), jnp.float32, -bound, bound)
    bias = jax.random.uniform(kb, (Cout,), jnp.float32, -bound, bound)
    gamma = jax.random.uniform(kg, (Cout,), jnp.float32, 0.5, 1.5)
    beta = jax.random.uniform(kbt, (Cout,), jnp.float32, -0.5, 0.5)

    fwd = jax.jit(deconv_block_forward)
    out = jax.block_until_ready(fwd(x, weight, bias, gamma, beta))
    assert out.shape == (N, Cout, 2 * H, 2 * W), out.shape

    ref = jax.block_until_ready(_ref_forward(x, weight, bias, gamma, beta))
    max_err = float(jnp.max(jnp.abs(out - ref)))
    # bf16 GEMM operands + bf16 intermediate storage: intentional precision
    # contract, verified against the f32 reference at 5e-2.
    assert jnp.allclose(out, ref, atol=5e-2, rtol=5e-2), (
        "mismatch vs reference", max_err)

    print("KERNEL_OK")
</pallas_src>

<mosaic_0001>
module attributes {stable_mosaic.version = 11 : i64} {
  func.func @_deconv_stats_kernel(%arg0: i32, %arg1: i32, %arg2: memref<1x16x18x64xbf16, #tpu.memory_space<vmem>>, %arg3: memref<1x1x18x64xbf16, #tpu.memory_space<vmem>>, %arg4: memref<1x1x18x64xbf16, #tpu.memory_space<vmem>>, %arg5: memref<8x128x128xbf16, #tpu.memory_space<vmem>>, %arg6: memref<1x128xf32, #tpu.memory_space<vmem>>, %arg7: memref<1x16x2x16x256xbf16, #tpu.memory_space<vmem>>, %arg8: memref<1x1x2x128xf32, #tpu.memory_space<vmem>>) attributes {dimension_semantics = [#tpu.dimension_semantics<parallel>, #tpu.dimension_semantics<parallel>], iteration_bounds = array<i64: 2, 1>, scalar_prefetch = 0 : i64, scratch_operands = 0 : i64, tpu.core_type = #tpu.core_type<tc>, window_params = [{transform_indices = @transform_0, window_bounds = array<i64: 1, 16, 18, 64>}, {transform_indices = @transform_1, window_bounds = array<i64: 1, 1, 18, 64>}, {transform_indices = @transform_2, window_bounds = array<i64: 1, 1, 18, 64>}, {pipeline_mode = #tpu.pipeline_mode<synchronous>, transform_indices = @transform_3, window_bounds = array<i64: 8, 128, 128>}, {pipeline_mode = #tpu.pipeline_mode<synchronous>, transform_indices = @transform_4, window_bounds = array<i64: 1, 128>}, {transform_indices = @transform_5, window_bounds = array<i64: 1, 16, 2, 16, 256>}, {transform_indices = @transform_6, window_bounds = array<i64: 1, 1, 2, 128>}]} {
    %c0 = arith.constant 0 : index
    %c0_0 = arith.constant 0 : index
    %c0_1 = arith.constant 0 : index
    %c0_2 = arith.constant 0 : index
    %0 = vector.load %arg2[%c0, %c0_0, %c0_1, %c0_2] : memref<1x16x18x64xbf16, #tpu.memory_space<vmem>>, vector<1x16x18x64xbf16>
    %1 = vector.shape_cast %0 : vector<1x16x18x64xbf16> to vector<16x18x64xbf16>
    %c0_3 = arith.constant 0 : index
    %c0_4 = arith.constant 0 : index
    %c0_5 = arith.constant 0 : index
    %c0_6 = arith.constant 0 : index
    %2 = vector.load %arg3[%c0_3, %c0_4, %c0_5, %c0_6] : memref<1x1x18x64xbf16, #tpu.memory_space<vmem>>, vector<1x1x18x64xbf16>
    %3 = vector.shape_cast %2 : vector<1x1x18x64xbf16> to vector<1x18x64xbf16>
    %c0_7 = arith.constant 0 : index
    %c0_8 = arith.constant 0 : index
    %c0_9 = arith.constant 0 : index
    %c0_10 = arith.constant 0 : index
    %4 = vector.load %arg4[%c0_7, %c0_8, %c0_9, %c0_10] : memref<1x1x18x64xbf16, #tpu.memory_space<vmem>>, vector<1x1x18x64xbf16>
    %5 = vector.shape_cast %4 : vector<1x1x18x64xbf16> to vector<1x18x64xbf16>
    %6 = tpu.concatenate %1, %3, %5 in 0 : vector<16x18x64xbf16>, vector<1x18x64xbf16>, vector<1x18x64xbf16> -> vector<18x18x64xbf16>
    %c0_11 = arith.constant 0 : index
    %c0_12 = arith.constant 0 : index
    %7 = vector.load %arg6[%c0_11, %c0_12] : memref<1x128xf32, #tpu.memory_space<vmem>>, vector<1x128xf32>
    %8 = vector.extract_strided_slice %6 {offsets = [0, 0, 0], sizes = [16, 18, 64], strides = [1, 1, 1]} : vector<18x18x64xbf16> to vector<16x18x64xbf16>
    %9 = vector.extract_strided_slice %8 {offsets = [0, 0, 0], sizes = [16, 16, 64], strides = [1, 1, 1]} : vector<16x18x64xbf16> to vector<16x16x64xbf16>
    %10 = vector.extract_strided_slice %8 {offsets = [0, 1, 0], sizes = [16, 16, 64], strides = [1, 1, 1]} : vector<16x18x64xbf16> to vector<16x16x64xbf16>
    %11 = vector.extract_strided_slice %8 {offsets = [0, 2, 0], sizes = [16, 16, 64], strides = [1, 1, 1]} : vector<16x18x64xbf16> to vector<16x16x64xbf16>
    %12 = tpu.concatenate %9, %10 in 2 : vector<16x16x64xbf16>, vector<16x16x64xbf16> -> vector<16x16x128xbf16>
    %13 = vector.shape_cast %12 : vector<16x16x128xbf16> to vector<256x128xbf16>
    %14 = tpu.concatenate %10, %11 in 2 : vector<16x16x64xbf16>, vector<16x16x64xbf16> -> vector<16x16x128xbf16>
    %15 = vector.shape_cast %14 : vector<16x16x128xbf16> to vector<256x128xbf16>
    %16 = vector.extract_strided_slice %6 {offsets = [1, 0, 0], sizes = [16, 18, 64], strides = [1, 1, 1]} : vector<18x18x64xbf16> to vector<16x18x64xbf16>
    %17 = vector.extract_strided_slice %16 {offsets = [0, 0, 0], sizes = [16, 16, 64], strides = [1, 1, 1]} : vector<16x18x64xbf16> to vector<16x16x64xbf16>
    %18 = vector.extract_strided_slice %16 {offsets = [0, 1, 0], sizes = [16, 16, 64], strides = [1, 1, 1]} : vector<16x18x64xbf16> to vector<16x16x64xbf16>
    %19 = vector.extract_strided_slice %16 {offsets = [0, 2, 0], sizes = [16, 16, 64], strides = [1, 1, 1]} : vector<16x18x64xbf16> to vector<16x16x64xbf16>
    %20 = tpu.concatenate %17, %18 in 2 : vector<16x16x64xbf16>, vector<16x16x64xbf16> -> vector<16x16x128xbf16>
    %21 = vector.shape_cast %20 : vector<16x16x128xbf16> to vector<256x128xbf16>
    %22 = tpu.concatenate %18, %19 in 2 : vector<16x16x64xbf16>, vector<16x16x64xbf16> -> vector<16x16x128xbf16>
    %23 = vector.shape_cast %22 : vector<16x16x128xbf16> to vector<256x128xbf16>
    %24 = vector.extract_strided_slice %6 {offsets = [2, 0, 0], sizes = [16, 18, 64], strides = [1, 1, 1]} : vector<18x18x64xbf16> to vector<16x18x64xbf16>
    %25 = vector.extract_strided_slice %24 {offsets = [0, 0, 0], sizes = [16, 16, 64], strides = [1, 1, 1]} : vector<16x18x64xbf16> to vector<16x16x64xbf16>
    %26 = vector.extract_strided_slice %24 {offsets = [0, 1, 0], sizes = [16, 16, 64], strides = [1, 1, 1]} : vector<16x18x64xbf16> to vector<16x16x64xbf16>
    %27 = vector.extract_strided_slice %24 {offsets = [0, 2, 0], sizes = [16, 16, 64], strides = [1, 1, 1]} : vector<16x18x64xbf16> to vector<16x16x64xbf16>
    %28 = tpu.concatenate %25, %26 in 2 : vector<16x16x64xbf16>, vector<16x16x64xbf16> -> vector<16x16x128xbf16>
    %29 = vector.shape_cast %28 : vector<16x16x128xbf16> to vector<256x128xbf16>
    %30 = tpu.concatenate %26, %27 in 2 : vector<16x16x64xbf16>, vector<16x16x64xbf16> -> vector<16x16x128xbf16>
    %31 = vector.shape_cast %30 : vector<16x16x128xbf16> to vector<256x128xbf16>
    %cst = arith.constant 0.000000e+00 : f32
    %32 = vector.broadcast %cst : f32 to vector<1x128xf32>
    %cst_13 = arith.constant 0.000000e+00 : f32
    %33 = vector.broadcast %cst_13 : f32 to vector<1x128xf32>
    %c0_14 = arith.constant 0 : index
    %c0_15 = arith.constant 0 : index
    %c0_16 = arith.constant 0 : index
    %34 = vector.load %arg5[%c0_14, %c0_15, %c0_16] : memref<8x128x128xbf16, #tpu.memory_space<vmem>>, vector<1x128x128xbf16>
    %35 = vector.shape_cast %34 : vector<1x128x128xbf16> to vector<128x128xbf16>
    %cst_17 = arith.constant dense<0.000000e+00> : vector<256x128xf32>
    %36 = tpu.matmul %13, %35, %cst_17 {dimension_numbers = #tpu.dot_dimension_numbers<[1], [0], [0], [1], [0, 0, 1, 1], [], []>} : vector<256x128xbf16>, vector<128x128xbf16>, vector<256x128xf32> -> vector<256x128xf32>
    %c1 = arith.constant 1 : index
    %c0_18 = arith.constant 0 : index
    %c0_19 = arith.constant 0 : index
    %37 = vector.load %arg5[%c1, %c0_18, %c0_19] : memref<8x128x128xbf16, #tpu.memory_space<vmem>>, vector<1x128x128xbf16>
    %38 = vector.shape_cast %37 : vector<1x128x128xbf16> to vector<128x128xbf16>
    %cst_20 = arith.constant dense<0.000000e+00> : vector<256x128xf32>
    %39 = tpu.matmul %21, %38, %cst_20 {dimension_numbers = #tpu.dot_dimension_numbers<[1], [0], [0], [1], [0, 0, 1, 1], [], []>} : vector<256x128xbf16>, vector<128x128xbf16>, vector<256x128xf32> -> vector<256x128xf32>
    %40 = arith.addf %36, %39 : vector<256x128xf32>
    %41 = vector.broadcast %7 : vector<1x128xf32> to vector<256x128xf32>
    %42 = arith.addf %40, %41 : vector<256x128xf32>
    %cst_21 = arith.constant dense<0.000000e+00> : vector<128xf32>
    %43 = vector.multi_reduction <add>, %42, %cst_21 [0] : vector<256x128xf32> to vector<128xf32>
    %44 = vector.shape_cast %43 : vector<128xf32> to vector<1x128xf32>
    %45 = arith.addf %32, %44 : vector<1x128xf32>
    %46 = arith.mulf %42, %42 : vector<256x128xf32>
    %cst_22 = arith.constant dense<0.000000e+00> : vector<128xf32>
    %47 = vector.multi_reduction <add>, %46, %cst_22 [0] : vector<256x128xf32> to vector<128xf32>
    %48 = vector.shape_cast %47 : vector<128xf32> to vector<1x128xf32>
    %49 = arith.addf %33, %48 : vector<1x128xf32>
    %50 = arith.truncf %42 : vector<256x128xf32> to vector<256x128xbf16>
    %c2 = arith.constant 2 : index
    %c0_23 = arith.constant 0 : index
    %c0_24 = arith.constant 0 : index
    %51 = vector.load %arg5[%c2, %c0_23, %c0_24] : memref<8x128x128xbf16, #tpu.memory_space<vmem>>, vector<1x128x128xbf16>
    %52 = vector.shape_cast %51 : vector<1x128x128xbf16> to vector<128x128xbf16>
    %cst_25 = arith.constant dense<0.000000e+00> : vector<256x128xf32>
    %53 = tpu.matmul %15, %52, %cst_25 {dimension_numbers = #tpu.dot_dimension_numbers<[1], [0], [0], [1], [0, 0, 1, 1], [], []>} : vector<256x128xbf16>, vector<128x128xbf16>, vector<256x128xf32> -> vector<256x128xf32>
    %c3 = arith.constant 3 : index
    %c0_26 = arith.constant 0 : index
    %c0_27 = arith.constant 0 : index
    %54 = vector.load %arg5[%c3, %c0_26, %c0_27] : memref<8x128x128xbf16, #tpu.memory_space<vmem>>, vector<1x128x128xbf16>
    %55 = vector.shape_cast %54 : vector<1x128x128xbf16> to vector<128x128xbf16>
    %cst_28 = arith.constant dense<0.000000e+00> : vector<256x128xf32>
    %56 = tpu.matmul %23, %55, %cst_28 {dimension_numbers = #tpu.dot_dimension_numbers<[1], [0], [0], [1], [0, 0, 1, 1], [], []>} : vector<256x128xbf16>, vector<128x128xbf16>, vector<256x128xf32> -> vector<256x128xf32>
    %57 = arith.addf %53, %56 : vector<256x128xf32>
    %58 = vector.broadcast %7 : vector<1x128xf32> to vector<256x128xf32>
    %59 = arith.addf %57, %58 : vector<256x128xf32>
    %cst_29 = arith.constant dense<0.000000e+00> : vector<128xf32>
    %60 = vector.multi_reduction <add>, %59, %cst_29 [0] : vector<256x128xf32> to vector<128xf32>
    %61 = vector.shape_cast %60 : vector<128xf32> to vector<1x128xf32>
    %62 = arith.addf %45, %61 : vector<1x128xf32>
    %63 = arith.mulf %59, %59 : vector<256x128xf32>
    %cst_30 = arith.constant dense<0.000000e+00> : vector<128xf32>
    %64 = vector.multi_reduction <add>, %63, %cst_30 [0] : vector<256x128xf32> to vector<128xf32>
    %65 = vector.shape_cast %64 : vector<128xf32> to vector<1x128xf32>
    %66 = arith.addf %49, %65 : vector<1x128xf32>
    %67 = arith.truncf %59 : vector<256x128xf32> to vector<256x128xbf16>
    %68 = tpu.concatenate %50, %67 in 1 : vector<256x128xbf16>, vector<256x128xbf16> -> vector<256x256xbf16>
    %69 = vector.shape_cast %68 : vector<256x256xbf16> to vector<16x16x256xbf16>
    %c0_31 = arith.constant 0 : index
    %c0_32 = arith.constant 0 : index
    %c0_33 = arith.constant 0 : index
    %c0_34 = arith.constant 0 : index
    %c0_35 = arith.constant 0 : index
    %70 = vector.load %arg7[%c0_31, %c0_32, %c0_33, %c0_34, %c0_35] : memref<1x16x2x16x256xbf16, #tpu.memory_space<vmem>>, vector<1x16x1x16x256xbf16>
    %71 = vector.shape_cast %70 : vector<1x16x1x16x256xbf16> to vector<16x16x256xbf16>
    %72 = vector.shape_cast %69 : vector<16x16x256xbf16> to vector<1x16x1x16x256xbf16>
    tpu.vector_store %arg7[%c0_31, %c0_32, %c0_33, %c0_34, %c0_35], %72 {strides = array<i32>} : memref<1x16x2x16x256xbf16, #tpu.memory_space<vmem>>, vector<1x16x1x16x256xbf16>,
    %c4 = arith.constant 4 : index
    %c0_36 = arith.constant 0 : index
    %c0_37 = arith.constant 0 : index
    %73 = vector.load %arg5[%c4, %c0_36, %c0_37] : memref<8x128x128xbf16, #tpu.memory_space<vmem>>, vector<1x128x128xbf16>
    %74 = vector.shape_cast %73 : vector<1x128x128xbf16> to vector<128x128xbf16>
    %cst_38 = arith.constant dense<0.000000e+00> : vector<256x128xf32>
    %75 = tpu.matmul %21, %74, %cst_38 {dimension_numbers = #tpu.dot_dimension_numbers<[1], [0], [0], [1], [0, 0, 1, 1], [], []>} : vector<256x128xbf16>, vector<128x128xbf16>, vector<256x128xf32> -> vector<256x128xf32>
    %c5 = arith.constant 5 : index
    %c0_39 = arith.constant 0 : index
    %c0_40 = arith.constant 0 : index
    %76 = vector.load %arg5[%c5, %c0_39, %c0_40] : memref<8x128x128xbf16, #tpu.memory_space<vmem>>, vector<1x128x128xbf16>
    %77 = vector.shape_cast %76 : vector<1x128x128xbf16> to vector<128x128xbf16>
    %cst_41 = arith.constant dense<0.000000e+00> : vector<256x128xf32>
    %78 = tpu.matmul %29, %77, %cst_41 {dimension_numbers = #tpu.dot_dimension_numbers<[1], [0], [0], [1], [0, 0, 1, 1], [], []>} : vector<256x128xbf16>, vector<128x128xbf16>, vector<256x128xf32> -> vector<256x128xf32>
    %79 = arith.addf %75, %78 : vector<256x128xf32>
    %80 = vector.broadcast %7 : vector<1x128xf32> to vector<256x128xf32>
    %81 = arith.addf %79, %80 : vector<256x128xf32>
    %cst_42 = arith.constant dense<0.000000e+00> : vector<128xf32>
    %82 = vector.multi_reduction <add>, %81, %cst_42 [0] : vector<256x128xf32> to vector<128xf32>
    %83 = vector.shape_cast %82 : vector<128xf32> to vector<1x128xf32>
    %84 = arith.addf %62, %83 : vector<1x128xf32>
    %85 = arith.mulf %81, %81 : vector<256x128xf32>
    %cst_43 = arith.constant dense<0.000000e+00> : vector<128xf32>
    %86 = vector.multi_reduction <add>, %85, %cst_43 [0] : vector<256x128xf32> to vector<128xf32>
    %87 = vector.shape_cast %86 : vector<128xf32> to vector<1x128xf32>
    %88 = arith.addf %66, %87 : vector<1x128xf32>
    %89 = arith.truncf %81 : vector<256x128xf32> to vector<256x128xbf16>
    %c6 = arith.constant 6 : index
    %c0_44 = arith.constant 0 : index
    %c0_45 = arith.constant 0 : index
    %90 = vector.load %arg5[%c6, %c0_44, %c0_45] : memref<8x128x128xbf16, #tpu.memory_space<vmem>>, vector<1x128x128xbf16>
    %91 = vector.shape_cast %90 : vector<1x128x128xbf16> to vector<128x128xbf16>
    %cst_46 = arith.constant dense<0.000000e+00> : vector<256x128xf32>
    %92 = tpu.matmul %23, %91, %cst_46 {dimension_numbers = #tpu.dot_dimension_numbers<[1], [0], [0], [1], [0, 0, 1, 1], [], []>} : vector<256x128xbf16>, vector<128x128xbf16>, vector<256x128xf32> -> vector<256x128xf32>
    %c7 = arith.constant 7 : index
    %c0_47 = arith.constant 0 : index
    %c0_48 = arith.constant 0 : index
    %93 = vector.load %arg5[%c7, %c0_47, %c0_48] : memref<8x128x128xbf16, #tpu.memory_space<vmem>>, vector<1x128x128xbf16>
    %94 = vector.shape_cast %93 : vector<1x128x128xbf16> to vector<128x128xbf16>
    %cst_49 = arith.constant dense<0.000000e+00> : vector<256x128xf32>
    %95 = tpu.matmul %31, %94, %cst_49 {dimension_numbers = #tpu.dot_dimension_numbers<[1], [0], [0], [1], [0, 0, 1, 1], [], []>} : vector<256x128xbf16>, vector<128x128xbf16>, vector<256x128xf32> -> vector<256x128xf32>
    %96 = arith.addf %92, %95 : vector<256x128xf32>
    %97 = vector.broadcast %7 : vector<1x128xf32> to vector<256x128xf32>
    %98 = arith.addf %96, %97 : vector<256x128xf32>
    %cst_50 = arith.constant dense<0.000000e+00> : vector<128xf32>
    %99 = vector.multi_reduction <add>, %98, %cst_50 [0] : vector<256x128xf32> to vector<128xf32>
    %100 = vector.shape_cast %99 : vector<128xf32> to vector<1x128xf32>
    %101 = arith.addf %84, %100 : vector<1x128xf32>
    %102 = arith.mulf %98, %98 : vector<256x128xf32>
    %cst_51 = arith.constant dense<0.000000e+00> : vector<128xf32>
    %103 = vector.multi_reduction <add>, %102, %cst_51 [0] : vector<256x128xf32> to vector<128xf32>
    %104 = vector.shape_cast %103 : vector<128xf32> to vector<1x128xf32>
    %105 = arith.addf %88, %104 : vector<1x128xf32>
    %106 = arith.truncf %98 : vector<256x128xf32> to vector<256x128xbf16>
    %107 = tpu.concatenate %89, %106 in 1 : vector<256x128xbf16>, vector<256x128xbf16> -> vector<256x256xbf16>
    %108 = vector.shape_cast %107 : vector<256x256xbf16> to vector<16x16x256xbf16>
    %c0_52 = arith.constant 0 : index
    %c0_53 = arith.constant 0 : index
    %c1_54 = arith.constant 1 : index
    %c0_55 = arith.constant 0 : index
    %c0_56 = arith.constant 0 : index
    %109 = vector.load %arg7[%c0_52, %c0_53, %c1_54, %c0_55, %c0_56] : memref<1x16x2x16x256xbf16, #tpu.memory_space<vmem>>, vector<1x16x1x16x256xbf16>
    %110 = vector.shape_cast %109 : vector<1x16x1x16x256xbf16> to vector<16x16x256xbf16>
    %111 = vector.shape_cast %108 : vector<16x16x256xbf16> to vector<1x16x1x16x256xbf16>
    tpu.vector_store %arg7[%c0_52, %c0_53, %c1_54, %c0_55, %c0_56], %111 {strides = array<i32>} : memref<1x16x2x16x256xbf16, #tpu.memory_space<vmem>>, vector<1x16x1x16x256xbf16>,
    %112 = tpu.concatenate %101, %105 in 0 : vector<1x128xf32>, vector<1x128xf32> -> vector<2x128xf32>
    %c0_57 = arith.constant 0 : index
    %c0_58 = arith.constant 0 : index
    %c0_59 = arith.constant 0 : index
    %c0_60 = arith.constant 0 : index
    %113 = vector.load %arg8[%c0_57, %c0_58, %c0_59, %c0_60] : memref<1x1x2x128xf32, #tpu.memory_space<vmem>>, vector<1x1x2x128xf32>
    %114 = vector.shape_cast %113 : vector<1x1x2x128xf32> to vector<2x128xf32>
    %115 = vector.shape_cast %112 : vector<2x128xf32> to vector<1x1x2x128xf32>
    tpu.vector_store %arg8[%c0_57, %c0_58, %c0_59, %c0_60], %115 {strides = array<i32>} : memref<1x1x2x128xf32, #tpu.memory_space<vmem>>, vector<1x1x2x128xf32>,
    return
  }
  func.func @transform_0(%arg0: i32, %arg1: i32) -> (i32, i32, i32, i32) {
    %c0_i32 = arith.constant 0 : i32
    %c0_i32_0 = arith.constant 0 : i32
    %c0_i32_1 = arith.constant 0 : i32
    return %arg0, %arg1, %c0_i32, %c0_i32_0 : i32, i32, i32, i32
  }
  func.func @transform_1(%arg0: i32, %arg1: i32) -> (i32, i32, i32, i32) {
    %c16_i32 = arith.constant 16 : i32
    %0 = arith.muli %arg1, %c16_i32 : i32
    %c16_i32_0 = arith.constant 16 : i32
    %1 = arith.addi %0, %c16_i32_0 : i32
    %c0_i32 = arith.constant 0 : i32
    %c0_i32_1 = arith.constant 0 : i32
    %c0_i32_2 = arith.constant 0 : i32
    return %arg0, %1, %c0_i32, %c0_i32_1 : i32, i32, i32, i32
  }
  func.func @transform_2(%arg0: i32, %arg1: i32) -> (i32, i32, i32, i32) {
    %c16_i32 = arith.constant 16 : i32
    %0 = arith.muli %arg1, %c16_i32 : i32
    %c16_i32_0 = arith.constant 16 : i32
    %1 = arith.addi %0, %c16_i32_0 : i32
    %c1_i32 = arith.constant 1 : i32
    %2 = arith.addi %1, %c1_i32 : i32
    %c0_i32 = arith.constant 0 : i32
    %c0_i32_1 = arith.constant 0 : i32
    %c0_i32_2 = arith.constant 0 : i32
    return %arg0, %2, %c0_i32, %c0_i32_1 : i32, i32, i32, i32
  }
  func.func @transform_3(%arg0: i32, %arg1: i32) -> (i32, i32, i32) {
    %c0_i32 = arith.constant 0 : i32
    %c0_i32_0 = arith.constant 0 : i32
    %c0_i32_1 = arith.constant 0 : i32
    %c0_i32_2 = arith.constant 0 : i32
    return %c0_i32, %c0_i32_0, %c0_i32_1 : i32, i32, i32
  }
  func.func @transform_4(%arg0: i32, %arg1: i32) -> (i32, i32) {
    %c0_i32 = arith.constant 0 : i32
    %c0_i32_0 = arith.constant 0 : i32
    %c0_i32_1 = arith.constant 0 : i32
    return %c0_i32, %c0_i32_0 : i32, i32
  }
  func.func @transform_5(%arg0: i32, %arg1: i32) -> (i32, i32, i32, i32, i32) {
    %c0_i32 = arith.constant 0 : i32
    %c0_i32_0 = arith.constant 0 : i32
    %c0_i32_1 = arith.constant 0 : i32
    %c0_i32_2 = arith.constant 0 : i32
    return %arg0, %arg1, %c0_i32, %c0_i32_0, %c0_i32_1 : i32, i32, i32, i32, i32
  }
  func.func @transform_6(%arg0: i32, %arg1: i32) -> (i32, i32, i32, i32) {
    %c0_i32 = arith.constant 0 : i32
    %c0_i32_0 = arith.constant 0 : i32
    %c0_i32_1 = arith.constant 0 : i32
    return %arg0, %arg1, %c0_i32, %c0_i32_0 : i32, i32, i32, i32
  }
}

module attributes {stable_mosaic.version = 11 : i64} {
  func.func @_bn_relu_kernel(%arg0: i32, %arg1: memref<64x4096xbf16, #tpu.memory_space<vmem>>, %arg2: memref<1x4096xf32, #tpu.memory_space<vmem>>, %arg3: memref<1x4096xf32, #tpu.memory_space<vmem>>, %arg4: memref<64x4096xf32, #tpu.memory_space<vmem>>) attributes {dimension_semantics = [#tpu.dimension_semantics<parallel>], iteration_bounds = array<i64: 1>, scalar_prefetch = 0 : i64, scratch_operands = 0 : i64, tpu.core_type = #tpu.core_type<tc>, window_params = [{transform_indices = @transform_0, window_bounds = array<i64: 64, 4096>}, {pipeline_mode = #tpu.pipeline_mode<synchronous>, transform_indices = @transform_1, window_bounds = array<i64: 1, 4096>}, {pipeline_mode = #tpu.pipeline_mode<synchronous>, transform_indices = @transform_2, window_bounds = array<i64: 1, 4096>}, {transform_indices = @transform_3, window_bounds = array<i64: 64, 4096>}]} {
    %c0 = arith.constant 0 : index
    %c0_0 = arith.constant 0 : index
    %0 = vector.load %arg1[%c0, %c0_0] : memref<64x4096xbf16, #tpu.memory_space<vmem>>, vector<64x4096xbf16>
    %1 = arith.extf %0 : vector<64x4096xbf16> to vector<64x4096xf32>
    %c0_1 = arith.constant 0 : index
    %c0_2 = arith.constant 0 : index
    %2 = vector.load %arg2[%c0_1, %c0_2] : memref<1x4096xf32, #tpu.memory_space<vmem>>, vector<1x4096xf32>
    %3 = vector.broadcast %2 : vector<1x4096xf32> to vector<64x4096xf32>
    %4 = arith.mulf %1, %3 : vector<64x4096xf32>
    %c0_3 = arith.constant 0 : index
    %c0_4 = arith.constant 0 : index
    %5 = vector.load %arg3[%c0_3, %c0_4] : memref<1x4096xf32, #tpu.memory_space<vmem>>, vector<1x4096xf32>
    %6 = vector.broadcast %5 : vector<1x4096xf32> to vector<64x4096xf32>
    %7 = arith.addf %4, %6 : vector<64x4096xf32>
    %cst = arith.constant 0.000000e+00 : f32
    %8 = vector.broadcast %cst : f32 to vector<64x4096xf32>
    %9 = arith.maximumf %7, %8 : vector<64x4096xf32>
    %c0_5 = arith.constant 0 : index
    %c0_6 = arith.constant 0 : index
    %10 = vector.load %arg4[%c0_5, %c0_6] : memref<64x4096xf32, #tpu.memory_space<vmem>>, vector<64x4096xf32>
    tpu.vector_store %arg4[%c0_5, %c0_6], %9 {strides = array<i32>} : memref<64x4096xf32, #tpu.memory_space<vmem>>, vector<64x4096xf32>,
    return
  }
  func.func @transform_0(%arg0: i32) -> (i32, i32) {
    %c0_i32 = arith.constant 0 : i32
    %c0_i32_0 = arith.constant 0 : i32
    return %arg0, %c0_i32 : i32, i32
  }
  func.func @transform_1(%arg0: i32) -> (i32, i32) {
    %c0_i32 = arith.constant 0 : i32
    %c0_i32_0 = arith.constant 0 : i32
    %c0_i32_1 = arith.constant 0 : i32
    return %c0_i32, %c0_i32_0 : i32, i32
  }
  func.func @transform_2(%arg0: i32) -> (i32, i32) {
    %c0_i32 = arith.constant 0 : i32
    %c0_i32_0 = arith.constant 0 : i32
    %c0_i32_1 = arith.constant 0 : i32
    return %c0_i32, %c0_i32_0 : i32, i32
  }
  func.func @transform_3(%arg0: i32) -> (i32, i32) {
    %c0_i32 = arith.constant 0 : i32
    %c0_i32_0 = arith.constant 0 : i32
    return %arg0, %c0_i32 : i32, i32
  }
}

</mosaic_0001>

<llo_original>
// kernel: tile.18
$region0: #{tile.18}
  #allocation0 [shape = 's32[1]{0}', space=sflag, size = 0x4, scoped, tag = 'scoped memory for tile.18']
  %s0 = inlined_call_operand.vmem [shape: f32[128], index: 0, kind: input, shape index: {}]
  %s1 = inlined_call_operand.vmem [shape: f32[32,128], index: 1, kind: output, shape index: {}]
  // Predicated region
  $region2: #{tile.18} parent=0 // pred_check
    _
  $region3: #{tile.18} parent=0 // pred_check_branch
    %3 = sbr.rel (0) target = $region5
  $region4: #{tile.18} parent=0 // pred_region
    _
  $region5: #{tile.18} parent=0 // pred_fallthru
    _
  %v4 = vld [vmem:[%s0] ss:$0 sm:$0xff]
  %5 = vst [vmem:[%s1] sm:$0xff] %v4
  %s6 = scalar_lea.vmem %s1, 8
  %7 = vst [vmem:[%s6] sm:$0xff] %v4
  %s8 = scalar_lea.vmem %s1, 16
  %9 = vst [vmem:[%s8] sm:$0xff] %v4
  %s10 = scalar_lea.vmem %s1, 24
  %11 = vst [vmem:[%s10] sm:$0xff] %v4

// kernel: deconv_block_forward.3
$region0: #{deconv_block_forward.3}
  #allocation0 [shape = 'u32[]', space=smem, size = 0x4, offset = 0x4, fixed_abs, tag = 'smem constant byte address 0x4 - core index']
  #allocation1 [shape = 'u32[144,128]{1,0:T(1,128)}', space=vmem, size = 0x12000, scoped, tag = 'internal scratch']
  %s0 = inlined_call_operand.vmem [shape: bf16[64,4096], index: 0, kind: input, shape index: {}]
  %s1 = inlined_call_operand.vmem [shape: f32[1,4096], index: 1, kind: input, shape index: {}]
  %s2 = inlined_call_operand.vmem [shape: f32[1,4096], index: 2, kind: input, shape index: {}]
  %s3 = inlined_call_operand.vmem [shape: f32[64,4096], index: 3, kind: output, shape index: {}]
  %s4 = sld [smem:[#allocation0]]
  $region22: #{deconv_block_forward.3} parent=0
    _
  %s6 = ssub.s32 1, %s4
  %s7 = scalar_select 0, %s6, %s4
  // Predicated region
  $region2: #{deconv_block_forward.3} parent=0 // pred_check
    _
  $region3: #{deconv_block_forward.3} parent=0 // pred_check_branch
    %9 = sbr.rel (0) target = $region5
  $region4: #{deconv_block_forward.3} parent=0 // pred_region
    _
  $region5: #{deconv_block_forward.3} parent=0 // pred_fallthru
    _
  // Predicated region
  $region6: #{deconv_block_forward.3} parent=0 // pred_check
    _
  $region7: #{deconv_block_forward.3} parent=0 // pred_check_branch
    %11 = sbr.rel (0) target = $region9
  $region8: #{deconv_block_forward.3} parent=0 // pred_region
    _
  $region9: #{deconv_block_forward.3} parent=0 // pred_fallthru
    _
  // Predicated region
  $region10: #{deconv_block_forward.3} parent=0 // pred_check
    _
  $region11: #{deconv_block_forward.3} parent=0 // pred_check_branch
    %13 = sbr.rel (0) target = $region13
  $region12: #{deconv_block_forward.3} parent=0 // pred_region
    _
  $region13: #{deconv_block_forward.3} parent=0 // pred_fallthru
    _
  %v14 = vld [vmem:[%s0] sm:$0xff]
  %v15 = vld [vmem:[%s0 + $0x8] sm:$0xff]
  %v16 = vld [vmem:[%s0 + $0x10] sm:$0xff]
  %v17 = vld [vmem:[%s0 + $0x18] sm:$0xff]
  %v18 = vld [vmem:[%s0 + $0x20] sm:$0xff]
  %v19 = vld [vmem:[%s0 + $0x28] sm:$0xff]
  %v20 = vld [vmem:[%s0 + $0x30] sm:$0xff]
  %v21 = vld [vmem:[%s0 + $0x38] sm:$0xff]
  %v22 = vld [vmem:[%s0 + $0x40] sm:$0xff]
  %v23 = vld [vmem:[%s0 + $0x48] sm:$0xff]
  %v24 = vld [vmem:[%s0 + $0x50] sm:$0xff]
  %v25 = vld [vmem:[%s0 + $0x58] sm:$0xff]
  %v26 = vld [vmem:[%s0 + $0x60] sm:$0xff]
  %v27 = vld [vmem:[%s0 + $0x68] sm:$0xff]
  %v28 = vld [vmem:[%s0 + $0x70] sm:$0xff]
  %v29 = vld [vmem:[%s0 + $0x78] sm:$0xff]
  %v30 = vld [vmem:[%s0 + $0x80] sm:$0xff]
  %v31 = vld [vmem:[%s0 + $0x88] sm:$0xff]
  %v32 = vld [vmem:[%s0 + $0x90] sm:$0xff]
  %v33 = vld [vmem:[%s0 + $0x98] sm:$0xff]
  %v34 = vld [vmem:[%s0 + $0xa0] sm:$0xff]
  %v35 = vld [vmem:[%s0 + $0xa8] sm:$0xff]
  %v36 = vld [vmem:[%s0 + $0xb0] sm:$0xff]
  %v37 = vld [vmem:[%s0 + $0xb8] sm:$0xff]
  %v38 = vld [vmem:[%s0 + $0xc0] sm:$0xff]
  %v39 = vld [vmem:[%s0 + $0xc8] sm:$0xff]
  %v40 = vld [vmem:[%s0 + $0xd0] sm:$0xff]
  %v41 = vld [vmem:[%s0 + $0xd8] sm:$0xff]
  %v42 = vld [vmem:[%s0 + $0xe0] sm:$0xff]
  %v43 = vld [vmem:[%s0 + $0xe8] sm:$0xff]
  %v44 = vld [vmem:[%s0 + $0xf0] sm:$0xff]
  %v45 = vld [vmem:[%s0 + $0xf8] sm:$0xff]
  %v46 = vld [vmem:[%s0 + $0x100] sm:$0xff]
  %v47 = vld [vmem:[%s0 + $0x108] sm:$0xff]
  %v48 = vld [vmem:[%s0 + $0x110] sm:$0xff]
  %v49 = vld [vmem:[%s0 + $0x118] sm:$0xff]
  %v50 = vld [vmem:[%s0 + $0x120] sm:$0xff]
  %v51 = vld [vmem:[%s0 + $0x128] sm:$0xff]
  %v52 = vld [vmem:[%s0 + $0x130] sm:$0xff]
  %v53 = vld [vmem:[%s0 + $0x138] sm:$0xff]
  %v54 = vld [vmem:[%s0 + $0x140] sm:$0xff]
  %v55 = vld [vmem:[%s0 + $0x148] sm:$0xff]
  %v56 = vld [vmem:[%s0 + $0x150] sm:$0xff]
  %v57 = vld [vmem:[%s0 + $0x158] sm:$0xff]
  %v58 = vld [vmem:[%s0 + $0x160] sm:$0xff]
  %v59 = vld [vmem:[%s0 + $0x168] sm:$0xff]
  %v60 = vld [vmem:[%s0 + $0x170] sm:$0xff]
  %v61 = vld [vmem:[%s0 + $0x178] sm:$0xff]
  %v62 = vld [vmem:[%s0 + $0x180] sm:$0xff]
  %v63 = vld [vmem:[%s0 + $0x188] sm:$0xff]
  %v64 = vld [vmem:[%s0 + $0x190] sm:$0xff]
  %v65 = vld [vmem:[%s0 + $0x198] sm:$0xff]
  %v66 = vld [vmem:[%s0 + $0x1a0] sm:$0xff]
  %v67 = vld [vmem:[%s0 + $0x1a8] sm:$0xff]
  %v68 = vld [vmem:[%s0 + $0x1b0] sm:$0xff]
  %v69 = vld [vmem:[%s0 + $0x1b8] sm:$0xff]
  %v70 = vld [vmem:[%s0 + $0x1c0] sm:$0xff]
  %v71 = vld [vmem:[%s0 + $0x1c8] sm:$0xff]
  %v72 = vld [vmem:[%s0 + $0x1d0] sm:$0xff]
  %v73 = vld [vmem:[%s0 + $0x1d8] sm:$0xff]
  %v74 = vld [vmem:[%s0 + $0x1e0] sm:$0xff]
  %v75 = vld [vmem:[%s0 + $0x1e8] sm:$0xff]
  %v76 = vld [vmem:[%s0 + $0x1f0] sm:$0xff]
  %v77 = vld [vmem:[%s0 + $0x1f8] sm:$0xff]
  %v78 = vld [vmem:[%s0 + $0x200] sm:$0xff]
  %v79 = vld [vmem:[%s0 + $0x208] sm:$0xff]
  %v80 = vld [vmem:[%s0 + $0x210] sm:$0xff]
  %v81 = vld [vmem:[%s0 + $0x218] sm:$0xff]
  %v82 = vld [vmem:[%s0 + $0x220] sm:$0xff]
  %v83 = vld [vmem:[%s0 + $0x228] sm:$0xff]
  %v84 = vld [vmem:[%s0 + $0x230] sm:$0xff]
  %v85 = vld [vmem:[%s0 + $0x238] sm:$0xff]
  %v86 = vld [vmem:[%s0 + $0x240] sm:$0xff]
  %v87 = vld [vmem:[%s0 + $0x248] sm:$0xff]
  %v88 = vld [vmem:[%s0 + $0x250] sm:$0xff]
  %v89 = vld [vmem:[%s0 + $0x258] sm:$0xff]
  %v90 = vld [vmem:[%s0 + $0x260] sm:$0xff]
  %v91 = vld [vmem:[%s0 + $0x268] sm:$0xff]
  %v92 = vld [vmem:[%s0 + $0x270] sm:$0xff]
  %v93 = vld [vmem:[%s0 + $0x278] sm:$0xff]
  %v94 = vld [vmem:[%s0 + $0x280] sm:$0xff]
  %v95 = vld [vmem:[%s0 + $0x288] sm:$0xff]
  %v96 = vld [vmem:[%s0 + $0x290] sm:$0xff]
  %v97 = vld [vmem:[%s0 + $0x298] sm:$0xff]
  %v98 = vld [vmem:[%s0 + $0x2a0] sm:$0xff]
  %v99 = vld [vmem:[%s0 + $0x2a8] sm:$0xff]
  %v100 = vld [vmem:[%s0 + $0x2b0] sm:$0xff]
  %v101 = vld [vmem:[%s0 + $0x2b8] sm:$0xff]
  %v102 = vld [vmem:[%s0 + $0x2c0] sm:$0xff]
  %v103 = vld [vmem:[%s0 + $0x2c8] sm:$0xff]
  %v104 = vld [vmem:[%s0 + $0x2d0] sm:$0xff]
  %v105 = vld [vmem:[%s0 + $0x2d8] sm:$0xff]
  %v106 = vld [vmem:[%s0 + $0x2e0] sm:$0xff]
  %v107 = vld [vmem:[%s0 + $0x2e8] sm:$0xff]
  %v108 = vld [vmem:[%s0 + $0x2f0] sm:$0xff]
  %v109 = vld [vmem:[%s0 + $0x2f8] sm:$0xff]
  %v110 = vld [vmem:[%s0 + $0x300] sm:$0xff]
  %v111 = vld [vmem:[%s0 + $0x308] sm:$0xff]
  %v112 = vld [vmem:[%s0 + $0x310] sm:$0xff]
  %v113 = vld [vmem:[%s0 + $0x318] sm:$0xff]
  %v114 = vld [vmem:[%s0 + $0x320] sm:$0xff]
  %v115 = vld [vmem:[%s0 + $0x328] sm:$0xff]
  %v116 = vld [vmem:[%s0 + $0x330] sm:$0xff]
  %v117 = vld [vmem:[%s0 + $0x338] sm:$0xff]
  %v118 = vld [vmem:[%s0 + $0x340] sm:$0xff]
  %v119 = vld [vmem:[%s0 + $0x348] sm:$0xff]
  %v120 = vld [vmem:[%s0 + $0x350] sm:$0xff]
  %v121 = vld [vmem:[%s0 + $0x358] sm:$0xff]
  %v122 = vld [vmem:[%s0 + $0x360] sm:$0xff]
  %v123 = vld [vmem:[%s0 + $0x368] sm:$0xff]
  %v124 = vld [vmem:[%s0 + $0x370] sm:$0xff]
  %v125 = vld [vmem:[%s0 + $0x378] sm:$0xff]
  %v126 = vld [vmem:[%s0 + $0x380] sm:$0xff]
  %v127 = vld [vmem:[%s0 + $0x388] sm:$0xff]
  %v128 = vld [vmem:[%s0 + $0x390] sm:$0xff]
  %v129 = vld [vmem:[%s0 + $0x398] sm:$0xff]
  %v130 = vld [vmem:[%s0 + $0x3a0] sm:$0xff]
  %v131 = vld [vmem:[%s0 + $0x3a8] sm:$0xff]
  %v132 = vld [vmem:[%s0 + $0x3b0] sm:$0xff]
  %v133 = vld [vmem:[%s0 + $0x3b8] sm:$0xff]
  %v134 = vld [vmem:[%s0 + $0x3c0] sm:$0xff]
  %v135 = vld [vmem:[%s0 + $0x3c8] sm:$0xff]
  %v136 = vld [vmem:[%s0 + $0x3d0] sm:$0xff]
  %v137 = vld [vmem:[%s0 + $0x3d8] sm:$0xff]
  %v138 = vld [vmem:[%s0 + $0x3e0] sm:$0xff]
  %v139 = vld [vmem:[%s0 + $0x3e8] sm:$0xff]
  %v140 = vld [vmem:[%s0 + $0x3f0] sm:$0xff]
  %v141 = vld [vmem:[%s0 + $0x3f8] sm:$0xff]
  %v142 = vunpack.c.l.bf16 %v14
  %v143 = vunpack.c.h.bf16 %v14
  %v144 = vunpack.c.l.bf16 %v15
  %v145 = vunpack.c.h.bf16 %v15
  %v146 = vunpack.c.l.bf16 %v16
  %v147 = vunpack.c.h.bf16 %v16
  %v148 = vunpack.c.l.bf16 %v17
  %v149 = vunpack.c.h.bf16 %v17
  %v150 = vunpack.c.l.bf16 %v18
  %v151 = vunpack.c.h.bf16 %v18
  %v152 = vunpack.c.l.bf16 %v19
  %v153 = vunpack.c.h.bf16 %v19
  %v154 = vunpack.c.l.bf16 %v20
  %v155 = vunpack.c.h.bf16 %v20
  %v156 = vunpack.c.l.bf16 %v21
  %v157 = vunpack.c.h.bf16 %v21
  %v158 = vunpack.c.l.bf16 %v22
  %v159 = vunpack.c.h.bf16 %v22
  %v160 = vunpack.c.l.bf16 %v23
  %v161 = vunpack.c.h.bf16 %v23
  %v162 = vunpack.c.l.bf16 %v24
  %v163 = vunpack.c.h.bf16 %v24
  %v164 = vunpack.c.l.bf16 %v25
  %v165 = vunpack.c.h.bf16 %v25
  %v166 = vunpack.c.l.bf16 %v26
  %v167 = vunpack.c.h.bf16 %v26
  %v168 = vunpack.c.l.bf16 %v27
  %v169 = vunpack.c.h.bf16 %v27
  %v170 = vunpack.c.l.bf16 %v28
  %v171 = vunpack.c.h.bf16 %v28
  %v172 = vunpack.c.l.bf16 %v29
  %v173 = vunpack.c.h.bf16 %v29
  %v174 = vunpack.c.l.bf16 %v30
  %v175 = vunpack.c.h.bf16 %v30
  %v176 = vunpack.c.l.bf16 %v31
  %v177 = vunpack.c.h.bf16 %v31
  %v178 = vunpack.c.l.bf16 %v32
  %v179 = vunpack.c.h.bf16 %v32
  %v180 = vunpack.c.l.bf16 %v33
  %v181 = vunpack.c.h.bf16 %v33
  %v182 = vunpack.c.l.bf16 %v34
  %v183 = vunpack.c.h.bf16 %v34
  %v184 = vunpack.c.l.bf16 %v35
  %v185 = vunpack.c.h.bf16 %v35
  %v186 = vunpack.c.l.bf16 %v36
  %v187 = vunpack.c.h.bf16 %v36
  %v188 = vunpack.c.l.bf16 %v37
  %v189 = vunpack.c.h.bf16 %v37
  %v190 = vunpack.c.l.bf16 %v38
  %v191 = vunpack.c.h.bf16 %v38
  %v192 = vunpack.c.l.bf16 %v39
  %v193 = vunpack.c.h.bf16 %v39
  %v194 = vunpack.c.l.bf16 %v40
  %v195 = vunpack.c.h.bf16 %v40
  %v196 = vunpack.c.l.bf16 %v41
  %v197 = vunpack.c.h.bf16 %v41
  %v198 = vunpack.c.l.bf16 %v42
  %v199 = vunpack.c.h.bf16 %v42
  %v200 = vunpack.c.l.bf16 %v43
  %v201 = vunpack.c.h.bf16 %v43
  %v202 = vunpack.c.l.bf16 %v44
  %v203 = vunpack.c.h.bf16 %v44
  %v204 = vunpack.c.l.bf16 %v45
  %v205 = vunpack.c.h.bf16 %v45
  %v206 = vunpack.c.l.bf16 %v46
  %v207 = vunpack.c.h.bf16 %v46
  %v208 = vunpack.c.l.bf16 %v47
  %v209 = vunpack.c.h.bf16 %v47
  %v210 = vunpack.c.l.bf16 %v48
  %v211 = vunpack.c.h.bf16 %v48
  %v212 = vunpack.c.l.bf16 %v49
  %v213 = vunpack.c.h.bf16 %v49
  %v214 = vunpack.c.l.bf16 %v50
  %v215 = vunpack.c.h.bf16 %v50
  %v216 = vunpack.c.l.bf16 %v51
  %v217 = vunpack.c.h.bf16 %v51
  %v218 = vunpack.c.l.bf16 %v52
  %v219 = vunpack.c.h.bf16 %v52
  %v220 = vunpack.c.l.bf16 %v53
  %v221 = vunpack.c.h.bf16 %v53
  %v222 = vunpack.c.l.bf16 %v54
  %v223 = vunpack.c.h.bf16 %v54
  %v224 = vunpack.c.l.bf16 %v55
  %v225 = vunpack.c.h.bf16 %v55
  %v226 = vunpack.c.l.bf16 %v56
  %v227 = vunpack.c.h.bf16 %v56
  %v228 = vunpack.c.l.bf16 %v57
  %v229 = vunpack.c.h.bf16 %v57
  %v230 = vunpack.c.l.bf16 %v58
  %v231 = vunpack.c.h.bf16 %v58
  %v232 = vunpack.c.l.bf16 %v59
  %v233 = vunpack.c.h.bf16 %v59
  %v234 = vunpack.c.l.bf16 %v60
  %v235 = vunpack.c.h.bf16 %v60
  %v236 = vunpack.c.l.bf16 %v61
  %v237 = vunpack.c.h.bf16 %v61
  %v238 = vunpack.c.l.bf16 %v62
  %v239 = vunpack.c.h.bf16 %v62
  %v240 = vunpack.c.l.bf16 %v63
  %v241 = vunpack.c.h.bf16 %v63
  %v242 = vunpack.c.l.bf16 %v64
  %v243 = vunpack.c.h.bf16 %v64
  %v244 = vunpack.c.l.bf16 %v65
  %v245 = vunpack.c.h.bf16 %v65
  %v246 = vunpack.c.l.bf16 %v66
  %v247 = vunpack.c.h.bf16 %v66
  %v248 = vunpack.c.l.bf16 %v67
  %v249 = vunpack.c.h.bf16 %v67
  %v250 = vunpack.c.l.bf16 %v68
  %v251 = vunpack.c.h.bf16 %v68
  %v252 = vunpack.c.l.bf16 %v69
  %v253 = vunpack.c.h.bf16 %v69
  %v254 = vunpack.c.l.bf16 %v70
  %v255 = vunpack.c.h.bf16 %v70
  %v256 = vunpack.c.l.bf16 %v71
  %v257 = vunpack.c.h.bf16 %v71
  %v258 = vunpack.c.l.bf16 %v72
  %v259 = vunpack.c.h.bf16 %v72
  %v260 = vunpack.c.l.bf16 %v73
  %v261 = vunpack.c.h.bf16 %v73
  %v262 = vunpack.c.l.bf16 %v74
  %v263 = vunpack.c.h.bf16 %v74
  %v264 = vunpack.c.l.bf16 %v75
  %v265 = vunpack.c.h.bf16 %v75
  %v266 = vunpack.c.l.bf16 %v76
  %v267 = vunpack.c.h.bf16 %v76
  %v268 = vunpack.c.l.bf16 %v77
  %v269 = vunpack.c.h.bf16 %v77
  %v270 = vunpack.c.l.bf16 %v78
  %v271 = vunpack.c.h.bf16 %v78
  %v272 = vunpack.c.l.bf16 %v79
  %v273 = vunpack.c.h.bf16 %v79
  %v274 = vunpack.c.l.bf16 %v80
  %v275 = vunpack.c.h.bf16 %v80
  %v276 = vunpack.c.l.bf16 %v81
  %v277 = vunpack.c.h.bf16 %v81
  %v278 = vunpack.c.l.bf16 %v82
  %v279 = vunpack.c.h.bf16 %v82
  %v280 = vunpack.c.l.bf16 %v83
  %v281 = vunpack.c.h.bf16 %v83
  %v282 = vunpack.c.l.bf16 %v84
  %v283 = vunpack.c.h.bf16 %v84
  %v284 = vunpack.c.l.bf16 %v85
  %v285 = vunpack.c.h.bf16 %v85
  %v286 = vunpack.c.l.bf16 %v86
  %v287 = vunpack.c.h.bf16 %v86
  %v288 = vunpack.c.l.bf16 %v87
  %v289 = vunpack.c.h.bf16 %v87
  %v290 = vunpack.c.l.bf16 %v88
  %v291 = vunpack.c.h.bf16 %v88
  %v292 = vunpack.c.l.bf16 %v89
  %v293 = vunpack.c.h.bf16 %v89
  %v294 = vunpack.c.l.bf16 %v90
  %v295 = vunpack.c.h.bf16 %v90
  %v296 = vunpack.c.l.bf16 %v91
  %v297 = vunpack.c.h.bf16 %v91
  %v298 = vunpack.c.l.bf16 %v92
  %v299 = vunpack.c.h.bf16 %v92
  %v300 = vunpack.c.l.bf16 %v93
  %v301 = vunpack.c.h.bf16 %v93
  %v302 = vunpack.c.l.bf16 %v94
  %v303 = vunpack.c.h.bf16 %v94
  %v304 = vunpack.c.l.bf16 %v95
  %v305 = vunpack.c.h.bf16 %v95
  %v306 = vunpack.c.l.bf16 %v96
  %v307 = vunpack.c.h.bf16 %v96
  %v308 = vunpack.c.l.bf16 %v97
  %v309 = vunpack.c.h.bf16 %v97
  %v310 = vunpack.c.l.bf16 %v98
  %v311 = vunpack.c.h.bf16 %v98
  %v312 = vunpack.c.l.bf16 %v99
  %v313 = vunpack.c.h.bf16 %v99
  %v314 = vunpack.c.l.bf16 %v100
  %v315 = vunpack.c.h.bf16 %v100
  %v316 = vunpack.c.l.bf16 %v101
  %v317 = vunpack.c.h.bf16 %v101
  %v318 = vunpack.c.l.bf16 %v102
  %v319 = vunpack.c.h.bf16 %v102
  %v320 = vunpack.c.l.bf16 %v103
  %v321 = vunpack.c.h.bf16 %v103
  %v322 = vunpack.c.l.bf16 %v104
  %v323 = vunpack.c.h.bf16 %v104
  %v324 = vunpack.c.l.bf16 %v105
  %v325 = vunpack.c.h.bf16 %v105
  %v326 = vunpack.c.l.bf16 %v106
  %v327 = vunpack.c.h.bf16 %v106
  %v328 = vunpack.c.l.bf16 %v107
  %v329 = vunpack.c.h.bf16 %v107
  %v330 = vunpack.c.l.bf16 %v108
  %v331 = vunpack.c.h.bf16 %v108
  %v332 = vunpack.c.l.bf16 %v109
  %v333 = vunpack.c.h.bf16 %v109
  %v334 = vunpack.c.l.bf16 %v110
  %v335 = vunpack.c.h.bf16 %v110
  %v336 = vunpack.c.l.bf16 %v111
  %v337 = vunpack.c.h.bf16 %v111
  %v338 = vunpack.c.l.bf16 %v112
  %v339 = vunpack.c.h.bf16 %v112
  %v340 = vunpack.c.l.bf16 %v113
  %v341 = vunpack.c.h.bf16 %v113
  %v342 = vunpack.c.l.bf16 %v114
  %v343 = vunpack.c.h.bf16 %v114
  %v344 = vunpack.c.l.bf16 %v115
  %v345 = vunpack.c.h.bf16 %v115
  %v346 = vunpack.c.l.bf16 %v116
  %v347 = vunpack.c.h.bf16 %v116
  %v348 = vunpack.c.l.bf16 %v117
  %v349 = vunpack.c.h.bf16 %v117
  %v350 = vunpack.c.l.bf16 %v118
  %v351 = vunpack.c.h.bf16 %v118
  %v352 = vunpack.c.l.bf16 %v119
  %v353 = vunpack.c.h.bf16 %v119
  %v354 = vunpack.c.l.bf16 %v120
  %v355 = vunpack.c.h.bf16 %v120
  %v356 = vunpack.c.l.bf16 %v121
  %v357 = vunpack.c.h.bf16 %v121
  %v358 = vunpack.c.l.bf16 %v122
  %v359 = vunpack.c.h.bf16 %v122
  %v360 = vunpack.c.l.bf16 %v123
  %v361 = vunpack.c.h.bf16 %v123
  %v362 = vunpack.c.l.bf16 %v124
  %v363 = vunpack.c.h.bf16 %v124
  %v364 = vunpack.c.l.bf16 %v125
  %v365 = vunpack.c.h.bf16 %v125
  %v366 = vunpack.c.l.bf16 %v126
  %v367 = vunpack.c.h.bf16 %v126
  %v368 = vunpack.c.l.bf16 %v127
  %v369 = vunpack.c.h.bf16 %v127
  %v370 = vunpack.c.l.bf16 %v128
  %v371 = vunpack.c.h.bf16 %v128
  %v372 = vunpack.c.l.bf16 %v129
  %v373 = vunpack.c.h.bf16 %v129
  %v374 = vunpack.c.l.bf16 %v130
  %v375 = vunpack.c.h.bf16 %v130
  %v376 = vunpack.c.l.bf16 %v131
  %v377 = vunpack.c.h.bf16 %v131
  %v378 = vunpack.c.l.bf16 %v132
  %v379 = vunpack.c.h.bf16 %v132
  %v380 = vunpack.c.l.bf16 %v133
  %v381 = vunpack.c.h.bf16 %v133
  %v382 = vunpack.c.l.bf16 %v134
  %v383 = vunpack.c.h.bf16 %v134
  %v384 = vunpack.c.l.bf16 %v135
  %v385 = vunpack.c.h.bf16 %v135
  %v386 = vunpack.c.l.bf16 %v136
  %v387 = vunpack.c.h.bf16 %v136
  %v388 = vunpack.c.l.bf16 %v137
  %v389 = vunpack.c.h.bf16 %v137
  %v390 = vunpack.c.l.bf16 %v138
  %v391 = vunpack.c.h.bf16 %v138
  %v392 = vunpack.c.l.bf16 %v139
  %v393 = vunpack.c.h.bf16 %v139
  %v394 = vunpack.c.l.bf16 %v140
  %v395 = vunpack.c.h.bf16 %v140
  %v396 = vunpack.c.l.bf16 %v141
  %v397 = vunpack.c.h.bf16 %v141
  %v398 = vld [vmem:[%s1] sm:$0xff]
  %v399 = vld [vmem:[%s1 + $0x8] sm:$0xff]
  %v400 = vld [vmem:[%s1 + $0x10] sm:$0xff]
  %v401 = vld [vmem:[%s1 + $0x18] sm:$0xff]
  %v406 = vlaneseq
  %v407 = vshrl.u32 %v406, 7
  %v408 = vsub.s32 0, %v407
  %v409 = vrot.slane %v398, %v408
  %v410 = vlaneseq
  %v411 = vshrl.u32 %v410, 7
  %v412 = vsub.s32 1, %v411
  %v413 = vrot.slane %v398, %v412
  %v414 = vlaneseq
  %v415 = vshrl.u32 %v414, 7
  %v416 = vsub.s32 2, %v415
  %v417 = vrot.slane %v398, %v416
  %v418 = vlaneseq
  %v419 = vshrl.u32 %v418, 7
  %v420 = vsub.s32 3, %v419
  %v421 = vrot.slane %v398, %v420
  %v422 = vlaneseq
  %v423 = vshrl.u32 %v422, 7
  %v424 = vsub.s32 4, %v423
  %v425 = vrot.slane %v398, %v424
  %v426 = vlaneseq
  %v427 = vshrl.u32 %v426, 7
  %v428 = vsub.s32 5, %v427
  %v429 = vrot.slane %v398, %v428
  %v430 = vlaneseq
  %v431 = vshrl.u32 %v430, 7
  %v432 = vsub.s32 6, %v431
  %v433 = vrot.slane %v398, %v432
  %v434 = vlaneseq
  %v435 = vshrl.u32 %v434, 7
  %v436 = vsub.s32 7, %v435
  %v437 = vrot.slane %v398, %v436
  %v438 = vlaneseq
  %v439 = vshrl.u32 %v438, 7
  %v440 = vsub.s32 0, %v439
  %v441 = vrot.slane %v399, %v440
  %v442 = vlaneseq
  %v443 = vshrl.u32 %v442, 7
  %v444 = vsub.s32 1, %v443
  %v445 = vrot.slane %v399, %v444
  %v446 = vlaneseq
  %v447 = vshrl.u32 %v446, 7
  %v448 = vsub.s32 2, %v447
  %v449 = vrot.slane %v399, %v448
  %v450 = vlaneseq
  %v451 = vshrl.u32 %v450, 7
  %v452 = vsub.s32 3, %v451
  %v453 = vrot.slane %v399, %v452
  %v454 = vlaneseq
  %v455 = vshrl.u32 %v454, 7
  %v456 = vsub.s32 4, %v455
  %v457 = vrot.slane %v399, %v456
  %v458 = vlaneseq
  %v459 = vshrl.u32 %v458, 7
  %v460 = vsub.s32 5, %v459
  %v461 = vrot.slane %v399, %v460
  %v462 = vlaneseq
  %v463 = vshrl.u32 %v462, 7
  %v464 = vsub.s32 6, %v463
  %v465 = vrot.slane %v399, %v464
  %v466 = vlaneseq
  %v467 = vshrl.u32 %v466, 7
  %v468 = vsub.s32 7, %v467
  %v469 = vrot.slane %v399, %v468
  %v470 = vlaneseq
  %v471 = vshrl.u32 %v470, 7
  %v472 = vsub.s32 0, %v471
  %v473 = vrot.slane %v400, %v472
  %v474 = vlaneseq
  %v475 = vshrl.u32 %v474, 7
  %v476 = vsub.s32 1, %v475
  %v477 = vrot.slane %v400, %v476
  %v478 = vlaneseq
  %v479 = vshrl.u32 %v478, 7
  %v480 = vsub.s32 2, %v479
  %v481 = vrot.slane %v400, %v480
  %v482 = vlaneseq
  %v483 = vshrl.u32 %v482, 7
  %v484 = vsub.s32 3, %v483
  %v485 = vrot.slane %v400, %v484
  %v486 = vlaneseq
  %v487 = vshrl.u32 %v486, 7
  %v488 = vsub.s32 4, %v487
  %v489 = vrot.slane %v400, %v488
  %v490 = vlaneseq
  %v491 = vshrl.u32 %v490, 7
  %v492 = vsub.s32 5, %v491
  %v493 = vrot.slane %v400, %v492
  %v494 = vlaneseq
  %v495 = vshrl.u32 %v494, 7
  %v496 = vsub.s32 6, %v495
  %v497 = vrot.slane %v400, %v496
  %v498 = vlaneseq
  %v499 = vshrl.u32 %v498, 7
  %v500 = vsub.s32 7, %v499
  %v501 = vrot.slane %v400, %v500
  %v502 = vlaneseq
  %v503 = vshrl.u32 %v502, 7
  %v504 = vsub.s32 0, %v503
  %v505 = vrot.slane %v401, %v504
  %v506 = vlaneseq
  %v507 = vshrl.u32 %v506, 7
  %v508 = vsub.s32 1, %v507
  %v509 = vrot.slane %v401, %v508
  %v510 = vlaneseq
  %v511 = vshrl.u32 %v510, 7
  %v512 = vsub.s32 2, %v511
  %v513 = vrot.slane %v401, %v512
  %v514 = vlaneseq
  %v515 = vshrl.u32 %v514, 7
  %v516 = vsub.s32 3, %v515
  %v517 = vrot.slane %v401, %v516
  %v518 = vlaneseq
  %v519 = vshrl.u32 %v518, 7
  %v520 = vsub.s32 4, %v519
  %v521 = vrot.slane %v401, %v520
  %v522 = vlaneseq
  %v523 = vshrl.u32 %v522, 7
  %v524 = vsub.s32 5, %v523
  %v525 = vrot.slane %v401, %v524
  %v526 = vlaneseq
  %v527 = vshrl.u32 %v526, 7
  %v528 = vsub.s32 6, %v527
  %v529 = vrot.slane %v401, %v528
  %v530 = vlaneseq
  %v531 = vshrl.u32 %v530, 7
  %v532 = vsub.s32 7, %v531
  %v533 = vrot.slane %v401, %v532
  %v566 = vmul.f32 %v142, %v409
  %v567 = vmul.f32 %v143, %v413
  %v568 = vmul.f32 %v144, %v417
  %v569 = vmul.f32 %v145, %v421
  %v570 = vmul.f32 %v146, %v425
  %v571 = vmul.f32 %v147, %v429
  %v572 = vmul.f32 %v148, %v433
  %v573 = vmul.f32 %v149, %v437
  %v574 = vmul.f32 %v150, %v441
  %v575 = vmul.f32 %v151, %v445
  %v576 = vmul.f32 %v152, %v449
  %v577 = vmul.f32 %v153, %v453
  %v578 = vmul.f32 %v154, %v457
  %v579 = vmul.f32 %v155, %v461
  %v580 = vmul.f32 %v156, %v465
  %v581 = vmul.f32 %v157, %v469
  %v582 = vmul.f32 %v158, %v473
  %v583 = vmul.f32 %v159, %v477
  %v584 = vmul.f32 %v160, %v481
  %v585 = vmul.f32 %v161, %v485
  %v586 = vmul.f32 %v162, %v489
  %v587 = vmul.f32 %v163, %v493
  %v588 = vmul.f32 %v164, %v497
  %v589 = vmul.f32 %v165, %v501
  %v590 = vmul.f32 %v166, %v505
  %v591 = vmul.f32 %v167, %v509
  %v592 = vmul.f32 %v168, %v513
  %v593 = vmul.f32 %v169, %v517
  %v594 = vmul.f32 %v170, %v521
  %v595 = vmul.f32 %v171, %v525
  %v596 = vmul.f32 %v172, %v529
  %v597 = vmul.f32 %v173, %v533
  %v598 = vmul.f32 %v174, %v409
  %v599 = vmul.f32 %v175, %v413
  %v600 = vmul.f32 %v176, %v417
  %v601 = vmul.f32 %v177, %v421
  %v602 = vmul.f32 %v178, %v425
  %v603 = vmul.f32 %v179, %v429
  %v604 = vmul.f32 %v180, %v433
  %v605 = vmul.f32 %v181, %v437
  %v606 = vmul.f32 %v182, %v441
  %v607 = vmul.f32 %v183, %v445
  %v608 = vmul.f32 %v184, %v449
  %v609 = vmul.f32 %v185, %v453
  %v610 = vmul.f32 %v186, %v457
  %v611 = vmul.f32 %v187, %v461
  %v612 = vmul.f32 %v188, %v465
  %v613 = vmul.f32 %v189, %v469
  %v614 = vmul.f32 %v190, %v473
  %v615 = vmul.f32 %v191, %v477
  %v616 = vmul.f32 %v192, %v481
  %v617 = vmul.f32 %v193, %v485
  %v618 = vmul.f32 %v194, %v489
  %v619 = vmul.f32 %v195, %v493
  %v620 = vmul.f32 %v196, %v497
  %v621 = vmul.f32 %v197, %v501
  %v622 = vmul.f32 %v198, %v505
  %v623 = vmul.f32 %v199, %v509
  %v624 = vmul.f32 %v200, %v513
  %v625 = vmul.f32 %v201, %v517
  %v626 = vmul.f32 %v202, %v521
  %v627 = vmul.f32 %v203, %v525
  %v628 = vmul.f32 %v204, %v529
  %v629 = vmul.f32 %v205, %v533
  %v630 = vmul.f32 %v206, %v409
  %v631 = vmul.f32 %v207, %v413
  %v632 = vmul.f32 %v208, %v417
  %v633 = vmul.f32 %v209, %v421
  %v634 = vmul.f32 %v210, %v425
  %v635 = vmul.f32 %v211, %v429
  %v636 = vmul.f32 %v212, %v433
  %v637 = vmul.f32 %v213, %v437
  %v638 = vmul.f32 %v214, %v441
  %v639 = vmul.f32 %v215, %v445
  %v640 = vmul.f32 %v216, %v449
  %v641 = vmul.f32 %v217, %v453
  %v642 = vmul.f32 %v218, %v457
  %v643 = vmul.f32 %v219, %v461
  %v644 = vmul.f32 %v220, %v465
  %v645 = vmul.f32 %v221, %v469
  %v646 = vmul.f32 %v222, %v473
  %v647 = vmul.f32 %v223, %v477
  %v648 = vmul.f32 %v224, %v481
  %v649 = vmul.f32 %v225, %v485
  %v650 = vmul.f32 %v226, %v489
  %v651 = vmul.f32 %v227, %v493
  %v652 = vmul.f32 %v228, %v497
  %v653 = vmul.f32 %v229, %v501
  %v654 = vmul.f32 %v230, %v505
  %v655 = vmul.f32 %v231, %v509
  %v656 = vmul.f32 %v232, %v513
  %v657 = vmul.f32 %v233, %v517
  %v658 = vmul.f32 %v234, %v521
  %v659 = vmul.f32 %v235, %v525
  %v660 = vmul.f32 %v236, %v529
  %v661 = vmul.f32 %v237, %v533
  %v662 = vmul.f32 %v238, %v409
  %v663 = vmul.f32 %v239, %v413
  %v664 = vmul.f32 %v240, %v417
  %v665 = vmul.f32 %v241, %v421
  %v666 = vmul.f32 %v242, %v425
  %v667 = vmul.f32 %v243, %v429
  %v668 = vmul.f32 %v244, %v433
  %v669 = vmul.f32 %v245, %v437
  %v670 = vmul.f32 %v246, %v441
  %v671 = vmul.f32 %v247, %v445
  %v672 = vmul.f32 %v248, %v449
  %v673 = vmul.f32 %v249, %v453
  %v674 = vmul.f32 %v250, %v457
  %v675 = vmul.f32 %v251, %v461
  %v676 = vmul.f32 %v252, %v465
  %v677 = vmul.f32 %v253, %v469
  %v678 = vmul.f32 %v254, %v473
  %v679 = vmul.f32 %v255, %v477
  %v680 = vmul.f32 %v256, %v481
  %v681 = vmul.f32 %v257, %v485
  %v682 = vmul.f32 %v258, %v489
  %v683 = vmul.f32 %v259, %v493
  %v684 = vmul.f32 %v260, %v497
  %v685 = vmul.f32 %v261, %v501
  %v686 = vmul.f32 %v262, %v505
  %v687 = vmul.f32 %v263, %v509
  %v688 = vmul.f32 %v264, %v513
  %v689 = vmul.f32 %v265, %v517
  %v690 = vmul.f32 %v266, %v521
  %v691 = vmul.f32 %v267, %v525
  %v692 = vmul.f32 %v268, %v529
  %v693 = vmul.f32 %v269, %v533
  %v694 = vmul.f32 %v270, %v409
  %v695 = vmul.f32 %v271, %v413
  %v696 = vmul.f32 %v272, %v417
  %v697 = vmul.f32 %v273, %v421
  %v698 = vmul.f32 %v274, %v425
  %v699 = vmul.f32 %v275, %v429
  %v700 = vmul.f32 %v276, %v433
  %v701 = vmul.f32 %v277, %v437
  %v702 = vmul.f32 %v278, %v441
  %v703 = vmul.f32 %v279, %v445
  %v704 = vmul.f32 %v280, %v449
  %v705 = vmul.f32 %v281, %v453
  %v706 = vmul.f32 %v282, %v457
  %v707 = vmul.f32 %v283, %v461
  %v708 = vmul.f32 %v284, %v465
  %v709 = vmul.f32 %v285, %v469
  %v710 = vmul.f32 %v286, %v473
  %v711 = vmul.f32 %v287, %v477
  %v712 = vmul.f32 %v288, %v481
  %v713 = vmul.f32 %v289, %v485
  %v714 = vmul.f32 %v290, %v489
  %v715 = vmul.f32 %v291, %v493
  %v716 = vmul.f32 %v292, %v497
  %v717 = vmul.f32 %v293, %v501
  %v718 = vmul.f32 %v294, %v505
  %v719 = vmul.f32 %v295, %v509
  %v720 = vmul.f32 %v296, %v513
  %v721 = vmul.f32 %v297, %v517
  %v722 = vmul.f32 %v298, %v521
  %v723 = vmul.f32 %v299, %v525
  %v724 = vmul.f32 %v300, %v529
  %v725 = vmul.f32 %v301, %v533
  %v726 = vmul.f32 %v302, %v409
  %v727 = vmul.f32 %v303, %v413
  %v728 = vmul.f32 %v304, %v417
  %v729 = vmul.f32 %v305, %v421
  %v730 = vmul.f32 %v306, %v425
  %v731 = vmul.f32 %v307, %v429
  %v732 = vmul.f32 %v308, %v433
  %v733 = vmul.f32 %v309, %v437
  %v734 = vmul.f32 %v310, %v441
  %v735 = vmul.f32 %v311, %v445
  %v736 = vmul.f32 %v312, %v449
  %v737 = vmul.f32 %v313, %v453
  %v738 = vmul.f32 %v314, %v457
  %v739 = vmul.f32 %v315, %v461
  %v740 = vmul.f32 %v316, %v465
  %v741 = vmul.f32 %v317, %v469
  %v742 = vmul.f32 %v318, %v473
  %v743 = vmul.f32 %v319, %v477
  %v744 = vmul.f32 %v320, %v481
  %v745 = vmul.f32 %v321, %v485
  %v746 = vmul.f32 %v322, %v489
  %v747 = vmul.f32 %v323, %v493
  %v748 = vmul.f32 %v324, %v497
  %v749 = vmul.f32 %v325, %v501
  %v750 = vmul.f32 %v326, %v505
  %v751 = vmul.f32 %v327, %v509
  %v752 = vmul.f32 %v328, %v513
  %v753 = vmul.f32 %v329, %v517
  %v754 = vmul.f32 %v330, %v521
  %v755 = vmul.f32 %v331, %v525
  %v756 = vmul.f32 %v332, %v529
  %v757 = vmul.f32 %v333, %v533
  %v758 = vmul.f32 %v334, %v409
  %v759 = vmul.f32 %v335, %v413
  %v760 = vmul.f32 %v336, %v417
  %v761 = vmul.f32 %v337, %v421
  %v762 = vmul.f32 %v338, %v425
  %v763 = vmul.f32 %v339, %v429
  %v764 = vmul.f32 %v340, %v433
  %v765 = vmul.f32 %v341, %v437
  %v766 = vmul.f32 %v342, %v441
  %v767 = vmul.f32 %v343, %v445
  %v768 = vmul.f32 %v344, %v449
  %v769 = vmul.f32 %v345, %v453
  %v770 = vmul.f32 %v346, %v457
  %v771 = vmul.f32 %v347, %v461
  %v772 = vmul.f32 %v348, %v465
  %v773 = vmul.f32 %v349, %v469
  %v774 = vmul.f32 %v350, %v473
  %v775 = vmul.f32 %v351, %v477
  %v776 = vmul.f32 %v352, %v481
  %v777 = vmul.f32 %v353, %v485
  %v778 = vmul.f32 %v354, %v489
  %v779 = vmul.f32 %v355, %v493
  %v780 = vmul.f32 %v356, %v497
  %v781 = vmul.f32 %v357, %v501
  %v782 = vmul.f32 %v358, %v505
  %v783 = vmul.f32 %v359, %v509
  %v784 = vmul.f32 %v360, %v513
  %v785 = vmul.f32 %v361, %v517
  %v786 = vmul.f32 %v362, %v521
  %v787 = vmul.f32 %v363, %v525
  %v788 = vmul.f32 %v364, %v529
  %v789 = vmul.f32 %v365, %v533
  %v790 = vmul.f32 %v366, %v409
  %v791 = vmul.f32 %v367, %v413
  %v792 = vmul.f32 %v368, %v417
  %v793 = vmul.f32 %v369, %v421
  %v794 = vmul.f32 %v370, %v425
  %v795 = vmul.f32 %v371, %v429
  %v796 = vmul.f32 %v372, %v433
  %v797 = vmul.f32 %v373, %v437
  %v798 = vmul.f32 %v374, %v441
  %v799 = vmul.f32 %v375, %v445
  %v800 = vmul.f32 %v376, %v449
  %v801 = vmul.f32 %v377, %v453
  %v802 = vmul.f32 %v378, %v457
  %v803 = vmul.f32 %v379, %v461
  %v804 = vmul.f32 %v380, %v465
  %v805 = vmul.f32 %v381, %v469
  %v806 = vmul.f32 %v382, %v473
  %v807 = vmul.f32 %v383, %v477
  %v808 = vmul.f32 %v384, %v481
  %v809 = vmul.f32 %v385, %v485
  %v810 = vmul.f32 %v386, %v489
  %v811 = vmul.f32 %v387, %v493
  %v812 = vmul.f32 %v388, %v497
  %v813 = vmul.f32 %v389, %v501
  %v814 = vmul.f32 %v390, %v505
  %v815 = vmul.f32 %v391, %v509
  %v816 = vmul.f32 %v392, %v513
  %v817 = vmul.f32 %v393, %v517
  %v818 = vmul.f32 %v394, %v521
  %v819 = vmul.f32 %v395, %v525
  %v820 = vmul.f32 %v396, %v529
  %v821 = vmul.f32 %v397, %v533
  %v822 = vld [vmem:[%s2] sm:$0xff]
  %v823 = vld [vmem:[%s2 + $0x8] sm:$0xff]
  %v824 = vld [vmem:[%s2 + $0x10] sm:$0xff]
  %v825 = vld [vmem:[%s2 + $0x18] sm:$0xff]
  %v830 = vlaneseq
  %v831 = vshrl.u32 %v830, 7
  %v832 = vsub.s32 0, %v831
  %v833 = vrot.slane %v822, %v832
  %v834 = vlaneseq
  %v835 = vshrl.u32 %v834, 7
  %v836 = vsub.s32 1, %v835
  %v837 = vrot.slane %v822, %v836
  %v838 = vlaneseq
  %v839 = vshrl.u32 %v838, 7
  %v840 = vsub.s32 2, %v839
  %v841 = vrot.slane %v822, %v840
  %v842 = vlaneseq
  %v843 = vshrl.u32 %v842, 7
  %v844 = vsub.s32 3, %v843
  %v845 = vrot.slane %v822, %v844
  %v846 = vlaneseq
  %v847 = vshrl.u32 %v846, 7
  %v848 = vsub.s32 4, %v847
  %v849 = vrot.slane %v822, %v848
  %v850 = vlaneseq
  %v851 = vshrl.u32 %v850, 7
  %v852 = vsub.s32 5, %v851
  %v853 = vrot.slane %v822, %v852
  %v854 = vlaneseq
  %v855 = vshrl.u32 %v854, 7
  %v856 = vsub.s32 6, %v855
  %v857 = vrot.slane %v822, %v856
  %v858 = vlaneseq
  %v859 = vshrl.u32 %v858, 7
  %v860 = vsub.s32 7, %v859
  %v861 = vrot.slane %v822, %v860
  %v862 = vlaneseq
  %v863 = vshrl.u32 %v862, 7
  %v864 = vsub.s32 0, %v863
  %v865 = vrot.slane %v823, %v864
  %v866 = vlaneseq
  %v867 = vshrl.u32 %v866, 7
  %v868 = vsub.s32 1, %v867
  %v869 = vrot.slane %v823, %v868
  %v870 = vlaneseq
  %v871 = vshrl.u32 %v870, 7
  %v872 = vsub.s32 2, %v871
  %v873 = vrot.slane %v823, %v872
  %v874 = vlaneseq
  %v875 = vshrl.u32 %v874, 7
  %v876 = vsub.s32 3, %v875
  %v877 = vrot.slane %v823, %v876
  %v878 = vlaneseq
  %v879 = vshrl.u32 %v878, 7
  %v880 = vsub.s32 4, %v879
  %v881 = vrot.slane %v823, %v880
  %v882 = vlaneseq
  %v883 = vshrl.u32 %v882, 7
  %v884 = vsub.s32 5, %v883
  %v885 = vrot.slane %v823, %v884
  %v886 = vlaneseq
  %v887 = vshrl.u32 %v886, 7
  %v888 = vsub.s32 6, %v887
  %v889 = vrot.slane %v823, %v888
  %v890 = vlaneseq
  %v891 = vshrl.u32 %v890, 7
  %v892 = vsub.s32 7, %v891
  %v893 = vrot.slane %v823, %v892
  %v894 = vlaneseq
  %v895 = vshrl.u32 %v894, 7
  %v896 = vsub.s32 0, %v895
  %v897 = vrot.slane %v824, %v896
  %v898 = vlaneseq
  %v899 = vshrl.u32 %v898, 7
  %v900 = vsub.s32 1, %v899
  %v901 = vrot.slane %v824, %v900
  %v902 = vlaneseq
  %v903 = vshrl.u32 %v902, 7
  %v904 = vsub.s32 2, %v903
  %v905 = vrot.slane %v824, %v904
  %v906 = vlaneseq
  %v907 = vshrl.u32 %v906, 7
  %v908 = vsub.s32 3, %v907
  %v909 = vrot.slane %v824, %v908
  %v910 = vlaneseq
  %v911 = vshrl.u32 %v910, 7
  %v912 = vsub.s32 4, %v911
  %v913 = vrot.slane %v824, %v912
  %v914 = vlaneseq
  %v915 = vshrl.u32 %v914, 7
  %v916 = vsub.s32 5, %v915
  %v917 = vrot.slane %v824, %v916
  %v918 = vlaneseq
  %v919 = vshrl.u32 %v918, 7
  %v920 = vsub.s32 6, %v919
  %v921 = vrot.slane %v824, %v920
  %v922 = vlaneseq
  %v923 = vshrl.u32 %v922, 7
  %v924 = vsub.s32 7, %v923
  %v925 = vrot.slane %v824, %v924
  %v926 = vlaneseq
  %v927 = vshrl.u32 %v926, 7
  %v928 = vsub.s32 0, %v927
  %v929 = vrot.slane %v825, %v928
  %v930 = vlaneseq
  %v931 = vshrl.u32 %v930, 7
  %v932 = vsub.s32 1, %v931
  %v933 = vrot.slane %v825, %v932
  %v934 = vlaneseq
  %v935 = vshrl.u32 %v934, 7
  %v936 = vsub.s32 2, %v935
  %v937 = vrot.slane %v825, %v936
  %v938 = vlaneseq
  %v939 = vshrl.u32 %v938, 7
  %v940 = vsub.s32 3, %v939
  %v941 = vrot.slane %v825, %v940
  %v942 = vlaneseq
  %v943 = vshrl.u32 %v942, 7
  %v944 = vsub.s32 4, %v943
  %v945 = vrot.slane %v825, %v944
  %v946 = vlaneseq
  %v947 = vshrl.u32 %v946, 7
  %v948 = vsub.s32 5, %v947
  %v949 = vrot.slane %v825, %v948
  %v950 = vlaneseq
  %v951 = vshrl.u32 %v950, 7
  %v952 = vsub.s32 6, %v951
  %v953 = vrot.slane %v825, %v952
  %v954 = vlaneseq
  %v955 = vshrl.u32 %v954, 7
  %v956 = vsub.s32 7, %v955
  %v957 = vrot.slane %v825, %v956
  %v990 = vadd.f32 %v566, %v833
  %v991 = vadd.f32 %v567, %v837
  %v992 = vadd.f32 %v568, %v841
  %v993 = vadd.f32 %v569, %v845
  %v994 = vadd.f32 %v570, %v849
  %v995 = vadd.f32 %v571, %v853
  %v996 = vadd.f32 %v572, %v857
  %v997 = vadd.f32 %v573, %v861
  %v998 = vadd.f32 %v574, %v865
  %v999 = vadd.f32 %v575, %v869
  %v1000 = vadd.f32 %v576, %v873
  %v1001 = vadd.f32 %v577, %v877
  %v1002 = vadd.f32 %v578, %v881
  %v1003 = vadd.f32 %v579, %v885
  %v1004 = vadd.f32 %v580, %v889
  %v1005 = vadd.f32 %v581, %v893
  %v1006 = vadd.f32 %v582, %v897
  %v1007 = vadd.f32 %v583, %v901
  %v1008 = vadd.f32 %v584, %v905
  %v1009 = vadd.f32 %v585, %v909
  %v1010 = vadd.f32 %v586, %v913
  %v1011 = vadd.f32 %v587, %v917
  %v1012 = vadd.f32 %v588, %v921
  %v1013 = vadd.f32 %v589, %v925
  %v1014 = vadd.f32 %v590, %v929
  %v1015 = vadd.f32 %v591, %v933
  %v1016 = vadd.f32 %v592, %v937
  %v1017 = vadd.f32 %v593, %v941
  %v1018 = vadd.f32 %v594, %v945
  %v1019 = vadd.f32 %v595, %v949
  %v1020 = vadd.f32 %v596, %v953
  %v1021 = vadd.f32 %v597, %v957
  %v1022 = vadd.f32 %v598, %v833
  %v1023 = vadd.f32 %v599, %v837
  %v1024 = vadd.f32 %v600, %v841
  %v1025 = vadd.f32 %v601, %v845
  %v1026 = vadd.f32 %v602, %v849
  %v1027 = vadd.f32 %v603, %v853
  %v1028 = vadd.f32 %v604, %v857
  %v1029 = vadd.f32 %v605, %v861
  %v1030 = vadd.f32 %v606, %v865
  %v1031 = vadd.f32 %v607, %v869
  %v1032 = vadd.f32 %v608, %v873
  %v1033 = vadd.f32 %v609, %v877
  %v1034 = vadd.f32 %v610, %v881
  %v1035 = vadd.f32 %v611, %v885
  %v1036 = vadd.f32 %v612, %v889
  %v1037 = vadd.f32 %v613, %v893
  %v1038 = vadd.f32 %v614, %v897
  %v1039 = vadd.f32 %v615, %v901
  %v1040 = vadd.f32 %v616, %v905
  %v1041 = vadd.f32 %v617, %v909
  %v1042 = vadd.f32 %v618, %v913
  %v1043 = vadd.f32 %v619, %v917
  %v1044 = vadd.f32 %v620, %v921
  %v1045 = vadd.f32 %v621, %v925
  %v1046 = vadd.f32 %v622, %v929
  %v1047 = vadd.f32 %v623, %v933
  %v1048 = vadd.f32 %v624, %v937
  %v1049 = vadd.f32 %v625, %v941
  %v1050 = vadd.f32 %v626, %v945
  %v1051 = vadd.f32 %v627, %v949
  %v1052 = vadd.f32 %v628, %v953
  %v1053 = vadd.f32 %v629, %v957
  %v1054 = vadd.f32 %v630, %v833
  %v1055 = vadd.f32 %v631, %v837
  %v1056 = vadd.f32 %v632, %v841
  %v1057 = vadd.f32 %v633, %v845
  %v1058 = vadd.f32 %v634, %v849
  %v1059 = vadd.f32 %v635, %v853
  %v1060 = vadd.f32 %v636, %v857
  %v1061 = vadd.f32 %v637, %v861
  %v1062 = vadd.f32 %v638, %v865
  %v1063 = vadd.f32 %v639, %v869
  %v1064 = vadd.f32 %v640, %v873
  %v1065 = vadd.f32 %v641, %v877
  %v1066 = vadd.f32 %v642, %v881
  %v1067 = vadd.f32 %v643, %v885
  %v1068 = vadd.f32 %v644, %v889
  %v1069 = vadd.f32 %v645, %v893
  %v1070 = vadd.f32 %v646, %v897
  %v1071 = vadd.f32 %v647, %v901
  %v1072 = vadd.f32 %v648, %v905
  %v1073 = vadd.f32 %v649, %v909
  %v1074 = vadd.f32 %v650, %v913
  %v1075 = vadd.f32 %v651, %v917
  %v1076 = vadd.f32 %v652, %v921
  %v1077 = vadd.f32 %v653, %v925
  %v1078 = vadd.f32 %v654, %v929
  %v1079 = vadd.f32 %v655, %v933
  %v1080 = vadd.f32 %v656, %v937
  %v1081 = vadd.f32 %v657, %v941
  %v1082 = vadd.f32 %v658, %v945
  %v1083 = vadd.f32 %v659, %v949
  %v1084 = vadd.f32 %v660, %v953
  %v1085 = vadd.f32 %v661, %v957
  %v1086 = vadd.f32 %v662, %v833
  %v1087 = vadd.f32 %v663, %v837
  %v1088 = vadd.f32 %v664, %v841
  %v1089 = vadd.f32 %v665, %v845
  %v1090 = vadd.f32 %v666, %v849
  %v1091 = vadd.f32 %v667, %v853
  %v1092 = vadd.f32 %v668, %v857
  %v1093 = vadd.f32 %v669, %v861
  %v1094 = vadd.f32 %v670, %v865
  %v1095 = vadd.f32 %v671, %v869
  %v1096 = vadd.f32 %v672, %v873
  %v1097 = vadd.f32 %v673, %v877
  %v1098 = vadd.f32 %v674, %v881
  %v1099 = vadd.f32 %v675, %v885
  %v1100 = vadd.f32 %v676, %v889
  %v1101 = vadd.f32 %v677, %v893
  %v1102 = vadd.f32 %v678, %v897
  %v1103 = vadd.f32 %v679, %v901
  %v1104 = vadd.f32 %v680, %v905
  %v1105 = vadd.f32 %v681, %v909
  %v1106 = vadd.f32 %v682, %v913
  %v1107 = vadd.f32 %v683, %v917
  %v1108 = vadd.f32 %v684, %v921
  %v1109 = vadd.f32 %v685, %v925
  %v1110 = vadd.f32 %v686, %v929
  %v1111 = vadd.f32 %v687, %v933
  %v1112 = vadd.f32 %v688, %v937
  %v1113 = vadd.f32 %v689, %v941
  %v1114 = vadd.f32 %v690, %v945
  %v1115 = vadd.f32 %v691, %v949
  %v1116 = vadd.f32 %v692, %v953
  %v1117 = vadd.f32 %v693, %v957
  %v1118 = vadd.f32 %v694, %v833
  %v1119 = vadd.f32 %v695, %v837
  %v1120 = vadd.f32 %v696, %v841
  %v1121 = vadd.f32 %v697, %v845
  %v1122 = vadd.f32 %v698, %v849
  %v1123 = vadd.f32 %v699, %v853
  %v1124 = vadd.f32 %v700, %v857
  %v1125 = vadd.f32 %v701, %v861
  %v1126 = vadd.f32 %v702, %v865
  %v1127 = vadd.f32 %v703, %v869
  %v1128 = vadd.f32 %v704, %v873
  %v1129 = vadd.f32 %v705, %v877
  %v1130 = vadd.f32 %v706, %v881
  %v1131 = vadd.f32 %v707, %v885
  %v1132 = vadd.f32 %v708, %v889
  %v1133 = vadd.f32 %v709, %v893
  %v1134 = vadd.f32 %v710, %v897
  %v1135 = vadd.f32 %v711, %v901
  %v1136 = vadd.f32 %v712, %v905
  %v1137 = vadd.f32 %v713, %v909
  %v1138 = vadd.f32 %v714, %v913
  %v1139 = vadd.f32 %v715, %v917
  %v1140 = vadd.f32 %v716, %v921
  %v1141 = vadd.f32 %v717, %v925
  %v1142 = vadd.f32 %v718, %v929
  %v1143 = vadd.f32 %v719, %v933
  %v1144 = vadd.f32 %v720, %v937
  %v1145 = vadd.f32 %v721, %v941
  %v1146 = vadd.f32 %v722, %v945
  %v1147 = vadd.f32 %v723, %v949
  %v1148 = vadd.f32 %v724, %v953
  %v1149 = vadd.f32 %v725, %v957
  %v1150 = vadd.f32 %v726, %v833
  %v1151 = vadd.f32 %v727, %v837
  %v1152 = vadd.f32 %v728, %v841
  %v1153 = vadd.f32 %v729, %v845
  %v1154 = vadd.f32 %v730, %v849
  %v1155 = vadd.f32 %v731, %v853
  %v1156 = vadd.f32 %v732, %v857
  %v1157 = vadd.f32 %v733, %v861
  %v1158 = vadd.f32 %v734, %v865
  %v1159 = vadd.f32 %v735, %v869
  %v1160 = vadd.f32 %v736, %v873
  %v1161 = vadd.f32 %v737, %v877
  %v1162 = vadd.f32 %v738, %v881
  %v1163 = vadd.f32 %v739, %v885
  %v1164 = vadd.f32 %v740, %v889
  %v1165 = vadd.f32 %v741, %v893
  %v1166 = vadd.f32 %v742, %v897
  %v1167 = vadd.f32 %v743, %v901
  %v1168 = vadd.f32 %v744, %v905
  %v1169 = vadd.f32 %v745, %v909
  %v1170 = vadd.f32 %v746, %v913
  %v1171 = vadd.f32 %v747, %v917
  %v1172 = vadd.f32 %v748, %v921
  %v1173 = vadd.f32 %v749, %v925
  %v1174 = vadd.f32 %v750, %v929
  %v1175 = vadd.f32 %v751, %v933
  %v1176 = vadd.f32 %v752, %v937
  %v1177 = vadd.f32 %v753, %v941
  %v1178 = vadd.f32 %v754, %v945
  %v1179 = vadd.f32 %v755, %v949
  %v1180 = vadd.f32 %v756, %v953
  %v1181 = vadd.f32 %v757, %v957
  %v1182 = vadd.f32 %v758, %v833
  %v1183 = vadd.f32 %v759, %v837
  %v1184 = vadd.f32 %v760, %v841
  %v1185 = vadd.f32 %v761, %v845
  %v1186 = vadd.f32 %v762, %v849
  %v1187 = vadd.f32 %v763, %v853
  %v1188 = vadd.f32 %v764, %v857
  %v1189 = vadd.f32 %v765, %v861
  %v1190 = vadd.f32 %v766, %v865
  %v1191 = vadd.f32 %v767, %v869
  %v1192 = vadd.f32 %v768, %v873
  %v1193 = vadd.f32 %v769, %v877
  %v1194 = vadd.f32 %v770, %v881
  %v1195 = vadd.f32 %v771, %v885
  %v1196 = vadd.f32 %v772, %v889
  %v1197 = vadd.f32 %v773, %v893
  %v1198 = vadd.f32 %v774, %v897
  %v1199 = vadd.f32 %v775, %v901
  %v1200 = vadd.f32 %v776, %v905
  %v1201 = vadd.f32 %v777, %v909
  %v1202 = vadd.f32 %v778, %v913
  %v1203 = vadd.f32 %v779, %v917
  %v1204 = vadd.f32 %v780, %v921
  %v1205 = vadd.f32 %v781, %v925
  %v1206 = vadd.f32 %v782, %v929
  %v1207 = vadd.f32 %v783, %v933
  %v1208 = vadd.f32 %v784, %v937
  %v1209 = vadd.f32 %v785, %v941
  %v1210 = vadd.f32 %v786, %v945
  %v1211 = vadd.f32 %v787, %v949
  %v1212 = vadd.f32 %v788, %v953
  %v1213 = vadd.f32 %v789, %v957
  %v1214 = vadd.f32 %v790, %v833
  %v1215 = vadd.f32 %v791, %v837
  %v1216 = vadd.f32 %v792, %v841
  %v1217 = vadd.f32 %v793, %v845
  %v1218 = vadd.f32 %v794, %v849
  %v1219 = vadd.f32 %v795, %v853
  %v1220 = vadd.f32 %v796, %v857
  %v1221 = vadd.f32 %v797, %v861
  %v1222 = vadd.f32 %v798, %v865
  %v1223 = vadd.f32 %v799, %v869
  %v1224 = vadd.f32 %v800, %v873
  %v1225 = vadd.f32 %v801, %v877
  %v1226 = vadd.f32 %v802, %v881
  %v1227 = vadd.f32 %v803, %v885
  %v1228 = vadd.f32 %v804, %v889
  %v1229 = vadd.f32 %v805, %v893
  %v1230 = vadd.f32 %v806, %v897
  %v1231 = vadd.f32 %v807, %v901
  %v1232 = vadd.f32 %v808, %v905
  %v1233 = vadd.f32 %v809, %v909
  %v1234 = vadd.f32 %v810, %v913
  %v1235 = vadd.f32 %v811, %v917
  %v1236 = vadd.f32 %v812, %v921
  %v1237 = vadd.f32 %v813, %v925
  %v1238 = vadd.f32 %v814, %v929
  %v1239 = vadd.f32 %v815, %v933
  %v1240 = vadd.f32 %v816, %v937
  %v1241 = vadd.f32 %v817, %v941
  %v1242 = vadd.f32 %v818, %v945
  %v1243 = vadd.f32 %v819, %v949
  %v1244 = vadd.f32 %v820, %v953
  %v1245 = vadd.f32 %v821, %v957
  %v1246 = vmax.f32 %v990, 0.0
  %v1247 = vmax.f32 %v991, 0.0
  %v1248 = vmax.f32 %v992, 0.0
  %v1249 = vmax.f32 %v993, 0.0
  %v1250 = vmax.f32 %v994, 0.0
  %v1251 = vmax.f32 %v995, 0.0
  %v1252 = vmax.f32 %v996, 0.0
  %v1253 = vmax.f32 %v997, 0.0
  %v1254 = vmax.f32 %v998, 0.0
  %v1255 = vmax.f32 %v999, 0.0
  %v1256 = vmax.f32 %v1000, 0.0
  %v1257 = vmax.f32 %v1001, 0.0
  %v1258 = vmax.f32 %v1002, 0.0
  %v1259 = vmax.f32 %v1003, 0.0
  %v1260 = vmax.f32 %v1004, 0.0
  %v1261 = vmax.f32 %v1005, 0.0
  %v1262 = vmax.f32 %v1006, 0.0
  %v1263 = vmax.f32 %v1007, 0.0
  %v1264 = vmax.f32 %v1008, 0.0
  %v1265 = vmax.f32 %v1009, 0.0
  %v1266 = vmax.f32 %v1010, 0.0
  %v1267 = vmax.f32 %v1011, 0.0
  %v1268 = vmax.f32 %v1012, 0.0
  %v1269 = vmax.f32 %v1013, 0.0
  %v1270 = vmax.f32 %v1014, 0.0
  %v1271 = vmax.f32 %v1015, 0.0
  %v1272 = vmax.f32 %v1016, 0.0
  %v1273 = vmax.f32 %v1017, 0.0
  %v1274 = vmax.f32 %v1018, 0.0
  %v1275 = vmax.f32 %v1019, 0.0
  %v1276 = vmax.f32 %v1020, 0.0
  %v1277 = vmax.f32 %v1021, 0.0
  %v1278 = vmax.f32 %v1022, 0.0
  %v1279 = vmax.f32 %v1023, 0.0
  %v1280 = vmax.f32 %v1024, 0.0
  %v1281 = vmax.f32 %v1025, 0.0
  %v1282 = vmax.f32 %v1026, 0.0
  %v1283 = vmax.f32 %v1027, 0.0
  %v1284 = vmax.f32 %v1028, 0.0
  %v1285 = vmax.f32 %v1029, 0.0
  %v1286 = vmax.f32 %v1030, 0.0
  %v1287 = vmax.f32 %v1031, 0.0
  %v1288 = vmax.f32 %v1032, 0.0
  %v1289 = vmax.f32 %v1033, 0.0
  %v1290 = vmax.f32 %v1034, 0.0
  %v1291 = vmax.f32 %v1035, 0.0
  %v1292 = vmax.f32 %v1036, 0.0
  %v1293 = vmax.f32 %v1037, 0.0
  %v1294 = vmax.f32 %v1038, 0.0
  %v1295 = vmax.f32 %v1039, 0.0
  %v1296 = vmax.f32 %v1040, 0.0
  %v1297 = vmax.f32 %v1041, 0.0
  %v1298 = vmax.f32 %v1042, 0.0
  %v1299 = vmax.f32 %v1043, 0.0
  %v1300 = vmax.f32 %v1044, 0.0
  %v1301 = vmax.f32 %v1045, 0.0
  %v1302 = vmax.f32 %v1046, 0.0
  %v1303 = vmax.f32 %v1047, 0.0
  %v1304 = vmax.f32 %v1048, 0.0
  %v1305 = vmax.f32 %v1049, 0.0
  %v1306 = vmax.f32 %v1050, 0.0
  %v1307 = vmax.f32 %v1051, 0.0
  %v1308 = vmax.f32 %v1052, 0.0
  %v1309 = vmax.f32 %v1053, 0.0
  %v1310 = vmax.f32 %v1054, 0.0
  %v1311 = vmax.f32 %v1055, 0.0
  %v1312 = vmax.f32 %v1056, 0.0
  %v1313 = vmax.f32 %v1057, 0.0
  %v1314 = vmax.f32 %v1058, 0.0
  %v1315 = vmax.f32 %v1059, 0.0
  %v1316 = vmax.f32 %v1060, 0.0
  %v1317 = vmax.f32 %v1061, 0.0
  %v1318 = vmax.f32 %v1062, 0.0
  %v1319 = vmax.f32 %v1063, 0.0
  %v1320 = vmax.f32 %v1064, 0.0
  %v1321 = vmax.f32 %v1065, 0.0
  %v1322 = vmax.f32 %v1066, 0.0
  %v1323 = vmax.f32 %v1067, 0.0
  %v1324 = vmax.f32 %v1068, 0.0
  %v1325 = vmax.f32 %v1069, 0.0
  %v1326 = vmax.f32 %v1070, 0.0
  %v1327 = vmax.f32 %v1071, 0.0
  %v1328 = vmax.f32 %v1072, 0.0
  %v1329 = vmax.f32 %v1073, 0.0
  %v1330 = vmax.f32 %v1074, 0.0
  %v1331 = vmax.f32 %v1075, 0.0
  %v1332 = vmax.f32 %v1076, 0.0
  %v1333 = vmax.f32 %v1077, 0.0
  %v1334 = vmax.f32 %v1078, 0.0
  %v1335 = vmax.f32 %v1079, 0.0
  %v1336 = vmax.f32 %v1080, 0.0
  %v1337 = vmax.f32 %v1081, 0.0
  %v1338 = vmax.f32 %v1082, 0.0
  %v1339 = vmax.f32 %v1083, 0.0
  %v1340 = vmax.f32 %v1084, 0.0
  %v1341 = vmax.f32 %v1085, 0.0
  %v1342 = vmax.f32 %v1086, 0.0
  %v1343 = vmax.f32 %v1087, 0.0
  %v1344 = vmax.f32 %v1088, 0.0
  %v1345 = vmax.f32 %v1089, 0.0
  %v1346 = vmax.f32 %v1090, 0.0
  %v1347 = vmax.f32 %v1091, 0.0
  %v1348 = vmax.f32 %v1092, 0.0
  %v1349 = vmax.f32 %v1093, 0.0
  %v1350 = vmax.f32 %v1094, 0.0
  %v1351 = vmax.f32 %v1095, 0.0
  %v1352 = vmax.f32 %v1096, 0.0
  %v1353 = vmax.f32 %v1097, 0.0
  %v1354 = vmax.f32 %v1098, 0.0
  %v1355 = vmax.f32 %v1099, 0.0
  %v1356 = vmax.f32 %v1100, 0.0
  %v1357 = vmax.f32 %v1101, 0.0
  %v1358 = vmax.f32 %v1102, 0.0
  %v1359 = vmax.f32 %v1103, 0.0
  %v1360 = vmax.f32 %v1104, 0.0
  %v1361 = vmax.f32 %v1105, 0.0
  %v1362 = vmax.f32 %v1106, 0.0
  %v1363 = vmax.f32 %v1107, 0.0
  %v1364 = vmax.f32 %v1108, 0.0
  %v1365 = vmax.f32 %v1109, 0.0
  %v1366 = vmax.f32 %v1110, 0.0
  %v1367 = vmax.f32 %v1111, 0.0
  %v1368 = vmax.f32 %v1112, 0.0
  %v1369 = vmax.f32 %v1113, 0.0
  %v1370 = vmax.f32 %v1114, 0.0
  %v1371 = vmax.f32 %v1115, 0.0
  %v1372 = vmax.f32 %v1116, 0.0
  %v1373 = vmax.f32 %v1117, 0.0
  %v1374 = vmax.f32 %v1118, 0.0
  %v1375 = vmax.f32 %v1119, 0.0
  %v1376 = vmax.f32 %v1120, 0.0
  %v1377 = vmax.f32 %v1121, 0.0
  %v1378 = vmax.f32 %v1122, 0.0
  %v1379 = vmax.f32 %v1123, 0.0
  %v1380 = vmax.f32 %v1124, 0.0
  %v1381 = vmax.f32 %v1125, 0.0
  %v1382 = vmax.f32 %v1126, 0.0
  %v1383 = vmax.f32 %v1127, 0.0
  %v1384 = vmax.f32 %v1128, 0.0
  %v1385 = vmax.f32 %v1129, 0.0
  %v1386 = vmax.f32 %v1130, 0.0
  %v1387 = vmax.f32 %v1131, 0.0
  %v1388 = vmax.f32 %v1132, 0.0
  %v1389 = vmax.f32 %v1133, 0.0
  %v1390 = vmax.f32 %v1134, 0.0
  %v1391 = vmax.f32 %v1135, 0.0
  %v1392 = vmax.f32 %v1136, 0.0
  %v1393 = vmax.f32 %v1137, 0.0
  %v1394 = vmax.f32 %v1138, 0.0
  %v1395 = vmax.f32 %v1139, 0.0
  %v1396 = vmax.f32 %v1140, 0.0
  %v1397 = vmax.f32 %v1141, 0.0
  %v1398 = vmax.f32 %v1142, 0.0
  %v1399 = vmax.f32 %v1143, 0.0
  %v1400 = vmax.f32 %v1144, 0.0
  %v1401 = vmax.f32 %v1145, 0.0
  %v1402 = vmax.f32 %v1146, 0.0
  %v1403 = vmax.f32 %v1147, 0.0
  %v1404 = vmax.f32 %v1148, 0.0
  %v1405 = vmax.f32 %v1149, 0.0
  %v1406 = vmax.f32 %v1150, 0.0
  %v1407 = vmax.f32 %v1151, 0.0
  %v1408 = vmax.f32 %v1152, 0.0
  %v1409 = vmax.f32 %v1153, 0.0
  %v1410 = vmax.f32 %v1154, 0.0
  %v1411 = vmax.f32 %v1155, 0.0
  %v1412 = vmax.f32 %v1156, 0.0
  %v1413 = vmax.f32 %v1157, 0.0
  %v1414 = vmax.f32 %v1158, 0.0
  %v1415 = vmax.f32 %v1159, 0.0
  %v1416 = vmax.f32 %v1160, 0.0
  %v1417 = vmax.f32 %v1161, 0.0
  %v1418 = vmax.f32 %v1162, 0.0
  %v1419 = vmax.f32 %v1163, 0.0
  %v1420 = vmax.f32 %v1164, 0.0
  %v1421 = vmax.f32 %v1165, 0.0
  %v1422 = vmax.f32 %v1166, 0.0
  %v1423 = vmax.f32 %v1167, 0.0
  %v1424 = vmax.f32 %v1168, 0.0
  %v1425 = vmax.f32 %v1169, 0.0
  %v1426 = vmax.f32 %v1170, 0.0
  %v1427 = vmax.f32 %v1171, 0.0
  %v1428 = vmax.f32 %v1172, 0.0
  %v1429 = vmax.f32 %v1173, 0.0
  %v1430 = vmax.f32 %v1174, 0.0
  %v1431 = vmax.f32 %v1175, 0.0
  %v1432 = vmax.f32 %v1176, 0.0
  %v1433 = vmax.f32 %v1177, 0.0
  %v1434 = vmax.f32 %v1178, 0.0
  %v1435 = vmax.f32 %v1179, 0.0
  %v1436 = vmax.f32 %v1180, 0.0
  %v1437 = vmax.f32 %v1181, 0.0
  %v1438 = vmax.f32 %v1182, 0.0
  %v1439 = vmax.f32 %v1183, 0.0
  %v1440 = vmax.f32 %v1184, 0.0
  %v1441 = vmax.f32 %v1185, 0.0
  %v1442 = vmax.f32 %v1186, 0.0
  %v1443 = vmax.f32 %v1187, 0.0
  %v1444 = vmax.f32 %v1188, 0.0
  %v1445 = vmax.f32 %v1189, 0.0
  %v1446 = vmax.f32 %v1190, 0.0
  %v1447 = vmax.f32 %v1191, 0.0
  %v1448 = vmax.f32 %v1192, 0.0
  %v1449 = vmax.f32 %v1193, 0.0
  %v1450 = vmax.f32 %v1194, 0.0
  %v1451 = vmax.f32 %v1195, 0.0
  %v1452 = vmax.f32 %v1196, 0.0
  %v1453 = vmax.f32 %v1197, 0.0
  %v1454 = vmax.f32 %v1198, 0.0
  %v1455 = vmax.f32 %v1199, 0.0
  %v1456 = vmax.f32 %v1200, 0.0
  %v1457 = vmax.f32 %v1201, 0.0
  %v1458 = vmax.f32 %v1202, 0.0
  %v1459 = vmax.f32 %v1203, 0.0
  %v1460 = vmax.f32 %v1204, 0.0
  %v1461 = vmax.f32 %v1205, 0.0
  %v1462 = vmax.f32 %v1206, 0.0
  %v1463 = vmax.f32 %v1207, 0.0
  %v1464 = vmax.f32 %v1208, 0.0
  %v1465 = vmax.f32 %v1209, 0.0
  %v1466 = vmax.f32 %v1210, 0.0
  %v1467 = vmax.f32 %v1211, 0.0
  %v1468 = vmax.f32 %v1212, 0.0
  %v1469 = vmax.f32 %v1213, 0.0
  %v1470 = vmax.f32 %v1214, 0.0
  %v1471 = vmax.f32 %v1215, 0.0
  %v1472 = vmax.f32 %v1216, 0.0
  %v1473 = vmax.f32 %v1217, 0.0
  %v1474 = vmax.f32 %v1218, 0.0
  %v1475 = vmax.f32 %v1219, 0.0
  %v1476 = vmax.f32 %v1220, 0.0
  %v1477 = vmax.f32 %v1221, 0.0
  %v1478 = vmax.f32 %v1222, 0.0
  %v1479 = vmax.f32 %v1223, 0.0
  %v1480 = vmax.f32 %v1224, 0.0
  %v1481 = vmax.f32 %v1225, 0.0
  %v1482 = vmax.f32 %v1226, 0.0
  %v1483 = vmax.f32 %v1227, 0.0
  %v1484 = vmax.f32 %v1228, 0.0
  %v1485 = vmax.f32 %v1229, 0.0
  %v1486 = vmax.f32 %v1230, 0.0
  %v1487 = vmax.f32 %v1231, 0.0
  %v1488 = vmax.f32 %v1232, 0.0
  %v1489 = vmax.f32 %v1233, 0.0
  %v1490 = vmax.f32 %v1234, 0.0
  %v1491 = vmax.f32 %v1235, 0.0
  %v1492 = vmax.f32 %v1236, 0.0
  %v1493 = vmax.f32 %v1237, 0.0
  %v1494 = vmax.f32 %v1238, 0.0
  %v1495 = vmax.f32 %v1239, 0.0
  %v1496 = vmax.f32 %v1240, 0.0
  %v1497 = vmax.f32 %v1241, 0.0
  %v1498 = vmax.f32 %v1242, 0.0
  %v1499 = vmax.f32 %v1243, 0.0
  %v1500 = vmax.f32 %v1244, 0.0
  %v1501 = vmax.f32 %v1245, 0.0
  %1502 = vst [vmem:[%s3] sm:$0xff] %v1246
  %1503 = vst [vmem:[%s3 + $0x8] sm:$0xff] %v1247
  %1504 = vst [vmem:[%s3 + $0x10] sm:$0xff] %v1248
  %1505 = vst [vmem:[%s3 + $0x18] sm:$0xff] %v1249
  %1506 = vst [vmem:[%s3 + $0x20] sm:$0xff] %v1250
  %1507 = vst [vmem:[%s3 + $0x28] sm:$0xff] %v1251
  %1508 = vst [vmem:[%s3 + $0x30] sm:$0xff] %v1252
  %1509 = vst [vmem:[%s3 + $0x38] sm:$0xff] %v1253
  %1510 = vst [vmem:[%s3 + $0x40] sm:$0xff] %v1254
  %1511 = vst [vmem:[%s3 + $0x48] sm:$0xff] %v1255
  %1512 = vst [vmem:[%s3 + $0x50] sm:$0xff] %v1256
  %1513 = vst [vmem:[%s3 + $0x58] sm:$0xff] %v1257
  %1514 = vst [vmem:[%s3 + $0x60] sm:$0xff] %v1258
  %1515 = vst [vmem:[%s3 + $0x68] sm:$0xff] %v1259
  %1516 = vst [vmem:[%s3 + $0x70] sm:$0xff] %v1260
  %1517 = vst [vmem:[%s3 + $0x78] sm:$0xff] %v1261
  %1518 = vst [vmem:[%s3 + $0x80] sm:$0xff] %v1262
  %1519 = vst [vmem:[%s3 + $0x88] sm:$0xff] %v1263
  %1520 = vst [vmem:[%s3 + $0x90] sm:$0xff] %v1264
  %1521 = vst [vmem:[%s3 + $0x98] sm:$0xff] %v1265
  %1522 = vst [vmem:[%s3 + $0xa0] sm:$0xff] %v1266
  %1523 = vst [vmem:[%s3 + $0xa8] sm:$0xff] %v1267
  %1524 = vst [vmem:[%s3 + $0xb0] sm:$0xff] %v1268
  %1525 = vst [vmem:[%s3 + $0xb8] sm:$0xff] %v1269
  %1526 = vst [vmem:[%s3 + $0xc0] sm:$0xff] %v1270
  %1527 = vst [vmem:[%s3 + $0xc8] sm:$0xff] %v1271
  %1528 = vst [vmem:[%s3 + $0xd0] sm:$0xff] %v1272
  %1529 = vst [vmem:[%s3 + $0xd8] sm:$0xff] %v1273
  %1530 = vst [vmem:[%s3 + $0xe0] sm:$0xff] %v1274
  %1531 = vst [vmem:[%s3 + $0xe8] sm:$0xff] %v1275
  %1532 = vst [vmem:[%s3 + $0xf0] sm:$0xff] %v1276
  %1533 = vst [vmem:[%s3 + $0xf8] sm:$0xff] %v1277
  %1534 = vst [vmem:[%s3 + $0x100] sm:$0xff] %v1278
  %1535 = vst [vmem:[%s3 + $0x108] sm:$0xff] %v1279
  %1536 = vst [vmem:[%s3 + $0x110] sm:$0xff] %v1280
  %1537 = vst [vmem:[%s3 + $0x118] sm:$0xff] %v1281
  %1538 = vst [vmem:[%s3 + $0x120] sm:$0xff] %v1282
  %1539 = vst [vmem:[%s3 + $0x128] sm:$0xff] %v1283
  %1540 = vst [vmem:[%s3 + $0x130] sm:$0xff] %v1284
  %1541 = vst [vmem:[%s3 + $0x138] sm:$0xff] %v1285
  %1542 = vst [vmem:[%s3 + $0x140] sm:$0xff] %v1286
  %1543 = vst [vmem:[%s3 + $0x148] sm:$0xff] %v1287
  %1544 = vst [vmem:[%s3 + $0x150] sm:$0xff] %v1288
  %1545 = vst [vmem:[%s3 + $0x158] sm:$0xff] %v1289
  %1546 = vst [vmem:[%s3 + $0x160] sm:$0xff] %v1290
  %1547 = vst [vmem:[%s3 + $0x168] sm:$0xff] %v1291
  %1548 = vst [vmem:[%s3 + $0x170] sm:$0xff] %v1292
  %1549 = vst [vmem:[%s3 + $0x178] sm:$0xff] %v1293
  %1550 = vst [vmem:[%s3 + $0x180] sm:$0xff] %v1294
  %1551 = vst [vmem:[%s3 + $0x188] sm:$0xff] %v1295
  %1552 = vst [vmem:[%s3 + $0x190] sm:$0xff] %v1296
  %1553 = vst [vmem:[%s3 + $0x198] sm:$0xff] %v1297
  %1554 = vst [vmem:[%s3 + $0x1a0] sm:$0xff] %v1298
  %1555 = vst [vmem:[%s3 + $0x1a8] sm:$0xff] %v1299
  %1556 = vst [vmem:[%s3 + $0x1b0] sm:$0xff] %v1300
  %1557 = vst [vmem:[%s3 + $0x1b8] sm:$0xff] %v1301
  %1558 = vst [vmem:[%s3 + $0x1c0] sm:$0xff] %v1302
  %1559 = vst [vmem:[%s3 + $0x1c8] sm:$0xff] %v1303
  %1560 = vst [vmem:[%s3 + $0x1d0] sm:$0xff] %v1304
  %1561 = vst [vmem:[%s3 + $0x1d8] sm:$0xff] %v1305
  %1562 = vst [vmem:[%s3 + $0x1e0] sm:$0xff] %v1306
  %1563 = vst [vmem:[%s3 + $0x1e8] sm:$0xff] %v1307
  %1564 = vst [vmem:[%s3 + $0x1f0] sm:$0xff] %v1308
  %1565 = vst [vmem:[%s3 + $0x1f8] sm:$0xff] %v1309
  %1566 = vst [vmem:[%s3 + $0x200] sm:$0xff] %v1310
  %1567 = vst [vmem:[%s3 + $0x208] sm:$0xff] %v1311
  %1568 = vst [vmem:[%s3 + $0x210] sm:$0xff] %v1312
  %1569 = vst [vmem:[%s3 + $0x218] sm:$0xff] %v1313
  %1570 = vst [vmem:[%s3 + $0x220] sm:$0xff] %v1314
  %1571 = vst [vmem:[%s3 + $0x228] sm:$0xff] %v1315
  %1572 = vst [vmem:[%s3 + $0x230] sm:$0xff] %v1316
  %1573 = vst [vmem:[%s3 + $0x238] sm:$0xff] %v1317
  %1574 = vst [vmem:[%s3 + $0x240] sm:$0xff] %v1318
  %1575 = vst [vmem:[%s3 + $0x248] sm:$0xff] %v1319
  %1576 = vst [vmem:[%s3 + $0x250] sm:$0xff] %v1320
  %1577 = vst [vmem:[%s3 + $0x258] sm:$0xff] %v1321
  %1578 = vst [vmem:[%s3 + $0x260] sm:$0xff] %v1322
  %1579 = vst [vmem:[%s3 + $0x268] sm:$0xff] %v1323
  %1580 = vst [vmem:[%s3 + $0x270] sm:$0xff] %v1324
  %1581 = vst [vmem:[%s3 + $0x278] sm:$0xff] %v1325
  %1582 = vst [vmem:[%s3 + $0x280] sm:$0xff] %v1326
  %1583 = vst [vmem:[%s3 + $0x288] sm:$0xff] %v1327
  %1584 = vst [vmem:[%s3 + $0x290] sm:$0xff] %v1328
  %1585 = vst [vmem:[%s3 + $0x298] sm:$0xff] %v1329
  %1586 = vst [vmem:[%s3 + $0x2a0] sm:$0xff] %v1330
  %1587 = vst [vmem:[%s3 + $0x2a8] sm:$0xff] %v1331
  %1588 = vst [vmem:[%s3 + $0x2b0] sm:$0xff] %v1332
  %1589 = vst [vmem:[%s3 + $0x2b8] sm:$0xff] %v1333
  %1590 = vst [vmem:[%s3 + $0x2c0] sm:$0xff] %v1334
  %1591 = vst [vmem:[%s3 + $0x2c8] sm:$0xff] %v1335
  %1592 = vst [vmem:[%s3 + $0x2d0] sm:$0xff] %v1336
  %1593 = vst [vmem:[%s3 + $0x2d8] sm:$0xff] %v1337
  %1594 = vst [vmem:[%s3 + $0x2e0] sm:$0xff] %v1338
  %1595 = vst [vmem:[%s3 + $0x2e8] sm:$0xff] %v1339
  %1596 = vst [vmem:[%s3 + $0x2f0] sm:$0xff] %v1340
  %1597 = vst [vmem:[%s3 + $0x2f8] sm:$0xff] %v1341
  %1598 = vst [vmem:[%s3 + $0x300] sm:$0xff] %v1342
  %1599 = vst [vmem:[%s3 + $0x308] sm:$0xff] %v1343
  %1600 = vst [vmem:[%s3 + $0x310] sm:$0xff] %v1344
  %1601 = vst [vmem:[%s3 + $0x318] sm:$0xff] %v1345
  %1602 = vst [vmem:[%s3 + $0x320] sm:$0xff] %v1346
  %1603 = vst [vmem:[%s3 + $0x328] sm:$0xff] %v1347
  %1604 = vst [vmem:[%s3 + $0x330] sm:$0xff] %v1348
  %1605 = vst [vmem:[%s3 + $0x338] sm:$0xff] %v1349
  %1606 = vst [vmem:[%s3 + $0x340] sm:$0xff] %v1350
  %1607 = vst [vmem:[%s3 + $0x348] sm:$0xff] %v1351
  %1608 = vst [vmem:[%s3 + $0x350] sm:$0xff] %v1352
  %1609 = vst [vmem:[%s3 + $0x358] sm:$0xff] %v1353
  %1610 = vst [vmem:[%s3 + $0x360] sm:$0xff] %v1354
  %1611 = vst [vmem:[%s3 + $0x368] sm:$0xff] %v1355
  %1612 = vst [vmem:[%s3 + $0x370] sm:$0xff] %v1356
  %1613 = vst [vmem:[%s3 + $0x378] sm:$0xff] %v1357
  %1614 = vst [vmem:[%s3 + $0x380] sm:$0xff] %v1358
  %1615 = vst [vmem:[%s3 + $0x388] sm:$0xff] %v1359
  %1616 = vst [vmem:[%s3 + $0x390] sm:$0xff] %v1360
  %1617 = vst [vmem:[%s3 + $0x398] sm:$0xff] %v1361
  %1618 = vst [vmem:[%s3 + $0x3a0] sm:$0xff] %v1362
  %1619 = vst [vmem:[%s3 + $0x3a8] sm:$0xff] %v1363
  %1620 = vst [vmem:[%s3 + $0x3b0] sm:$0xff] %v1364
  %1621 = vst [vmem:[%s3 + $0x3b8] sm:$0xff] %v1365
  %1622 = vst [vmem:[%s3 + $0x3c0] sm:$0xff] %v1366
  %1623 = vst [vmem:[%s3 + $0x3c8] sm:$0xff] %v1367
  %1624 = vst [vmem:[%s3 + $0x3d0] sm:$0xff] %v1368
  %1625 = vst [vmem:[%s3 + $0x3d8] sm:$0xff] %v1369
  %1626 = vst [vmem:[%s3 + $0x3e0] sm:$0xff] %v1370
  %1627 = vst [vmem:[%s3 + $0x3e8] sm:$0xff] %v1371
  %1628 = vst [vmem:[%s3 + $0x3f0] sm:$0xff] %v1372
  %1629 = vst [vmem:[%s3 + $0x3f8] sm:$0xff] %v1373
  %1630 = vst [vmem:[%s3 + $0x400] sm:$0xff] %v1374
  %1631 = vst [vmem:[%s3 + $0x408] sm:$0xff] %v1375
  %1632 = vst [vmem:[%s3 + $0x410] sm:$0xff] %v1376
  %1633 = vst [vmem:[%s3 + $0x418] sm:$0xff] %v1377
  %1634 = vst [vmem:[%s3 + $0x420] sm:$0xff] %v1378
  %1635 = vst [vmem:[%s3 + $0x428] sm:$0xff] %v1379
  %1636 = vst [vmem:[%s3 + $0x430] sm:$0xff] %v1380
  %1637 = vst [vmem:[%s3 + $0x438] sm:$0xff] %v1381
  %1638 = vst [vmem:[%s3 + $0x440] sm:$0xff] %v1382
  %1639 = vst [vmem:[%s3 + $0x448] sm:$0xff] %v1383
  %1640 = vst [vmem:[%s3 + $0x450] sm:$0xff] %v1384
  %1641 = vst [vmem:[%s3 + $0x458] sm:$0xff] %v1385
  %1642 = vst [vmem:[%s3 + $0x460] sm:$0xff] %v1386
  %1643 = vst [vmem:[%s3 + $0x468] sm:$0xff] %v1387
  %1644 = vst [vmem:[%s3 + $0x470] sm:$0xff] %v1388
  %1645 = vst [vmem:[%s3 + $0x478] sm:$0xff] %v1389
  %1646 = vst [vmem:[%s3 + $0x480] sm:$0xff] %v1390
  %1647 = vst [vmem:[%s3 + $0x488] sm:$0xff] %v1391
  %1648 = vst [vmem:[%s3 + $0x490] sm:$0xff] %v1392
  %1649 = vst [vmem:[%s3 + $0x498] sm:$0xff] %v1393
  %1650 = vst [vmem:[%s3 + $0x4a0] sm:$0xff] %v1394
  %1651 = vst [vmem:[%s3 + $0x4a8] sm:$0xff] %v1395
  %1652 = vst [vmem:[%s3 + $0x4b0] sm:$0xff] %v1396
  %1653 = vst [vmem:[%s3 + $0x4b8] sm:$0xff] %v1397
  %1654 = vst [vmem:[%s3 + $0x4c0] sm:$0xff] %v1398
  %1655 = vst [vmem:[%s3 + $0x4c8] sm:$0xff] %v1399
  %1656 = vst [vmem:[%s3 + $0x4d0] sm:$0xff] %v1400
  %1657 = vst [vmem:[%s3 + $0x4d8] sm:$0xff] %v1401
  %1658 = vst [vmem:[%s3 + $0x4e0] sm:$0xff] %v1402
  %1659 = vst [vmem:[%s3 + $0x4e8] sm:$0xff] %v1403
  %1660 = vst [vmem:[%s3 + $0x4f0] sm:$0xff] %v1404
  %1661 = vst [vmem:[%s3 + $0x4f8] sm:$0xff] %v1405
  %1662 = vst [vmem:[%s3 + $0x500] sm:$0xff] %v1406
  %1663 = vst [vmem:[%s3 + $0x508] sm:$0xff] %v1407
  %1664 = vst [vmem:[%s3 + $0x510] sm:$0xff] %v1408
  %1665 = vst [vmem:[%s3 + $0x518] sm:$0xff] %v1409
  %1666 = vst [vmem:[%s3 + $0x520] sm:$0xff] %v1410
  %1667 = vst [vmem:[%s3 + $0x528] sm:$0xff] %v1411
  %1668 = vst [vmem:[%s3 + $0x530] sm:$0xff] %v1412
  %1669 = vst [vmem:[%s3 + $0x538] sm:$0xff] %v1413
  %1670 = vst [vmem:[%s3 + $0x540] sm:$0xff] %v1414
  %1671 = vst [vmem:[%s3 + $0x548] sm:$0xff] %v1415
  %1672 = vst [vmem:[%s3 + $0x550] sm:$0xff] %v1416
  %1673 = vst [vmem:[%s3 + $0x558] sm:$0xff] %v1417
  %1674 = vst [vmem:[%s3 + $0x560] sm:$0xff] %v1418
  %1675 = vst [vmem:[%s3 + $0x568] sm:$0xff] %v1419
  %1676 = vst [vmem:[%s3 + $0x570] sm:$0xff] %v1420
  %1677 = vst [vmem:[%s3 + $0x578] sm:$0xff] %v1421
  %1678 = vst [vmem:[%s3 + $0x580] sm:$0xff] %v1422
  %1679 = vst [vmem:[%s3 + $0x588] sm:$0xff] %v1423
  %1680 = vst [vmem:[%s3 + $0x590] sm:$0xff] %v1424
  %1681 = vst [vmem:[%s3 + $0x598] sm:$0xff] %v1425
  %1682 = vst [vmem:[%s3 + $0x5a0] sm:$0xff] %v1426
  %1683 = vst [vmem:[%s3 + $0x5a8] sm:$0xff] %v1427
  %1684 = vst [vmem:[%s3 + $0x5b0] sm:$0xff] %v1428
  %1685 = vst [vmem:[%s3 + $0x5b8] sm:$0xff] %v1429
  %1686 = vst [vmem:[%s3 + $0x5c0] sm:$0xff] %v1430
  %1687 = vst [vmem:[%s3 + $0x5c8] sm:$0xff] %v1431
  %1688 = vst [vmem:[%s3 + $0x5d0] sm:$0xff] %v1432
  %1689 = vst [vmem:[%s3 + $0x5d8] sm:$0xff] %v1433
  %1690 = vst [vmem:[%s3 + $0x5e0] sm:$0xff] %v1434
  %1691 = vst [vmem:[%s3 + $0x5e8] sm:$0xff] %v1435
  %1692 = vst [vmem:[%s3 + $0x5f0] sm:$0xff] %v1436
  %1693 = vst [vmem:[%s3 + $0x5f8] sm:$0xff] %v1437
  %1694 = vst [vmem:[%s3 + $0x600] sm:$0xff] %v1438
  %1695 = vst [vmem:[%s3 + $0x608] sm:$0xff] %v1439
  %1696 = vst [vmem:[%s3 + $0x610] sm:$0xff] %v1440
  %1697 = vst [vmem:[%s3 + $0x618] sm:$0xff] %v1441
  %1698 = vst [vmem:[%s3 + $0x620] sm:$0xff] %v1442
  %1699 = vst [vmem:[%s3 + $0x628] sm:$0xff] %v1443
  %1700 = vst [vmem:[%s3 + $0x630] sm:$0xff] %v1444
  %1701 = vst [vmem:[%s3 + $0x638] sm:$0xff] %v1445
  %1702 = vst [vmem:[%s3 + $0x640] sm:$0xff] %v1446
  %1703 = vst [vmem:[%s3 + $0x648] sm:$0xff] %v1447
  %1704 = vst [vmem:[%s3 + $0x650] sm:$0xff] %v1448
  %1705 = vst [vmem:[%s3 + $0x658] sm:$0xff] %v1449
  %1706 = vst [vmem:[%s3 + $0x660] sm:$0xff] %v1450
  %1707 = vst [vmem:[%s3 + $0x668] sm:$0xff] %v1451
  %1708 = vst [vmem:[%s3 + $0x670] sm:$0xff] %v1452
  %1709 = vst [vmem:[%s3 + $0x678] sm:$0xff] %v1453
  %1710 = vst [vmem:[%s3 + $0x680] sm:$0xff] %v1454
  %1711 = vst [vmem:[%s3 + $0x688] sm:$0xff] %v1455
  %1712 = vst [vmem:[%s3 + $0x690] sm:$0xff] %v1456
  %1713 = vst [vmem:[%s3 + $0x698] sm:$0xff] %v1457
  %1714 = vst [vmem:[%s3 + $0x6a0] sm:$0xff] %v1458
  %1715 = vst [vmem:[%s3 + $0x6a8] sm:$0xff] %v1459
  %1716 = vst [vmem:[%s3 + $0x6b0] sm:$0xff] %v1460
  %1717 = vst [vmem:[%s3 + $0x6b8] sm:$0xff] %v1461
  %1718 = vst [vmem:[%s3 + $0x6c0] sm:$0xff] %v1462
  %1719 = vst [vmem:[%s3 + $0x6c8] sm:$0xff] %v1463
  %1720 = vst [vmem:[%s3 + $0x6d0] sm:$0xff] %v1464
  %1721 = vst [vmem:[%s3 + $0x6d8] sm:$0xff] %v1465
  %1722 = vst [vmem:[%s3 + $0x6e0] sm:$0xff] %v1466
  %1723 = vst [vmem:[%s3 + $0x6e8] sm:$0xff] %v1467
  %1724 = vst [vmem:[%s3 + $0x6f0] sm:$0xff] %v1468
  %1725 = vst [vmem:[%s3 + $0x6f8] sm:$0xff] %v1469
  %1726 = vst [vmem:[%s3 + $0x700] sm:$0xff] %v1470
  %1727 = vst [vmem:[%s3 + $0x708] sm:$0xff] %v1471
  %1728 = vst [vmem:[%s3 + $0x710] sm:$0xff] %v1472
  %1729 = vst [vmem:[%s3 + $0x718] sm:$0xff] %v1473
  %1730 = vst [vmem:[%s3 + $0x720] sm:$0xff] %v1474
  %1731 = vst [vmem:[%s3 + $0x728] sm:$0xff] %v1475
  %1732 = vst [vmem:[%s3 + $0x730] sm:$0xff] %v1476
  %1733 = vst [vmem:[%s3 + $0x738] sm:$0xff] %v1477
  %1734 = vst [vmem:[%s3 + $0x740] sm:$0xff] %v1478
  %1735 = vst [vmem:[%s3 + $0x748] sm:$0xff] %v1479
  %1736 = vst [vmem:[%s3 + $0x750] sm:$0xff] %v1480
  %1737 = vst [vmem:[%s3 + $0x758] sm:$0xff] %v1481
  %1738 = vst [vmem:[%s3 + $0x760] sm:$0xff] %v1482
  %1739 = vst [vmem:[%s3 + $0x768] sm:$0xff] %v1483
  %1740 = vst [vmem:[%s3 + $0x770] sm:$0xff] %v1484
  %1741 = vst [vmem:[%s3 + $0x778] sm:$0xff] %v1485
  %1742 = vst [vmem:[%s3 + $0x780] sm:$0xff] %v1486
  %1743 = vst [vmem:[%s3 + $0x788] sm:$0xff] %v1487
  %1744 = vst [vmem:[%s3 + $0x790] sm:$0xff] %v1488
  %1745 = vst [vmem:[%s3 + $0x798] sm:$0xff] %v1489
  %1746 = vst [vmem:[%s3 + $0x7a0] sm:$0xff] %v1490
  %1747 = vst [vmem:[%s3 + $0x7a8] sm:$0xff] %v1491
  %1748 = vst [vmem:[%s3 + $0x7b0] sm:$0xff] %v1492
  %1749 = vst [vmem:[%s3 + $0x7b8] sm:$0xff] %v1493
  %1750 = vst [vmem:[%s3 + $0x7c0] sm:$0xff] %v1494
  %1751 = vst [vmem:[%s3 + $0x7c8] sm:$0xff] %v1495
  %1752 = vst [vmem:[%s3 + $0x7d0] sm:$0xff] %v1496
  %1753 = vst [vmem:[%s3 + $0x7d8] sm:$0xff] %v1497
  %1754 = vst [vmem:[%s3 + $0x7e0] sm:$0xff] %v1498
  %1755 = vst [vmem:[%s3 + $0x7e8] sm:$0xff] %v1499
  %1756 = vst [vmem:[%s3 + $0x7f0] sm:$0xff] %v1500
  %1757 = vst [vmem:[%s3 + $0x7f8] sm:$0xff] %v1501
  // Predicated region
  $region14: #{deconv_block_forward.3} parent=0 // pred_check
    _
  $region15: #{deconv_block_forward.3} parent=0 // pred_check_branch
    %1759 = sbr.rel (0) target = $region17
  $region16: #{deconv_block_forward.3} parent=0 // pred_region
    _
  $region17: #{deconv_block_forward.3} parent=0 // pred_fallthru
    _
  // Predicated region
  $region18: #{deconv_block_forward.3} parent=0 // pred_check
    _
  $region19: #{deconv_block_forward.3} parent=0 // pred_check_branch
    %1761 = sbr.rel (0) target = $region21
  $region20: #{deconv_block_forward.3} parent=0 // pred_region
    _
  $region21: #{deconv_block_forward.3} parent=0 // pred_fallthru
    _

// kernel: deconv_block_forward.2
$region0: #{deconv_block_forward.2}
  #allocation0 [shape = 'u32[]', space=smem, size = 0x4, offset = 0x4, fixed_abs, tag = 'smem constant byte address 0x4 - core index']
  #allocation1 [shape = 'u32[144,128]{1,0:T(1,128)}', space=vmem, size = 0x12000, scoped, tag = 'internal scratch']
  %s0 = inlined_call_operand.vmem [shape: bf16[2,18,18,64], index: 0, kind: input, shape index: {}, may-alias: {0,1,2}]
  %s1 = inlined_call_operand.vmem [shape: bf16[2,18,18,64], index: 1, kind: input, shape index: {}, may-alias: {0,1,2}]
  %s2 = inlined_call_operand.vmem [shape: bf16[2,18,18,64], index: 2, kind: input, shape index: {}, may-alias: {0,1,2}]
  %s3 = inlined_call_operand.vmem [shape: bf16[8,128,128], index: 3, kind: input, shape index: {}]
  %s4 = inlined_call_operand.vmem [shape: f32[1,128], index: 4, kind: input, shape index: {}]
  %s5 = inlined_call_operand.vmem [shape: bf16[2,16,2,16,256], index: 5, kind: output, shape index: {0}]
  %s6 = inlined_call_operand.vmem [shape: f32[2,1,2,128], index: 6, kind: output, shape index: {1}]
  %7 = xla_tuple %s5, %s6
  %s8 = sld [smem:[#allocation0]]
  $region61: #{deconv_block_forward.2} parent=0
    _
  %s10 = ssub.s32 1, %s8
  %s11 = scalar_select 0, %s10, %s8
  loop: start=0, step=1, limit=4
  $region2: #{deconv_block_forward.2} parent=0 // loop_pre_header
    _
  $region3: #{deconv_block_forward.2} parent=0 // loop_header
    %s13 = sphi 0, %s17
    %p14 = scmp.ge.s32.totalorder %s13, 4
    %s20 = sphi 0, %s32
    %s21 = sphi 0, %s28
    %s22 = sphi 0, %s20
    %s23 = sphi 0, %s21
    %s24 = sphi 0, %s22
    %s25 = sphi 0, %s23
    %s37 = sphi 0, %s39
    %s40 = sphi 0, %s37
    %s41 = sphi 0, %s40
    %s57 = sphi 0, %s41
    %s69 = sphi 0, %s71
    %s72 = sphi 0, %s69
    %s73 = sphi 0, %s72
    %s89 = sphi 0, %s73
    %s101 = sphi 0, %s103
    %s104 = sphi 0, %s101
    %s105 = sphi 0, %s104
    %s121 = sphi 0, %s105
    %s125 = sphi 0, %s125
    %s127 = sphi 0, %s125
    %s128 = sphi 0, %s127
    %s142 = sphi 0, %s128
    %s146 = sphi 0, %s146
    %s148 = sphi 0, %s146
    %s149 = sphi 0, %s148
    %s163 = sphi 0, %s149
    %s171 = sphi 0, %s173
    %s174 = sphi 0, %s171
    %s175 = sphi 0, %s174
    %s191 = sphi 0, %s175
    %s199 = sphi 0, %s201
    %s202 = sphi 0, %s199
    %s203 = sphi 0, %s202
    %s219 = sphi 0, %s203
  $region4: #{deconv_block_forward.2} parent=0 // loop_header_branch
    %16 = sbr.rel (%p14) target = $region8
  $region5: #{deconv_block_forward.2} parent=0 // loop_body
    %s18 = ssub.s32 %s13, 1
    %s19 = ssub.s32 %s13, 2
    %s26 = sadd.s32 1, %s21
    %p27 = scmp.ge.s32.totalorder %s26, 1
    %s28 = scalar_select %p27, 0, %s26
    %s29 = sadd.s32 1, %s20
    %s30 = scalar_select %p27, %s29, %s20
    %p31 = scmp.ge.s32.totalorder %s30, 2
    %s32 = scalar_select %p31, 0, %s30
    %s33 = ssub.s32 %s20, %s32
    %s34 = ssub.s32 %s21, %s28
    %s35 = sor.u32 %s33, %s34
    %p36 = scmp.eq.s32.totalorder %s35, 0
    %s38 = sadd.s32 %s37, 1
    %s39 = scalar_select %p36, %s37, %s38
    %p42 = pneg %p36
    %p43 = scmp.eq.s32.totalorder %s13, 1
    %p44 = por %p42, %p43
    %p45 = scmp.ne.s32.totalorder %s37, %s40
    %p46 = scmp.eq.s32.totalorder %s13, 0
    %p47 = por %p45, %p46
    %p48 = scmp.ne.s32.totalorder %s37, %s40
    %p49 = scmp.eq.s32.totalorder %s18, 1
    %p50 = por %p48, %p49
    %p51 = scmp.ne.s32.totalorder %s40, %s41
    %p52 = scmp.eq.s32.totalorder %s18, 0
    %p53 = por %p51, %p52
    %p54 = scmp.ne.s32.totalorder %s40, %s41
    %p55 = scmp.eq.s32.totalorder %s19, 1
    %p56 = por %p54, %p55
    %p58 = scmp.ne.s32.totalorder %s41, %s57
    %p59 = scmp.eq.s32.totalorder %s19, 0
    %p60 = por %p58, %p59
    %s61 = smul.u32 %s21, 16
    %s62 = sadd.s32 %s61, 16
    %s63 = smul.u32 %s28, 16
    %s64 = sadd.s32 %s63, 16
    %s65 = ssub.s32 %s20, %s32
    %s66 = ssub.s32 %s62, %s64
    %s67 = sor.u32 %s65, %s66
    %p68 = scmp.eq.s32.totalorder %s67, 0
    %s70 = sadd.s32 %s69, 1
    %s71 = scalar_select %p68, %s69, %s70
    %p74 = pneg %p68
    %p75 = scmp.eq.s32.totalorder %s13, 1
    %p76 = por %p74, %p75
    %p77 = scmp.ne.s32.totalorder %s69, %s72
    %p78 = scmp.eq.s32.totalorder %s13, 0
    %p79 = por %p77, %p78
    %p80 = scmp.ne.s32.totalorder %s69, %s72
    %p81 = scmp.eq.s32.totalorder %s18, 1
    %p82 = por %p80, %p81
    %p83 = scmp.ne.s32.totalorder %s72, %s73
    %p84 = scmp.eq.s32.totalorder %s18, 0
    %p85 = por %p83, %p84
    %p86 = scmp.ne.s32.totalorder %s72, %s73
    %p87 = scmp.eq.s32.totalorder %s19, 1
    %p88 = por %p86, %p87
    %p90 = scmp.ne.s32.totalorder %s73, %s89
    %p91 = scmp.eq.s32.totalorder %s19, 0
    %p92 = por %p90, %p91
    %s93 = smul.u32 %s21, 16
    %s94 = sadd.s32 %s93, 17
    %s95 = smul.u32 %s28, 16
    %s96 = sadd.s32 %s95, 17
    %s97 = ssub.s32 %s20, %s32
    %s98 = ssub.s32 %s94, %s96
    %s99 = sor.u32 %s97, %s98
    %p100 = scmp.eq.s32.totalorder %s99, 0
    %s102 = sadd.s32 %s101, 1
    %s103 = scalar_select %p100, %s101, %s102
    %p106 = pneg %p100
    %p107 = scmp.eq.s32.totalorder %s13, 1
    %p108 = por %p106, %p107
    %p109 = scmp.ne.s32.totalorder %s101, %s104
    %p110 = scmp.eq.s32.totalorder %s13, 0
    %p111 = por %p109, %p110
    %p112 = scmp.ne.s32.totalorder %s101, %s104
    %p113 = scmp.eq.s32.totalorder %s18, 1
    %p114 = por %p112, %p113
    %p115 = scmp.ne.s32.totalorder %s104, %s105
    %p116 = scmp.eq.s32.totalorder %s18, 0
    %p117 = por %p115, %p116
    %p118 = scmp.ne.s32.totalorder %s104, %s105
    %p119 = scmp.eq.s32.totalorder %s19, 1
    %p120 = por %p118, %p119
    %p122 = scmp.ne.s32.totalorder %s105, %s121
    %p123 = scmp.eq.s32.totalorder %s19, 0
    %p124 = por %p122, %p123
    %s126 = sadd.s32 %s125, 1
    %p129 = scmp.eq.s32.totalorder %s13, 1
    %p130 = scmp.ne.s32.totalorder %s125, %s127
    %p131 = scmp.eq.s32.totalorder %s13, 0
    %p132 = por %p130, %p131
    %p133 = scmp.ne.s32.totalorder %s125, %s127
    %p134 = scmp.eq.s32.totalorder %s18, 1
    %p135 = por %p133, %p134
    %p136 = scmp.ne.s32.totalorder %s127, %s128
    %p137 = scmp.eq.s32.totalorder %s18, 0
    %p138 = por %p136, %p137
    %p139 = scmp.ne.s32.totalorder %s127, %s128
    %p140 = scmp.eq.s32.totalorder %s19, 1
    %p141 = por %p139, %p140
    %p143 = scmp.ne.s32.totalorder %s128, %s142
    %p144 = scmp.eq.s32.totalorder %s19, 0
    %p145 = por %p143, %p144
    %s147 = sadd.s32 %s146, 1
    %p150 = scmp.eq.s32.totalorder %s13, 1
    %p151 = scmp.ne.s32.totalorder %s146, %s148
    %p152 = scmp.eq.s32.totalorder %s13, 0
    %p153 = por %p151, %p152
    %p154 = scmp.ne.s32.totalorder %s146, %s148
    %p155 = scmp.eq.s32.totalorder %s18, 1
    %p156 = por %p154, %p155
    %p157 = scmp.ne.s32.totalorder %s148, %s149
    %p158 = scmp.eq.s32.totalorder %s18, 0
    %p159 = por %p157, %p158
    %p160 = scmp.ne.s32.totalorder %s148, %s149
    %p161 = scmp.eq.s32.totalorder %s19, 1
    %p162 = por %p160, %p161
    %p164 = scmp.ne.s32.totalorder %s149, %s163
    %p165 = scmp.eq.s32.totalorder %s19, 0
    %p166 = por %p164, %p165
    %s167 = ssub.s32 %s20, %s32
    %s168 = ssub.s32 %s21, %s28
    %s169 = sor.u32 %s167, %s168
    %p170 = scmp.eq.s32.totalorder %s169, 0
    %s172 = sadd.s32 %s171, 1
    %s173 = scalar_select %p170, %s171, %s172
    %p176 = pneg %p170
    %p177 = scmp.eq.s32.totalorder %s13, 1
    %p178 = por %p176, %p177
    %p179 = scmp.ne.s32.totalorder %s171, %s174
    %p180 = scmp.eq.s32.totalorder %s13, 0
    %p181 = por %p179, %p180
    %p182 = scmp.ne.s32.totalorder %s171, %s174
    %p183 = scmp.eq.s32.totalorder %s18, 1
    %p184 = por %p182, %p183
    %p185 = scmp.ne.s32.totalorder %s174, %s175
    %p186 = scmp.eq.s32.totalorder %s18, 0
    %p187 = por %p185, %p186
    %p188 = scmp.ne.s32.totalorder %s174, %s175
    %p189 = scmp.eq.s32.totalorder %s19, 1
    %p190 = por %p188, %p189
    %p192 = scmp.ne.s32.totalorder %s175, %s191
    %p193 = scmp.eq.s32.totalorder %s19, 0
    %p194 = por %p192, %p193
    %s195 = ssub.s32 %s20, %s32
    %s196 = ssub.s32 %s21, %s28
    %s197 = sor.u32 %s195, %s196
    %p198 = scmp.eq.s32.totalorder %s197, 0
    %s200 = sadd.s32 %s199, 1
    %s201 = scalar_select %p198, %s199, %s200
    %p204 = pneg %p198
    %p205 = scmp.eq.s32.totalorder %s13, 1
    %p206 = por %p204, %p205
    %p207 = scmp.ne.s32.totalorder %s199, %s202
    %p208 = scmp.eq.s32.totalorder %s13, 0
    %p209 = por %p207, %p208
    %p210 = scmp.ne.s32.totalorder %s199, %s202
    %p211 = scmp.eq.s32.totalorder %s18, 1
    %p212 = por %p210, %p211
    %p213 = scmp.ne.s32.totalorder %s202, %s203
    %p214 = scmp.eq.s32.totalorder %s18, 0
    %p215 = por %p213, %p214
    %p216 = scmp.ne.s32.totalorder %s202, %s203
    %p217 = scmp.eq.s32.totalorder %s19, 1
    %p218 = por %p216, %p217
    %p220 = scmp.ne.s32.totalorder %s203, %s219
    %p221 = scmp.eq.s32.totalorder %s19, 0
    %p222 = por %p220, %p221
    %p223 = scmp.le.s32.totalorder 1, %s13
    %p224 = scmp.lt.s32.totalorder %s13, 3
    %p225 = pnand %p223, %p224
    %p226 = pneg %p225
    // Predicated region
    $region9: #{deconv_block_forward.2} parent=5 // pred_check
      _
    $region10: #{deconv_block_forward.2} parent=5 // pred_check_branch
      %228 = sbr.rel (%p225) target = $region12
    $region11: #{deconv_block_forward.2} parent=5 // pred_region
      %s229 = ssub.s32 %s13, 1
      // Predicated region
      $region13: #{deconv_block_forward.2} parent=11 // pred_check
        %p230 = pneg %p138
      $region14: #{deconv_block_forward.2} parent=11 // pred_check_branch
        %232 = sbr.rel (%p230) target = $region16
      $region15: #{deconv_block_forward.2} parent=11 // pred_region
        _
      $region16: #{deconv_block_forward.2} parent=11 // pred_fallthru
        _
      // Predicated region
      $region17: #{deconv_block_forward.2} parent=11 // pred_check
        %p233 = pneg %p159
      $region18: #{deconv_block_forward.2} parent=11 // pred_check_branch
        %235 = sbr.rel (%p233) target = $region20
      $region19: #{deconv_block_forward.2} parent=11 // pred_region
        _
      $region20: #{deconv_block_forward.2} parent=11 // pred_fallthru
        _
    $region12: #{deconv_block_forward.2} parent=5 // pred_fallthru
      _
    %p236 = scmp.lt.s32.totalorder %s13, 2
    // Predicated region
    $region21: #{deconv_block_forward.2} parent=5 // pred_check
      %p237 = pneg %p236
    $region22: #{deconv_block_forward.2} parent=5 // pred_check_branch
      %239 = sbr.rel (%p237) target = $region24
    $region23: #{deconv_block_forward.2} parent=5 // pred_region
      // Predicated region
      $region25: #{deconv_block_forward.2} parent=23 // pred_check
        %p240 = pneg %p47
      $region26: #{deconv_block_forward.2} parent=23 // pred_check_branch
        %242 = sbr.rel (%p240) target = $region28
      $region27: #{deconv_block_forward.2} parent=23 // pred_region
        %s243 = smul.u32 16, %s21
        %s244 = ssub.s32 18, %s243
        %p245 = scmp.lt.s32.totalorder %s244, 16
        %s246 = scalar_select %p245, %s244, 16
        %s247 = smul.u32 64, %s246
        %s248 = smul.u32 %s247, 3
        %p249 = scmp.lt.s32.totalorder %s20, 1
        %s250 = scalar_select %p249, %s20, 1
        %p251 = scmp.lt.s32.totalorder %s243, 17
        %s252 = scalar_select %p251, %s243, 17
        %s253 = smul.addr %s252, 3
        %s254 = smul.addr %s250, 54
        %s255 = sadd.s32 %s253, %s254
        %s256 = smul.addr %s255, 4
        %s257 = scalar_lea.vmem %s0, %s256
        %s258 = smul.u32 16, %s21
        %s259 = ssub.s32 18, %s258
        %p260 = scmp.lt.s32.totalorder %s259, 16
        %s261 = scalar_select %p260, %s259, 16
        %s262 = smul.u32 64, %s261
        %s263 = smul.u32 %s262, 3
      $region28: #{deconv_block_forward.2} parent=23 // pred_fallthru
        _
      // Predicated region
      $region29: #{deconv_block_forward.2} parent=23 // pred_check
        %p264 = pneg %p79
      $region30: #{deconv_block_forward.2} parent=23 // pred_check_branch
        %266 = sbr.rel (%p264) target = $region32
      $region31: #{deconv_block_forward.2} parent=23 // pred_region
        %s267 = smul.u32 %s21, 16
        %s268 = sadd.s32 %s267, 16
        %p269 = scmp.lt.s32.totalorder %s20, 1
        %s270 = scalar_select %p269, %s20, 1
        %p271 = scmp.lt.s32.totalorder %s268, 17
        %s272 = scalar_select %p271, %s268, 17
        %s273 = smul.addr %s272, 3
        %s274 = smul.addr %s270, 54
        %s275 = sadd.s32 %s273, %s274
        %s276 = smul.addr %s275, 4
        %s277 = scalar_lea.vmem %s1, %s276
        %s278 = smul.u32 %s21, 16
        %s279 = sadd.s32 %s278, 16
      $region32: #{deconv_block_forward.2} parent=23 // pred_fallthru
        _
      // Predicated region
      $region33: #{deconv_block_forward.2} parent=23 // pred_check
        %p280 = pneg %p111
      $region34: #{deconv_block_forward.2} parent=23 // pred_check_branch
        %282 = sbr.rel (%p280) target = $region36
      $region35: #{deconv_block_forward.2} parent=23 // pred_region
        %s283 = smul.u32 %s21, 16
        %s284 = sadd.s32 %s283, 17
        %p285 = scmp.lt.s32.totalorder %s20, 1
        %s286 = scalar_select %p285, %s20, 1
        %p287 = scmp.lt.s32.totalorder %s284, 17
        %s288 = scalar_select %p287, %s284, 17
        %s289 = smul.addr %s288, 3
        %s290 = smul.addr %s286, 54
        %s291 = sadd.s32 %s289, %s290
        %s292 = smul.addr %s291, 4
        %s293 = scalar_lea.vmem %s2, %s292
        %s294 = smul.u32 %s21, 16
        %s295 = sadd.s32 %s294, 17
      $region36: #{deconv_block_forward.2} parent=23 // pred_fallthru
        _
    $region24: #{deconv_block_forward.2} parent=5 // pred_fallthru
      _
    %p296 = scmp.le.s32.totalorder 1, %s13
    %p297 = scmp.lt.s32.totalorder %s13, 3
    %p298 = pnand %p296, %p297
    %p299 = pneg %p298
    // Predicated region
    $region37: #{deconv_block_forward.2} parent=5 // pred_check
      _
    $region38: #{deconv_block_forward.2} parent=5 // pred_check_branch
      %301 = sbr.rel (%p298) target = $region40
    $region39: #{deconv_block_forward.2} parent=5 // pred_region
      %s302 = ssub.s32 %s13, 1
      %s303 = smul.u32 16, %s23
      %s304 = ssub.s32 18, %s303
      %p305 = scmp.lt.s32.totalorder %s304, 16
      %s306 = scalar_select %p305, %s304, 16
      %s307 = smul.u32 64, %s306
      %s308 = smul.u32 %s307, 3
      %p309 = scmp.lt.s32.totalorder %s22, 1
      %s310 = scalar_select %p309, %s22, 1
      %p311 = scmp.lt.s32.totalorder %s303, 17
      %s312 = scalar_select %p311, %s303, 17
      %s313 = smul.addr %s312, 3
      %s314 = smul.addr %s310, 54
      %s315 = sadd.s32 %s313, %s314
      %s316 = smul.addr %s315, 4
      %s317 = scalar_lea.vmem %s0, %s316
      %p318 = pneg %p53
      %p319 = pneg %p50
      %s320 = smul.u32 %s23, 16
      %s321 = sadd.s32 %s320, 16
      %p322 = scmp.lt.s32.totalorder %s22, 1
      %s323 = scalar_select %p322, %s22, 1
      %p324 = scmp.lt.s32.totalorder %s321, 17
      %s325 = scalar_select %p324, %s321, 17
      %s326 = smul.addr %s325, 3
      %s327 = smul.addr %s323, 54
      %s328 = sadd.s32 %s326, %s327
      %s329 = smul.addr %s328, 4
      %s330 = scalar_lea.vmem %s1, %s329
      %p331 = pneg %p85
      %p332 = pneg %p82
      %s333 = smul.u32 %s23, 16
      %s334 = sadd.s32 %s333, 17
      %p335 = scmp.lt.s32.totalorder %s22, 1
      %s336 = scalar_select %p335, %s22, 1
      %p337 = scmp.lt.s32.totalorder %s334, 17
      %s338 = scalar_select %p337, %s334, 17
      %s339 = smul.addr %s338, 3
      %s340 = smul.addr %s336, 54
      %s341 = sadd.s32 %s339, %s340
      %s342 = smul.addr %s341, 4
      %s343 = scalar_lea.vmem %s2, %s342
      %p344 = pneg %p117
      %p345 = pneg %p114
      %p346 = pneg %p138
      %p347 = pneg %p135
      %p348 = pneg %p159
      %p349 = pneg %p156
      %p350 = pneg %p187
      %p351 = pneg %p184
      %s352 = smul.u32 16, %s23
      %p353 = scmp.lt.s32.totalorder %s22, 1
      %s354 = scalar_select %p353, %s22, 1
      %p355 = scmp.lt.s32.totalorder %s352, 15
      %s356 = scalar_select %p355, %s352, 15
      %s357 = smul.addr %s356, 8
      %s358 = smul.addr %s354, 128
      %s359 = sadd.s32 %s357, %s358
      %s360 = smul.addr %s359, 4
      %s361 = scalar_lea.vmem %s5, %s360
      %p362 = pneg %p215
      %p363 = pneg %p212
      %p364 = scmp.lt.s32.totalorder %s22, 1
      %s365 = scalar_select %p364, %s22, 1
      %p366 = scmp.lt.s32.totalorder %s23, 0
      %s367 = scalar_select %p366, %s23, 0
      %s368 = sadd.s32 %s367, %s365
      %s369 = smul.addr %s368, 2
      %s370 = scalar_lea.vmem %s6, %s369
      %s371 = smul.u32 16, %s23
      %s372 = ssub.s32 18, %s371
      %p373 = scmp.lt.s32.totalorder %s372, 16
      %s374 = scalar_select %p373, %s372, 16
      %s375 = smul.u32 64, %s374
      %s376 = smul.u32 %s375, 3
      %p377 = scmp.lt.s32.totalorder %s22, 1
      %s378 = scalar_select %p377, %s22, 1
      %p379 = scmp.lt.s32.totalorder %s371, 17
      %s380 = scalar_select %p379, %s371, 17
      %s381 = smul.addr %s380, 3
      %s382 = smul.addr %s378, 54
      %s383 = sadd.s32 %s381, %s382
      %s384 = smul.addr %s383, 4
      %s385 = scalar_lea.vmem %s0, %s384
      %s386 = smul.u32 16, %s23
      %s387 = ssub.s32 18, %s386
      %p388 = scmp.lt.s32.totalorder %s387, 16
      %s389 = scalar_select %p388, %s387, 16
      %s390 = smul.u32 64, %s389
      %s391 = smul.u32 %s390, 3
      %s392 = smul.u32 %s23, 16
      %s393 = sadd.s32 %s392, 16
      %p394 = scmp.lt.s32.totalorder %s22, 1
      %s395 = scalar_select %p394, %s22, 1
      %p396 = scmp.lt.s32.totalorder %s393, 17
      %s397 = scalar_select %p396, %s393, 17
      %s398 = smul.addr %s397, 3
      %s399 = smul.addr %s395, 54
      %s400 = sadd.s32 %s398, %s399
      %s401 = smul.addr %s400, 4
      %s402 = scalar_lea.vmem %s1, %s401
      %s403 = smul.u32 %s23, 16
      %s404 = sadd.s32 %s403, 16
      %s405 = smul.u32 %s23, 16
      %s406 = sadd.s32 %s405, 17
      %p407 = scmp.lt.s32.totalorder %s22, 1
      %s408 = scalar_select %p407, %s22, 1
      %p409 = scmp.lt.s32.totalorder %s406, 17
      %s410 = scalar_select %p409, %s406, 17
      %s411 = smul.addr %s410, 3
      %s412 = smul.addr %s408, 54
      %s413 = sadd.s32 %s411, %s412
      %s414 = smul.addr %s413, 4
      %s415 = scalar_lea.vmem %s2, %s414
      %s416 = smul.u32 %s23, 16
      %s417 = sadd.s32 %s416, 17
      %s418 = smul.u32 16, %s23
      %p419 = scmp.lt.s32.totalorder %s22, 1
      %s420 = scalar_select %p419, %s22, 1
      %p421 = scmp.lt.s32.totalorder %s418, 15
      %s422 = scalar_select %p421, %s418, 15
      %s423 = smul.addr %s422, 8
      %s424 = smul.addr %s420, 128
      %s425 = sadd.s32 %s423, %s424
      %s426 = smul.addr %s425, 4
      %s427 = scalar_lea.vmem %s5, %s426
      %s428 = smul.u32 16, %s23
      %p429 = scmp.lt.s32.totalorder %s22, 1
      %s430 = scalar_select %p429, %s22, 1
      %p431 = scmp.lt.s32.totalorder %s23, 0
      %s432 = scalar_select %p431, %s23, 0
      %s433 = sadd.s32 %s432, %s430
      %s434 = smul.addr %s433, 2
      %s435 = scalar_lea.vmem %s6, %s434
      %v437 = vld [vmem:[%s385] sm:$0xf]
      %v438 = vld [vmem:[%s385 + $0x4] sm:$0xf]
      %v439 = vld [vmem:[%s385 + $0x8] sm:$0x1]
      %v440 = vld [vmem:[%s385 + $0xc] sm:$0xf]
      %v441 = vld [vmem:[%s385 + $0x10] sm:$0xf]
      %v442 = vld [vmem:[%s385 + $0x14] sm:$0x1]
      %v443 = vld [vmem:[%s385 + $0x18] sm:$0xf]
      %v444 = vld [vmem:[%s385 + $0x1c] sm:$0xf]
      %v445 = vld [vmem:[%s385 + $0x20] sm:$0x1]
      %v446 = vld [vmem:[%s385 + $0x24] sm:$0xf]
      %v447 = vld [vmem:[%s385 + $0x28] sm:$0xf]
      %v448 = vld [vmem:[%s385 + $0x2c] sm:$0x1]
      %v449 = vld [vmem:[%s385 + $0x30] sm:$0xf]
      %v450 = vld [vmem:[%s385 + $0x34] sm:$0xf]
      %v451 = vld [vmem:[%s385 + $0x38] sm:$0x1]
      %v452 = vld [vmem:[%s385 + $0x3c] sm:$0xf]
      %v453 = vld [vmem:[%s385 + $0x40] sm:$0xf]
      %v454 = vld [vmem:[%s385 + $0x44] sm:$0x1]
      %v455 = vld [vmem:[%s385 + $0x48] sm:$0xf]
      %v456 = vld [vmem:[%s385 + $0x4c] sm:$0xf]
      %v457 = vld [vmem:[%s385 + $0x50] sm:$0x1]
      %v458 = vld [vmem:[%s385 + $0x54] sm:$0xf]
      %v459 = vld [vmem:[%s385 + $0x58] sm:$0xf]
      %v460 = vld [vmem:[%s385 + $0x5c] sm:$0x1]
      %v461 = vld [vmem:[%s385 + $0x60] sm:$0xf]
      %v462 = vld [vmem:[%s385 + $0x64] sm:$0xf]
      %v463 = vld [vmem:[%s385 + $0x68] sm:$0x1]
      %v464 = vld [vmem:[%s385 + $0x6c] sm:$0xf]
      %v465 = vld [vmem:[%s385 + $0x70] sm:$0xf]
      %v466 = vld [vmem:[%s385 + $0x74] sm:$0x1]
      %v467 = vld [vmem:[%s385 + $0x78] sm:$0xf]
      %v468 = vld [vmem:[%s385 + $0x7c] sm:$0xf]
      %v469 = vld [vmem:[%s385 + $0x80] sm:$0x1]
      %v470 = vld [vmem:[%s385 + $0x84] sm:$0xf]
      %v471 = vld [vmem:[%s385 + $0x88] sm:$0xf]
      %v472 = vld [vmem:[%s385 + $0x8c] sm:$0x1]
      %v473 = vld [vmem:[%s385 + $0x90] sm:$0xf]
      %v474 = vld [vmem:[%s385 + $0x94] sm:$0xf]
      %v475 = vld [vmem:[%s385 + $0x98] sm:$0x1]
      %v476 = vld [vmem:[%s385 + $0x9c] sm:$0xf]
      %v477 = vld [vmem:[%s385 + $0xa0] sm:$0xf]
      %v478 = vld [vmem:[%s385 + $0xa4] sm:$0x1]
      %v479 = vld [vmem:[%s385 + $0xa8] sm:$0xf]
      %v480 = vld [vmem:[%s385 + $0xac] sm:$0xf]
      %v481 = vld [vmem:[%s385 + $0xb0] sm:$0x1]
      %v482 = vld [vmem:[%s385 + $0xb4] sm:$0xf]
      %v483 = vld [vmem:[%s385 + $0xb8] sm:$0xf]
      %v484 = vld [vmem:[%s385 + $0xbc] sm:$0x1]
      %v485 = vld [vmem:[%s402] sm:$0xf]
      %v486 = vld [vmem:[%s402 + $0x4] sm:$0xf]
      %v487 = vld [vmem:[%s402 + $0x8] sm:$0x1]
      %v488 = vld [vmem:[%s415] sm:$0xf]
      %v489 = vld [vmem:[%s415 + $0x4] sm:$0xf]
      %v490 = vld [vmem:[%s415 + $0x8] sm:$0x1]
      %v491 = vld [vmem:[%s4] sm:$0x1]
      %v524 = vunpack.c.l.b16 %v437
      %v525 = vunpack.c.l.b16 %v438
      %v526 = vunpack.c.l.b16 %v440
      %v527 = vunpack.c.l.b16 %v441
      %v528 = vunpack.c.l.b16 %v443
      %v529 = vunpack.c.l.b16 %v444
      %v530 = vunpack.c.l.b16 %v446
      %v531 = vunpack.c.l.b16 %v447
      %v532 = vunpack.c.l.b16 %v449
      %v533 = vunpack.c.l.b16 %v450
      %v534 = vunpack.c.l.b16 %v452
      %v535 = vunpack.c.l.b16 %v453
      %v536 = vunpack.c.l.b16 %v455
      %v537 = vunpack.c.l.b16 %v456
      %v538 = vunpack.c.l.b16 %v458
      %v539 = vunpack.c.l.b16 %v459
      %v540 = vunpack.c.l.b16 %v461
      %v541 = vunpack.c.l.b16 %v462
      %v542 = vunpack.c.l.b16 %v464
      %v543 = vunpack.c.l.b16 %v465
      %v544 = vunpack.c.l.b16 %v467
      %v545 = vunpack.c.l.b16 %v468
      %v546 = vunpack.c.l.b16 %v470
      %v547 = vunpack.c.l.b16 %v471
      %v548 = vunpack.c.l.b16 %v473
      %v549 = vunpack.c.l.b16 %v474
      %v550 = vunpack.c.l.b16 %v476
      %v551 = vunpack.c.l.b16 %v477
      %v552 = vunpack.c.l.b16 %v479
      %v553 = vunpack.c.l.b16 %v480
      %v554 = vunpack.c.l.b16 %v482
      %v555 = vunpack.c.l.b16 %v483
      %v556 = vpack.c.b16 %v525, %v524
      %v557 = vpack.c.b16 %v527, %v526
      %v558 = vpack.c.b16 %v529, %v528
      %v559 = vpack.c.b16 %v531, %v530
      %v560 = vpack.c.b16 %v533, %v532
      %v561 = vpack.c.b16 %v535, %v534
      %v562 = vpack.c.b16 %v537, %v536
      %v563 = vpack.c.b16 %v539, %v538
      %v564 = vpack.c.b16 %v541, %v540
      %v565 = vpack.c.b16 %v543, %v542
      %v566 = vpack.c.b16 %v545, %v544
      %v567 = vpack.c.b16 %v547, %v546
      %v568 = vpack.c.b16 %v549, %v548
      %v569 = vpack.c.b16 %v551, %v550
      %v570 = vpack.c.b16 %v553, %v552
      %v571 = vpack.c.b16 %v555, %v554
      %v588 = vunpack.c.l.b16 %v439
      %v589 = vunpack.c.l.b16 %v442
      %v590 = vunpack.c.l.b16 %v445
      %v591 = vunpack.c.l.b16 %v448
      %v592 = vunpack.c.l.b16 %v451
      %v593 = vunpack.c.l.b16 %v454
      %v594 = vunpack.c.l.b16 %v457
      %v595 = vunpack.c.l.b16 %v460
      %v596 = vunpack.c.l.b16 %v463
      %v597 = vunpack.c.l.b16 %v466
      %v598 = vunpack.c.l.b16 %v469
      %v599 = vunpack.c.l.b16 %v472
      %v600 = vunpack.c.l.b16 %v475
      %v601 = vunpack.c.l.b16 %v478
      %v602 = vunpack.c.l.b16 %v481
      %v603 = vunpack.c.l.b16 %v484
      %v604 = vpack.c.b16 %v588, %v588
      %v605 = vpack.c.b16 %v589, %v589
      %v606 = vpack.c.b16 %v590, %v590
      %v607 = vpack.c.b16 %v591, %v591
      %v608 = vpack.c.b16 %v592, %v592
      %v609 = vpack.c.b16 %v593, %v593
      %v610 = vpack.c.b16 %v594, %v594
      %v611 = vpack.c.b16 %v595, %v595
      %v612 = vpack.c.b16 %v596, %v596
      %v613 = vpack.c.b16 %v597, %v597
      %v614 = vpack.c.b16 %v598, %v598
      %v615 = vpack.c.b16 %v599, %v599
      %v616 = vpack.c.b16 %v600, %v600
      %v617 = vpack.c.b16 %v601, %v601
      %v618 = vpack.c.b16 %v602, %v602
      %v619 = vpack.c.b16 %v603, %v603
      %vm620 = vsmask.f32 7424
      %v622 = vshrl.u32 %v556, 16
      %v624 = vshll.u32 %v556, 16
      %v626 = vrot.slane %v624, 1
      %v627 = vor.u32 %v622, %v626
      %v629 = vshll.u32 %v604, 16
      %v631 = vrot.slane %v629, 1
      %v632 = vsel %vm620, %v627, %v631
      %v634 = vshrl.u32 %v557, 16
      %v636 = vshll.u32 %v557, 16
      %v638 = vrot.slane %v636, 1
      %v639 = vor.u32 %v634, %v638
      %v641 = vshll.u32 %v605, 16
      %v643 = vrot.slane %v641, 1
      %v644 = vsel %vm620, %v639, %v643
      %v646 = vshrl.u32 %v558, 16
      %v648 = vshll.u32 %v558, 16
      %v650 = vrot.slane %v648, 1
      %v651 = vor.u32 %v646, %v650
      %v653 = vshll.u32 %v606, 16
      %v655 = vrot.slane %v653, 1
      %v656 = vsel %vm620, %v651, %v655
      %v658 = vshrl.u32 %v559, 16
      %v660 = vshll.u32 %v559, 16
      %v662 = vrot.slane %v660, 1
      %v663 = vor.u32 %v658, %v662
      %v665 = vshll.u32 %v607, 16
      %v667 = vrot.slane %v665, 1
      %v668 = vsel %vm620, %v663, %v667
      %v670 = vshrl.u32 %v560, 16
      %v672 = vshll.u32 %v560, 16
      %v674 = vrot.slane %v672, 1
      %v675 = vor.u32 %v670, %v674
      %v677 = vshll.u32 %v608, 16
      %v679 = vrot.slane %v677, 1
      %v680 = vsel %vm620, %v675, %v679
      %v682 = vshrl.u32 %v561, 16
      %v684 = vshll.u32 %v561, 16
      %v686 = vrot.slane %v684, 1
      %v687 = vor.u32 %v682, %v686
      %v689 = vshll.u32 %v609, 16
      %v691 = vrot.slane %v689, 1
      %v692 = vsel %vm620, %v687, %v691
      %v694 = vshrl.u32 %v562, 16
      %v696 = vshll.u32 %v562, 16
      %v698 = vrot.slane %v696, 1
      %v699 = vor.u32 %v694, %v698
      %v701 = vshll.u32 %v610, 16
      %v703 = vrot.slane %v701, 1
      %v704 = vsel %vm620, %v699, %v703
      %v706 = vshrl.u32 %v563, 16
      %v708 = vshll.u32 %v563, 16
      %v710 = vrot.slane %v708, 1
      %v711 = vor.u32 %v706, %v710
      %v713 = vshll.u32 %v611, 16
      %v715 = vrot.slane %v713, 1
      %v716 = vsel %vm620, %v711, %v715
      %v718 = vshrl.u32 %v564, 16
      %v720 = vshll.u32 %v564, 16
      %v722 = vrot.slane %v720, 1
      %v723 = vor.u32 %v718, %v722
      %v725 = vshll.u32 %v612, 16
      %v727 = vrot.slane %v725, 1
      %v728 = vsel %vm620, %v723, %v727
      %v730 = vshrl.u32 %v565, 16
      %v732 = vshll.u32 %v565, 16
      %v734 = vrot.slane %v732, 1
      %v735 = vor.u32 %v730, %v734
      %v737 = vshll.u32 %v613, 16
      %v739 = vrot.slane %v737, 1
      %v740 = vsel %vm620, %v735, %v739
      %v742 = vshrl.u32 %v566, 16
      %v744 = vshll.u32 %v566, 16
      %v746 = vrot.slane %v744, 1
      %v747 = vor.u32 %v742, %v746
      %v749 = vshll.u32 %v614, 16
      %v751 = vrot.slane %v749, 1
      %v752 = vsel %vm620, %v747, %v751
      %v754 = vshrl.u32 %v567, 16
      %v756 = vshll.u32 %v567, 16
      %v758 = vrot.slane %v756, 1
      %v759 = vor.u32 %v754, %v758
      %v761 = vshll.u32 %v615, 16
      %v763 = vrot.slane %v761, 1
      %v764 = vsel %vm620, %v759, %v763
      %v766 = vshrl.u32 %v568, 16
      %v768 = vshll.u32 %v568, 16
      %v770 = vrot.slane %v768, 1
      %v771 = vor.u32 %v766, %v770
      %v773 = vshll.u32 %v616, 16
      %v775 = vrot.slane %v773, 1
      %v776 = vsel %vm620, %v771, %v775
      %v778 = vshrl.u32 %v569, 16
      %v780 = vshll.u32 %v569, 16
      %v782 = vrot.slane %v780, 1
      %v783 = vor.u32 %v778, %v782
      %v785 = vshll.u32 %v617, 16
      %v787 = vrot.slane %v785, 1
      %v788 = vsel %vm620, %v783, %v787
      %v790 = vshrl.u32 %v570, 16
      %v792 = vshll.u32 %v570, 16
      %v794 = vrot.slane %v792, 1
      %v795 = vor.u32 %v790, %v794
      %v797 = vshll.u32 %v618, 16
      %v799 = vrot.slane %v797, 1
      %v800 = vsel %vm620, %v795, %v799
      %v802 = vshrl.u32 %v571, 16
      %v804 = vshll.u32 %v571, 16
      %v806 = vrot.slane %v804, 1
      %v807 = vor.u32 %v802, %v806
      %v809 = vshll.u32 %v619, 16
      %v811 = vrot.slane %v809, 1
      %v812 = vsel %vm620, %v807, %v811
      %813 = vrot.lane.b32.xlu0 %v632, 64
      %v814 = vpop.permute.xlu0 %813
      %815 = vrot.lane.b32.xlu0 %v644, 64
      %v816 = vpop.permute.xlu0 %815
      %817 = vrot.lane.b32.xlu0 %v656, 64
      %v818 = vpop.permute.xlu0 %817
      %819 = vrot.lane.b32.xlu0 %v668, 64
      %v820 = vpop.permute.xlu0 %819
      %821 = vrot.lane.b32.xlu0 %v680, 64
      %v822 = vpop.permute.xlu0 %821
      %823 = vrot.lane.b32.xlu0 %v692, 64
      %v824 = vpop.permute.xlu0 %823
      %825 = vrot.lane.b32.xlu0 %v704, 64
      %v826 = vpop.permute.xlu0 %825
      %827 = vrot.lane.b32.xlu0 %v716, 64
      %v828 = vpop.permute.xlu0 %827
      %829 = vrot.lane.b32.xlu0 %v728, 64
      %v830 = vpop.permute.xlu0 %829
      %831 = vrot.lane.b32.xlu0 %v740, 64
      %v832 = vpop.permute.xlu0 %831
      %833 = vrot.lane.b32.xlu0 %v752, 64
      %v834 = vpop.permute.xlu0 %833
      %835 = vrot.lane.b32.xlu0 %v764, 64
      %v836 = vpop.permute.xlu0 %835
      %837 = vrot.lane.b32.xlu0 %v776, 64
      %v838 = vpop.permute.xlu0 %837
      %839 = vrot.lane.b32.xlu0 %v788, 64
      %v840 = vpop.permute.xlu0 %839
      %841 = vrot.lane.b32.xlu0 %v800, 64
      %v842 = vpop.permute.xlu0 %841
      %843 = vrot.lane.b32.xlu0 %v812, 64
      %v844 = vpop.permute.xlu0 %843
      %vm845 = vcmask 523264
      %v847 = vsel %vm845, %v556, %v814
      %v850 = vsel %vm845, %v557, %v816
      %v853 = vsel %vm845, %v558, %v818
      %v856 = vsel %vm845, %v559, %v820
      %v859 = vsel %vm845, %v560, %v822
      %v862 = vsel %vm845, %v561, %v824
      %v865 = vsel %vm845, %v562, %v826
      %v868 = vsel %vm845, %v563, %v828
      %v871 = vsel %vm845, %v564, %v830
      %v874 = vsel %vm845, %v565, %v832
      %v877 = vsel %vm845, %v566, %v834
      %v880 = vsel %vm845, %v567, %v836
      %v883 = vsel %vm845, %v568, %v838
      %v886 = vsel %vm845, %v569, %v840
      %v889 = vsel %vm845, %v570, %v842
      %v892 = vsel %vm845, %v571, %v844
      %v894 = vshrl.u32 %v604, 16
      %v896 = vshrl.u32 %v605, 16
      %v898 = vshrl.u32 %v606, 16
      %v900 = vshrl.u32 %v607, 16
      %v902 = vshrl.u32 %v608, 16
      %v904 = vshrl.u32 %v609, 16
      %v906 = vshrl.u32 %v610, 16
      %v908 = vshrl.u32 %v611, 16
      %v910 = vshrl.u32 %v612, 16
      %v912 = vshrl.u32 %v613, 16
      %v914 = vshrl.u32 %v614, 16
      %v916 = vshrl.u32 %v615, 16
      %v918 = vshrl.u32 %v616, 16
      %v920 = vshrl.u32 %v617, 16
      %v922 = vshrl.u32 %v618, 16
      %v924 = vshrl.u32 %v619, 16
      %926 = vrot.lane.b32.xlu0 %v894, 64
      %v927 = vpop.permute.xlu0 %926
      %928 = vrot.lane.b32.xlu0 %v896, 64
      %v929 = vpop.permute.xlu0 %928
      %930 = vrot.lane.b32.xlu0 %v898, 64
      %v931 = vpop.permute.xlu0 %930
      %932 = vrot.lane.b32.xlu0 %v900, 64
      %v933 = vpop.permute.xlu0 %932
      %934 = vrot.lane.b32.xlu0 %v902, 64
      %v935 = vpop.permute.xlu0 %934
      %936 = vrot.lane.b32.xlu0 %v904, 64
      %v937 = vpop.permute.xlu0 %936
      %938 = vrot.lane.b32.xlu0 %v906, 64
      %v939 = vpop.permute.xlu0 %938
      %940 = vrot.lane.b32.xlu0 %v908, 64
      %v941 = vpop.permute.xlu0 %940
      %942 = vrot.lane.b32.xlu0 %v910, 64
      %v943 = vpop.permute.xlu0 %942
      %944 = vrot.lane.b32.xlu0 %v912, 64
      %v945 = vpop.permute.xlu0 %944
      %946 = vrot.lane.b32.xlu0 %v914, 64
      %v947 = vpop.permute.xlu0 %946
      %948 = vrot.lane.b32.xlu0 %v916, 64
      %v949 = vpop.permute.xlu0 %948
      %950 = vrot.lane.b32.xlu0 %v918, 64
      %v951 = vpop.permute.xlu0 %950
      %952 = vrot.lane.b32.xlu0 %v920, 64
      %v953 = vpop.permute.xlu0 %952
      %954 = vrot.lane.b32.xlu0 %v922, 64
      %v955 = vpop.permute.xlu0 %954
      %956 = vrot.lane.b32.xlu0 %v924, 64
      %v957 = vpop.permute.xlu0 %956
      %v959 = vsel %vm845, %v604, %v927
      %v961 = vsel %vm845, %v605, %v929
      %v963 = vsel %vm845, %v606, %v931
      %v965 = vsel %vm845, %v607, %v933
      %v967 = vsel %vm845, %v608, %v935
      %v969 = vsel %vm845, %v609, %v937
      %v971 = vsel %vm845, %v610, %v939
      %v973 = vsel %vm845, %v611, %v941
      %v975 = vsel %vm845, %v612, %v943
      %v977 = vsel %vm845, %v613, %v945
      %v979 = vsel %vm845, %v614, %v947
      %v981 = vsel %vm845, %v615, %v949
      %v983 = vsel %vm845, %v616, %v951
      %v985 = vsel %vm845, %v617, %v953
      %v987 = vsel %vm845, %v618, %v955
      %v989 = vsel %vm845, %v619, %v957
      %v990 = vshrl.u32 %v847, 16
      %v992 = vshll.u32 %v847, 16
      %v994 = vrot.slane %v992, 1
      %v995 = vor.u32 %v990, %v994
      %v996 = vshll.u32 %v959, 16
      %v998 = vrot.slane %v996, 1
      %v999 = vsel %vm620, %v995, %v998
      %v1000 = vshrl.u32 %v850, 16
      %v1002 = vshll.u32 %v850, 16
      %v1004 = vrot.slane %v1002, 1
      %v1005 = vor.u32 %v1000, %v1004
      %v1006 = vshll.u32 %v961, 16
      %v1008 = vrot.slane %v1006, 1
      %v1009 = vsel %vm620, %v1005, %v1008
      %v1010 = vshrl.u32 %v853, 16
      %v1012 = vshll.u32 %v853, 16
      %v1014 = vrot.slane %v1012, 1
      %v1015 = vor.u32 %v1010, %v1014
      %v1016 = vshll.u32 %v963, 16
      %v1018 = vrot.slane %v1016, 1
      %v1019 = vsel %vm620, %v1015, %v1018
      %v1020 = vshrl.u32 %v856, 16
      %v1022 = vshll.u32 %v856, 16
      %v1024 = vrot.slane %v1022, 1
      %v1025 = vor.u32 %v1020, %v1024
      %v1026 = vshll.u32 %v965, 16
      %v1028 = vrot.slane %v1026, 1
      %v1029 = vsel %vm620, %v1025, %v1028
      %v1030 = vshrl.u32 %v859, 16
      %v1032 = vshll.u32 %v859, 16
      %v1034 = vrot.slane %v1032, 1
      %v1035 = vor.u32 %v1030, %v1034
      %v1036 = vshll.u32 %v967, 16
      %v1038 = vrot.slane %v1036, 1
      %v1039 = vsel %vm620, %v1035, %v1038
      %v1040 = vshrl.u32 %v862, 16
      %v1042 = vshll.u32 %v862, 16
      %v1044 = vrot.slane %v1042, 1
      %v1045 = vor.u32 %v1040, %v1044
      %v1046 = vshll.u32 %v969, 16
      %v1048 = vrot.slane %v1046, 1
      %v1049 = vsel %vm620, %v1045, %v1048
      %v1050 = vshrl.u32 %v865, 16
      %v1052 = vshll.u32 %v865, 16
      %v1054 = vrot.slane %v1052, 1
      %v1055 = vor.u32 %v1050, %v1054
      %v1056 = vshll.u32 %v971, 16
      %v1058 = vrot.slane %v1056, 1
      %v1059 = vsel %vm620, %v1055, %v1058
      %v1060 = vshrl.u32 %v868, 16
      %v1062 = vshll.u32 %v868, 16
      %v1064 = vrot.slane %v1062, 1
      %v1065 = vor.u32 %v1060, %v1064
      %v1066 = vshll.u32 %v973, 16
      %v1068 = vrot.slane %v1066, 1
      %v1069 = vsel %vm620, %v1065, %v1068
      %v1070 = vshrl.u32 %v871, 16
      %v1072 = vshll.u32 %v871, 16
      %v1074 = vrot.slane %v1072, 1
      %v1075 = vor.u32 %v1070, %v1074
      %v1076 = vshll.u32 %v975, 16
      %v1078 = vrot.slane %v1076, 1
      %v1079 = vsel %vm620, %v1075, %v1078
      %v1080 = vshrl.u32 %v874, 16
      %v1082 = vshll.u32 %v874, 16
      %v1084 = vrot.slane %v1082, 1
      %v1085 = vor.u32 %v1080, %v1084
      %v1086 = vshll.u32 %v977, 16
      %v1088 = vrot.slane %v1086, 1
      %v1089 = vsel %vm620, %v1085, %v1088
      %v1090 = vshrl.u32 %v877, 16
      %v1092 = vshll.u32 %v877, 16
      %v1094 = vrot.slane %v1092, 1
      %v1095 = vor.u32 %v1090, %v1094
      %v1096 = vshll.u32 %v979, 16
      %v1098 = vrot.slane %v1096, 1
      %v1099 = vsel %vm620, %v1095, %v1098
      %v1100 = vshrl.u32 %v880, 16
      %v1102 = vshll.u32 %v880, 16
      %v1104 = vrot.slane %v1102, 1
      %v1105 = vor.u32 %v1100, %v1104
      %v1106 = vshll.u32 %v981, 16
      %v1108 = vrot.slane %v1106, 1
      %v1109 = vsel %vm620, %v1105, %v1108
      %v1110 = vshrl.u32 %v883, 16
      %v1112 = vshll.u32 %v883, 16
      %v1114 = vrot.slane %v1112, 1
      %v1115 = vor.u32 %v1110, %v1114
      %v1116 = vshll.u32 %v983, 16
      %v1118 = vrot.slane %v1116, 1
      %v1119 = vsel %vm620, %v1115, %v1118
      %v1120 = vshrl.u32 %v886, 16
      %v1122 = vshll.u32 %v886, 16
      %v1124 = vrot.slane %v1122, 1
      %v1125 = vor.u32 %v1120, %v1124
      %v1126 = vshll.u32 %v985, 16
      %v1128 = vrot.slane %v1126, 1
      %v1129 = vsel %vm620, %v1125, %v1128
      %v1130 = vshrl.u32 %v889, 16
      %v1132 = vshll.u32 %v889, 16
      %v1134 = vrot.slane %v1132, 1
      %v1135 = vor.u32 %v1130, %v1134
      %v1136 = vshll.u32 %v987, 16
      %v1138 = vrot.slane %v1136, 1
      %v1139 = vsel %vm620, %v1135, %v1138
      %v1140 = vshrl.u32 %v892, 16
      %v1142 = vshll.u32 %v892, 16
      %v1144 = vrot.slane %v1142, 1
      %v1145 = vor.u32 %v1140, %v1144
      %v1146 = vshll.u32 %v989, 16
      %v1148 = vrot.slane %v1146, 1
      %v1149 = vsel %vm620, %v1145, %v1148
      %v1168 = vunpack.c.l.b16 %v485
      %v1169 = vunpack.c.l.b16 %v486
      %v1170 = vpack.c.b16 %v1169, %v1168
      %v1172 = vunpack.c.l.b16 %v487
      %v1173 = vpack.c.b16 %v1172, %v1172
      %v1175 = vshrl.u32 %v1170, 16
      %v1177 = vshll.u32 %v1170, 16
      %v1179 = vrot.slane %v1177, 1
      %v1180 = vor.u32 %v1175, %v1179
      %v1182 = vshll.u32 %v1173, 16
      %v1184 = vrot.slane %v1182, 1
      %v1185 = vsel %vm620, %v1180, %v1184
      %1186 = vrot.lane.b32.xlu0 %v1185, 64
      %v1187 = vpop.permute.xlu0 %1186
      %v1189 = vsel %vm845, %v1170, %v1187
      %v1191 = vshrl.u32 %v1173, 16
      %1193 = vrot.lane.b32.xlu0 %v1191, 64
      %v1194 = vpop.permute.xlu0 %1193
      %v1196 = vsel %vm845, %v1173, %v1194
      %v1197 = vshrl.u32 %v1189, 16
      %v1199 = vshll.u32 %v1189, 16
      %v1201 = vrot.slane %v1199, 1
      %v1202 = vor.u32 %v1197, %v1201
      %v1203 = vshll.u32 %v1196, 16
      %v1205 = vrot.slane %v1203, 1
      %v1206 = vsel %vm620, %v1202, %v1205
      %v1210 = vunpack.c.l.b16 %v488
      %v1211 = vunpack.c.l.b16 %v489
      %v1212 = vpack.c.b16 %v1211, %v1210
      %v1214 = vunpack.c.l.b16 %v490
      %v1215 = vpack.c.b16 %v1214, %v1214
      %v1217 = vshrl.u32 %v1212, 16
      %v1219 = vshll.u32 %v1212, 16
      %v1221 = vrot.slane %v1219, 1
      %v1222 = vor.u32 %v1217, %v1221
      %v1224 = vshll.u32 %v1215, 16
      %v1226 = vrot.slane %v1224, 1
      %v1227 = vsel %vm620, %v1222, %v1226
      %1228 = vrot.lane.b32.xlu0 %v1227, 64
      %v1229 = vpop.permute.xlu0 %1228
      %v1231 = vsel %vm845, %v1212, %v1229
      %v1233 = vshrl.u32 %v1215, 16
      %1235 = vrot.lane.b32.xlu0 %v1233, 64
      %v1236 = vpop.permute.xlu0 %1235
      %v1238 = vsel %vm845, %v1215, %v1236
      %v1239 = vshrl.u32 %v1231, 16
      %v1241 = vshll.u32 %v1231, 16
      %v1243 = vrot.slane %v1241, 1
      %v1244 = vor.u32 %v1239, %v1243
      %v1245 = vshll.u32 %v1238, 16
      %v1247 = vrot.slane %v1245, 1
      %v1248 = vsel %vm620, %v1244, %v1247
      %v1250 = vld [vmem:[%s3] sm:$0xf]
      %v1251 = vld [vmem:[%s3 + $0x4] sm:$0xf]
      %v1252 = vld [vmem:[%s3 + $0x8] sm:$0xf]
      %v1253 = vld [vmem:[%s3 + $0xc] sm:$0xf]
      %v1254 = vld [vmem:[%s3 + $0x10] sm:$0xf]
      %v1255 = vld [vmem:[%s3 + $0x14] sm:$0xf]
      %v1256 = vld [vmem:[%s3 + $0x18] sm:$0xf]
      %v1257 = vld [vmem:[%s3 + $0x1c] sm:$0xf]
      %v1258 = vld [vmem:[%s3 + $0x20] sm:$0xf]
      %v1259 = vld [vmem:[%s3 + $0x24] sm:$0xf]
      %v1260 = vld [vmem:[%s3 + $0x28] sm:$0xf]
      %v1261 = vld [vmem:[%s3 + $0x2c] sm:$0xf]
      %v1262 = vld [vmem:[%s3 + $0x30] sm:$0xf]
      %v1263 = vld [vmem:[%s3 + $0x34] sm:$0xf]
      %v1264 = vld [vmem:[%s3 + $0x38] sm:$0xf]
      %v1265 = vld [vmem:[%s3 + $0x3c] sm:$0xf]
      %s1266 = scalar_lea.vmem %s3, 64
      %v1267 = vld [vmem:[%s1266] sm:$0xf]
      %v1268 = vld [vmem:[%s1266 + $0x4] sm:$0xf]
      %v1269 = vld [vmem:[%s1266 + $0x8] sm:$0xf]
      %v1270 = vld [vmem:[%s1266 + $0xc] sm:$0xf]
      %v1271 = vld [vmem:[%s1266 + $0x10] sm:$0xf]
      %v1272 = vld [vmem:[%s1266 + $0x14] sm:$0xf]
      %v1273 = vld [vmem:[%s1266 + $0x18] sm:$0xf]
      %v1274 = vld [vmem:[%s1266 + $0x1c] sm:$0xf]
      %v1275 = vld [vmem:[%s1266 + $0x20] sm:$0xf]
      %v1276 = vld [vmem:[%s1266 + $0x24] sm:$0xf]
      %v1277 = vld [vmem:[%s1266 + $0x28] sm:$0xf]
      %v1278 = vld [vmem:[%s1266 + $0x2c] sm:$0xf]
      %v1279 = vld [vmem:[%s1266 + $0x30] sm:$0xf]
      %v1280 = vld [vmem:[%s1266 + $0x34] sm:$0xf]
      %v1281 = vld [vmem:[%s1266 + $0x38] sm:$0xf]
      %v1282 = vld [vmem:[%s1266 + $0x3c] sm:$0xf]
      %v1299 = vunpack.c.l.b16 %v1267
      %v1300 = vunpack.c.l.b16 %v1268
      %v1301 = vunpack.c.l.b16 %v1269
      %v1302 = vunpack.c.l.b16 %v1270
      %v1303 = vunpack.c.l.b16 %v1271
      %v1304 = vunpack.c.l.b16 %v1272
      %v1305 = vunpack.c.l.b16 %v1273
      %v1306 = vunpack.c.l.b16 %v1274
      %v1307 = vunpack.c.l.b16 %v1275
      %v1308 = vunpack.c.l.b16 %v1276
      %v1309 = vunpack.c.l.b16 %v1277
      %v1310 = vunpack.c.l.b16 %v1278
      %v1311 = vunpack.c.l.b16 %v1279
      %v1312 = vunpack.c.l.b16 %v1280
      %v1313 = vunpack.c.l.b16 %v1281
      %v1314 = vunpack.c.l.b16 %v1282
      %v1315 = vpack.c.b16 %v1300, %v1299
      %v1316 = vpack.c.b16 %v1302, %v1301
      %v1317 = vpack.c.b16 %v1304, %v1303
      %v1318 = vpack.c.b16 %v1306, %v1305
      %v1319 = vpack.c.b16 %v1308, %v1307
      %v1320 = vpack.c.b16 %v1310, %v1309
      %v1321 = vpack.c.b16 %v1312, %v1311
      %v1322 = vpack.c.b16 %v1314, %v1313
      %1331 = vmatprep.subr.bf16.mxu0 0
      %1332 = vmatpush1.bf16.msra.mxu0 %v1315
      %1333 = vmatprep.subr.bf16.mxu0 0
      %1334 = vmatpush1.bf16.msra.mxu0 %v1316
      %1335 = vmatprep.subr.bf16.mxu0 0
      %1336 = vmatpush1.bf16.msra.mxu0 %v1317
      %1337 = vmatprep.subr.bf16.mxu0 0
      %1338 = vmatpush1.bf16.msra.mxu0 %v1318
      %1339 = vmatprep.subr.bf16.mxu0 0
      %1340 = vmatpush1.bf16.msra.mxu0 %v1319
      %1341 = vmatprep.subr.bf16.mxu0 0
      %1342 = vmatpush1.bf16.msra.mxu0 %v1320
      %1343 = vmatprep.subr.bf16.mxu0 0
      %1344 = vmatpush1.bf16.msra.mxu0 %v1321
      %1345 = vmatprep.subr.bf16.mxu0 0
      %1346 = vmatpush1.bf16.msra.mxu0 %v1322
      %1347 = vmatprep.subr.bf16.mxu0 0
      %1348 = vmatpush1.bf16.msra.mxu0 0
      %1349 = vmatprep.subr.bf16.mxu0 0
      %1350 = vmatpush1.bf16.msra.mxu0 0
      %1351 = vmatprep.subr.bf16.mxu0 0
      %1352 = vmatpush1.bf16.msra.mxu0 0
      %1353 = vmatprep.subr.bf16.mxu0 0
      %1354 = vmatpush1.bf16.msra.mxu0 0
      %1355 = vmatprep.subr.bf16.mxu0 0
      %1356 = vmatpush1.bf16.msra.mxu0 0
      %1357 = vmatprep.subr.bf16.mxu0 0
      %1358 = vmatpush1.bf16.msra.mxu0 0
      %1359 = vmatprep.subr.bf16.mxu0 0
      %1360 = vmatpush1.bf16.msra.mxu0 0
      %1361 = vmatprep.subr.bf16.mxu0 0
      %1362 = vmatpush1.bf16.msra.mxu0 0
      %1363 = vmatprep.mubr.bf16.mxu0 0
      %1364 = vmatmul.mubr.bf16.gmra.mrb[0].mxu0 %v850
      %v1365 = vpop.f32.mrb[0].mxu0
      %v1366 = vadd.f32 0.0, %v1365
      %v1367 = vpop.f32.mrb[0].mxu0
      %v1368 = vpop.f32.mrb[0].mxu0
      %v1369 = vadd.f32 0.0, %v1368
      %v1370 = vpop.f32.mrb[0].mxu0
      %1371 = vmatprep.mubr.bf16.mxu0 0
      %1372 = vmatmul.mubr.bf16.gmra.mrb[0].mxu0 %v853
      %v1373 = vpop.f32.mrb[0].mxu0
      %v1374 = vadd.f32 0.0, %v1373
      %v1375 = vpop.f32.mrb[0].mxu0
      %v1376 = vpop.f32.mrb[0].mxu0
      %v1377 = vadd.f32 0.0, %v1376
      %v1378 = vpop.f32.mrb[0].mxu0
      %1379 = vmatprep.mubr.bf16.mxu0 0
      %1380 = vmatmul.mubr.bf16.gmra.mrb[0].mxu0 %v856
      %v1381 = vpop.f32.mrb[0].mxu0
      %v1382 = vadd.f32 0.0, %v1381
      %v1383 = vpop.f32.mrb[0].mxu0
      %v1384 = vpop.f32.mrb[0].mxu0
      %v1385 = vadd.f32 0.0, %v1384
      %v1386 = vpop.f32.mrb[0].mxu0
      %1387 = vmatprep.mubr.bf16.mxu0 0
      %1388 = vmatmul.mubr.bf16.gmra.mrb[0].mxu0 %v859
      %v1389 = vpop.f32.mrb[0].mxu0
      %v1390 = vadd.f32 0.0, %v1389
      %v1391 = vpop.f32.mrb[0].mxu0
      %v1392 = vpop.f32.mrb[0].mxu0
      %v1393 = vadd.f32 0.0, %v1392
      %v1394 = vpop.f32.mrb[0].mxu0
      %1395 = vmatprep.mubr.bf16.mxu0 0
      %1396 = vmatmul.mubr.bf16.gmra.mrb[0].mxu0 %v862
      %v1397 = vpop.f32.mrb[0].mxu0
      %v1398 = vadd.f32 0.0, %v1397
      %v1399 = vpop.f32.mrb[0].mxu0
      %v1400 = vpop.f32.mrb[0].mxu0
      %v1401 = vadd.f32 0.0, %v1400
      %v1402 = vpop.f32.mrb[0].mxu0
      %1403 = vmatprep.mubr.bf16.mxu0 0
      %1404 = vmatmul.mubr.bf16.gmra.mrb[0].mxu0 %v865
      %v1405 = vpop.f32.mrb[0].mxu0
      %v1406 = vadd.f32 0.0, %v1405
      %v1407 = vpop.f32.mrb[0].mxu0
      %v1408 = vpop.f32.mrb[0].mxu0
      %v1409 = vadd.f32 0.0, %v1408
      %v1410 = vpop.f32.mrb[0].mxu0
      %1411 = vmatprep.mubr.bf16.mxu0 0
      %1412 = vmatmul.mubr.bf16.gmra.mrb[0].mxu0 %v868
      %v1413 = vpop.f32.mrb[0].mxu0
      %v1414 = vadd.f32 0.0, %v1413
      %v1415 = vpop.f32.mrb[0].mxu0
      %v1416 = vpop.f32.mrb[0].mxu0
      %v1417 = vadd.f32 0.0, %v1416
      %v1418 = vpop.f32.mrb[0].mxu0
      %1419 = vmatprep.mubr.bf16.mxu0 0
      %1420 = vmatmul.mubr.bf16.gmra.mrb[0].mxu0 %v871
      %v1421 = vpop.f32.mrb[0].mxu0
      %v1422 = vadd.f32 0.0, %v1421
      %v1423 = vpop.f32.mrb[0].mxu0
      %v1424 = vpop.f32.mrb[0].mxu0
      %v1425 = vadd.f32 0.0, %v1424
      %v1426 = vpop.f32.mrb[0].mxu0
      %1427 = vmatprep.mubr.bf16.mxu0 0
      %1428 = vmatmul.mubr.bf16.gmra.mrb[0].mxu0 %v874
      %v1429 = vpop.f32.mrb[0].mxu0
      %v1430 = vadd.f32 0.0, %v1429
      %v1431 = vpop.f32.mrb[0].mxu0
      %v1432 = vpop.f32.mrb[0].mxu0
      %v1433 = vadd.f32 0.0, %v1432
      %v1434 = vpop.f32.mrb[0].mxu0
      %1435 = vmatprep.mubr.bf16.mxu0 0
      %1436 = vmatmul.mubr.bf16.gmra.mrb[0].mxu0 %v877
      %v1437 = vpop.f32.mrb[0].mxu0
      %v1438 = vadd.f32 0.0, %v1437
      %v1439 = vpop.f32.mrb[0].mxu0
      %v1440 = vpop.f32.mrb[0].mxu0
      %v1441 = vadd.f32 0.0, %v1440
      %v1442 = vpop.f32.mrb[0].mxu0
      %1443 = vmatprep.mubr.bf16.mxu0 0
      %1444 = vmatmul.mubr.bf16.gmra.mrb[0].mxu0 %v880
      %v1445 = vpop.f32.mrb[0].mxu0
      %v1446 = vadd.f32 0.0, %v1445
      %v1447 = vpop.f32.mrb[0].mxu0
      %v1448 = vpop.f32.mrb[0].mxu0
      %v1449 = vadd.f32 0.0, %v1448
      %v1450 = vpop.f32.mrb[0].mxu0
      %1451 = vmatprep.mubr.bf16.mxu0 0
      %1452 = vmatmul.mubr.bf16.gmra.mrb[0].mxu0 %v883
      %v1453 = vpop.f32.mrb[0].mxu0
      %v1454 = vadd.f32 0.0, %v1453
      %v1455 = vpop.f32.mrb[0].mxu0
      %v1456 = vpop.f32.mrb[0].mxu0
      %v1457 = vadd.f32 0.0, %v1456
      %v1458 = vpop.f32.mrb[0].mxu0
      %1459 = vmatprep.mubr.bf16.mxu0 0
      %1460 = vmatmul.mubr.bf16.gmra.mrb[0].mxu0 %v886
      %v1461 = vpop.f32.mrb[0].mxu0
      %v1462 = vadd.f32 0.0, %v1461
      %v1463 = vpop.f32.mrb[0].mxu0
      %v1464 = vpop.f32.mrb[0].mxu0
      %v1465 = vadd.f32 0.0, %v1464
      %v1466 = vpop.f32.mrb[0].mxu0
      %1467 = vmatprep.mubr.bf16.mxu0 0
      %1468 = vmatmul.mubr.bf16.gmra.mrb[0].mxu0 %v889
      %v1469 = vpop.f32.mrb[0].mxu0
      %v1470 = vadd.f32 0.0, %v1469
      %v1471 = vpop.f32.mrb[0].mxu0
      %v1472 = vpop.f32.mrb[0].mxu0
      %v1473 = vadd.f32 0.0, %v1472
      %v1474 = vpop.f32.mrb[0].mxu0
      %1475 = vmatprep.mubr.bf16.mxu0 0
      %1476 = vmatmul.mubr.bf16.gmra.mrb[0].mxu0 %v892
      %v1477 = vpop.f32.mrb[0].mxu0
      %v1478 = vadd.f32 0.0, %v1477
      %v1479 = vpop.f32.mrb[0].mxu0
      %v1480 = vpop.f32.mrb[0].mxu0
      %v1481 = vadd.f32 0.0, %v1480
      %v1482 = vpop.f32.mrb[0].mxu0
      %1483 = vmatprep.mubr.bf16.mxu0 0
      %1484 = vmatmul.mubr.bf16.gmra.mrb[0].mxu0 %v1189
      %v1485 = vpop.f32.mrb[0].mxu0
      %v1486 = vadd.f32 0.0, %v1485
      %v1487 = vpop.f32.mrb[0].mxu0
      %v1488 = vpop.f32.mrb[0].mxu0
      %v1489 = vadd.f32 0.0, %v1488
      %v1490 = vpop.f32.mrb[0].mxu0
      %1491 = vdwg.mxu0
      %v1508 = vunpack.c.l.b16 %v1250
      %v1509 = vunpack.c.l.b16 %v1251
      %v1510 = vunpack.c.l.b16 %v1252
      %v1511 = vunpack.c.l.b16 %v1253
      %v1512 = vunpack.c.l.b16 %v1254
      %v1513 = vunpack.c.l.b16 %v1255
      %v1514 = vunpack.c.l.b16 %v1256
      %v1515 = vunpack.c.l.b16 %v1257
      %v1516 = vunpack.c.l.b16 %v1258
      %v1517 = vunpack.c.l.b16 %v1259
      %v1518 = vunpack.c.l.b16 %v1260
      %v1519 = vunpack.c.l.b16 %v1261
      %v1520 = vunpack.c.l.b16 %v1262
      %v1521 = vunpack.c.l.b16 %v1263
      %v1522 = vunpack.c.l.b16 %v1264
      %v1523 = vunpack.c.l.b16 %v1265
      %v1524 = vpack.c.b16 %v1509, %v1508
      %v1525 = vpack.c.b16 %v1511, %v1510
      %v1526 = vpack.c.b16 %v1513, %v1512
      %v1527 = vpack.c.b16 %v1515, %v1514
      %v1528 = vpack.c.b16 %v1517, %v1516
      %v1529 = vpack.c.b16 %v1519, %v1518
      %v1530 = vpack.c.b16 %v1521, %v1520
      %v1531 = vpack.c.b16 %v1523, %v1522
      %1540 = vmatprep.subr.bf16.mxu0 0
      %1541 = vmatpush1.bf16.msra.mxu0 %v1524
      %1542 = vmatprep.subr.bf16.mxu0 0
      %1543 = vmatpush1.bf16.msra.mxu0 %v1525
      %1544 = vmatprep.subr.bf16.mxu0 0
      %1545 = vmatpush1.bf16.msra.mxu0 %v1526
      %1546 = vmatprep.subr.bf16.mxu0 0
      %1547 = vmatpush1.bf16.msra.mxu0 %v1527
      %1548 = vmatprep.subr.bf16.mxu0 0
      %1549 = vmatpush1.bf16.msra.mxu0 %v1528
      %1550 = vmatprep.subr.bf16.mxu0 0
      %1551 = vmatpush1.bf16.msra.mxu0 %v1529
      %1552 = vmatprep.subr.bf16.mxu0 0
      %1553 = vmatpush1.bf16.msra.mxu0 %v1530
      %1554 = vmatprep.subr.bf16.mxu0 0
      %1555 = vmatpush1.bf16.msra.mxu0 %v1531
      %1556 = vmatprep.subr.bf16.mxu0 0
      %1557 = vmatpush1.bf16.msra.mxu0 0
      %1558 = vmatprep.subr.bf16.mxu0 0
      %1559 = vmatpush1.bf16.msra.mxu0 0
      %1560 = vmatprep.subr.bf16.mxu0 0
      %1561 = vmatpush1.bf16.msra.mxu0 0
      %1562 = vmatprep.subr.bf16.mxu0 0
      %1563 = vmatpush1.bf16.msra.mxu0 0
      %1564 = vmatprep.subr.bf16.mxu0 0
      %1565 = vmatpush1.bf16.msra.mxu0 0
      %1566 = vmatprep.subr.bf16.mxu0 0
      %1567 = vmatpush1.bf16.msra.mxu0 0
      %1568 = vmatprep.subr.bf16.mxu0 0
      %1569 = vmatpush1.bf16.msra.mxu0 0
      %1570 = vmatprep.subr.bf16.mxu0 0
      %1571 = vmatpush1.bf16.msra.mxu0 0
      %1572 = vmatprep.mubr.bf16.mxu0 0
      %1573 = vmatmul.mubr.bf16.gmra.mrb[0].mxu0 %v847
      %v1574 = vpop.f32.mrb[0].mxu0
      %v1575 = vadd.f32 %v1366, %v1574
      %v1576 = vpop.f32.mrb[0].mxu0
      %v1577 = vpop.f32.mrb[0].mxu0
      %v1578 = vadd.f32 %v1369, %v1577
      %v1579 = vpop.f32.mrb[0].mxu0
      %1580 = vmatprep.mubr.bf16.mxu0 0
      %1581 = vmatmul.mubr.bf16.gmra.mrb[0].mxu0 %v850
      %v1582 = vpop.f32.mrb[0].mxu0
      %v1583 = vadd.f32 %v1374, %v1582
      %v1584 = vpop.f32.mrb[0].mxu0
      %v1585 = vpop.f32.mrb[0].mxu0
      %v1586 = vadd.f32 %v1377, %v1585
      %v1587 = vpop.f32.mrb[0].mxu0
      %1588 = vmatprep.mubr.bf16.mxu0 0
      %1589 = vmatmul.mubr.bf16.gmra.mrb[0].mxu0 %v853
      %v1590 = vpop.f32.mrb[0].mxu0
      %v1591 = vadd.f32 %v1382, %v1590
      %v1592 = vpop.f32.mrb[0].mxu0
      %v1593 = vpop.f32.mrb[0].mxu0
      %v1594 = vadd.f32 %v1385, %v1593
      %v1595 = vpop.f32.mrb[0].mxu0
      %1596 = vmatprep.mubr.bf16.mxu0 0
      %1597 = vmatmul.mubr.bf16.gmra.mrb[0].mxu0 %v856
      %v1598 = vpop.f32.mrb[0].mxu0
      %v1599 = vadd.f32 %v1390, %v1598
      %v1600 = vpop.f32.mrb[0].mxu0
      %v1601 = vpop.f32.mrb[0].mxu0
      %v1602 = vadd.f32 %v1393, %v1601
      %v1603 = vpop.f32.mrb[0].mxu0
      %1604 = vmatprep.mubr.bf16.mxu0 0
      %1605 = vmatmul.mubr.bf16.gmra.mrb[0].mxu0 %v859
      %v1606 = vpop.f32.mrb[0].mxu0
      %v1607 = vadd.f32 %v1398, %v1606
      %v1608 = vpop.f32.mrb[0].mxu0
      %v1609 = vpop.f32.mrb[0].mxu0
      %v1610 = vadd.f32 %v1401, %v1609
      %v1611 = vpop.f32.mrb[0].mxu0
      %1612 = vmatprep.mubr.bf16.mxu0 0
      %1613 = vmatmul.mubr.bf16.gmra.mrb[0].mxu0 %v862
      %v1614 = vpop.f32.mrb[0].mxu0
      %v1615 = vadd.f32 %v1406, %v1614
      %v1616 = vpop.f32.mrb[0].mxu0
      %v1617 = vpop.f32.mrb[0].mxu0
      %v1618 = vadd.f32 %v1409, %v1617
      %v1619 = vpop.f32.mrb[0].mxu0
      %1620 = vmatprep.mubr.bf16.mxu0 0
      %1621 = vmatmul.mubr.bf16.gmra.mrb[0].mxu0 %v865
      %v1622 = vpop.f32.mrb[0].mxu0
      %v1623 = vadd.f32 %v1414, %v1622
      %v1624 = vpop.f32.mrb[0].mxu0
      %v1625 = vpop.f32.mrb[0].mxu0
      %v1626 = vadd.f32 %v1417, %v1625
      %v1627 = vpop.f32.mrb[0].mxu0
      %1628 = vmatprep.mubr.bf16.mxu0 0
      %1629 = vmatmul.mubr.bf16.gmra.mrb[0].mxu0 %v868
      %v1630 = vpop.f32.mrb[0].mxu0
      %v1631 = vadd.f32 %v1422, %v1630
      %v1632 = vpop.f32.mrb[0].mxu0
      %v1633 = vpop.f32.mrb[0].mxu0
      %v1634 = vadd.f32 %v1425, %v1633
      %v1635 = vpop.f32.mrb[0].mxu0
      %1636 = vmatprep.mubr.bf16.mxu0 0
      %1637 = vmatmul.mubr.bf16.gmra.mrb[0].mxu0 %v871
      %v1638 = vpop.f32.mrb[0].mxu0
      %v1639 = vadd.f32 %v1430, %v1638
      %v1640 = vpop.f32.mrb[0].mxu0
      %v1641 = vpop.f32.mrb[0].mxu0
      %v1642 = vadd.f32 %v1433, %v1641
      %v1643 = vpop.f32.mrb[0].mxu0
      %1644 = vmatprep.mubr.bf16.mxu0 0
      %1645 = vmatmul.mubr.bf16.gmra.mrb[0].mxu0 %v874
      %v1646 = vpop.f32.mrb[0].mxu0
      %v1647 = vadd.f32 %v1438, %v1646
      %v1648 = vpop.f32.mrb[0].mxu0
      %v1649 = vpop.f32.mrb[0].mxu0
      %v1650 = vadd.f32 %v1441, %v1649
      %v1651 = vpop.f32.mrb[0].mxu0
      %1652 = vmatprep.mubr.bf16.mxu0 0
      %1653 = vmatmul.mubr.bf16.gmra.mrb[0].mxu0 %v877
      %v1654 = vpop.f32.mrb[0].mxu0
      %v1655 = vadd.f32 %v1446, %v1654
      %v1656 = vpop.f32.mrb[0].mxu0
      %v1657 = vpop.f32.mrb[0].mxu0
      %v1658 = vadd.f32 %v1449, %v1657
      %v1659 = vpop.f32.mrb[0].mxu0
      %1660 = vmatprep.mubr.bf16.mxu0 0
      %1661 = vmatmul.mubr.bf16.gmra.mrb[0].mxu0 %v880
      %v1662 = vpop.f32.mrb[0].mxu0
      %v1663 = vadd.f32 %v1454, %v1662
      %v1664 = vpop.f32.mrb[0].mxu0
      %v1665 = vpop.f32.mrb[0].mxu0
      %v1666 = vadd.f32 %v1457, %v1665
      %v1667 = vpop.f32.mrb[0].mxu0
      %1668 = vmatprep.mubr.bf16.mxu0 0
      %1669 = vmatmul.mubr.bf16.gmra.mrb[0].mxu0 %v883
      %v1670 = vpop.f32.mrb[0].mxu0
      %v1671 = vadd.f32 %v1462, %v1670
      %v1672 = vpop.f32.mrb[0].mxu0
      %v1673 = vpop.f32.mrb[0].mxu0
      %v1674 = vadd.f32 %v1465, %v1673
      %v1675 = vpop.f32.mrb[0].mxu0
      %1676 = vmatprep.mubr.bf16.mxu0 0
      %1677 = vmatmul.mubr.bf16.gmra.mrb[0].mxu0 %v886
      %v1678 = vpop.f32.mrb[0].mxu0
      %v1679 = vadd.f32 %v1470, %v1678
      %v1680 = vpop.f32.mrb[0].mxu0
      %v1681 = vpop.f32.mrb[0].mxu0
      %v1682 = vadd.f32 %v1473, %v1681
      %v1683 = vpop.f32.mrb[0].mxu0
      %1684 = vmatprep.mubr.bf16.mxu0 0
      %1685 = vmatmul.mubr.bf16.gmra.mrb[0].mxu0 %v889
      %v1686 = vpop.f32.mrb[0].mxu0
      %v1687 = vadd.f32 %v1478, %v1686
      %v1688 = vpop.f32.mrb[0].mxu0
      %v1689 = vpop.f32.mrb[0].mxu0
      %v1690 = vadd.f32 %v1481, %v1689
      %v1691 = vpop.f32.mrb[0].mxu0
      %1692 = vmatprep.mubr.bf16.mxu0 0
      %1693 = vmatmul.mubr.bf16.gmra.mrb[0].mxu0 %v892
      %v1694 = vpop.f32.mrb[0].mxu0
      %v1695 = vadd.f32 %v1486, %v1694
      %v1696 = vpop.f32.mrb[0].mxu0
      %v1697 = vpop.f32.mrb[0].mxu0
      %v1698 = vadd.f32 %v1489, %v1697
      %v1699 = vpop.f32.mrb[0].mxu0
      %1700 = vdwg.mxu0
      %v1702 = vlaneseq
      %v1703 = vshrl.u32 %v1702, 7
      %v1704 = vsub.s32 0, %v1703
      %v1705 = vrot.slane %v491, %v1704
      %v1707 = vadd.f32 %v1575, %v1705
      %v1708 = vadd.f32 %v1578, %v1705
      %v1709 = vadd.f32 %v1583, %v1705
      %v1710 = vadd.f32 %v1586, %v1705
      %v1711 = vadd.f32 %v1591, %v1705
      %v1712 = vadd.f32 %v1594, %v1705
      %v1713 = vadd.f32 %v1599, %v1705
      %v1714 = vadd.f32 %v1602, %v1705
      %v1715 = vadd.f32 %v1607, %v1705
      %v1716 = vadd.f32 %v1610, %v1705
      %v1717 = vadd.f32 %v1615, %v1705
      %v1718 = vadd.f32 %v1618, %v1705
      %v1719 = vadd.f32 %v1623, %v1705
      %v1720 = vadd.f32 %v1626, %v1705
      %v1721 = vadd.f32 %v1631, %v1705
      %v1722 = vadd.f32 %v1634, %v1705
      %v1723 = vadd.f32 %v1639, %v1705
      %v1724 = vadd.f32 %v1642, %v1705
      %v1725 = vadd.f32 %v1647, %v1705
      %v1726 = vadd.f32 %v1650, %v1705
      %v1727 = vadd.f32 %v1655, %v1705
      %v1728 = vadd.f32 %v1658, %v1705
      %v1729 = vadd.f32 %v1663, %v1705
      %v1730 = vadd.f32 %v1666, %v1705
      %v1731 = vadd.f32 %v1671, %v1705
      %v1732 = vadd.f32 %v1674, %v1705
      %v1733 = vadd.f32 %v1679, %v1705
      %v1734 = vadd.f32 %v1682, %v1705
      %v1735 = vadd.f32 %v1687, %v1705
      %v1736 = vadd.f32 %v1690, %v1705
      %v1737 = vadd.f32 %v1695, %v1705
      %v1738 = vadd.f32 %v1698, %v1705
      %v1739 = vadd.f32 %v1707, %v1708
      %v1740 = vadd.f32 %v1739, %v1709
      %v1741 = vadd.f32 %v1740, %v1710
      %v1742 = vadd.f32 %v1741, %v1711
      %v1743 = vadd.f32 %v1742, %v1712
      %v1744 = vadd.f32 %v1743, %v1713
      %v1745 = vadd.f32 %v1744, %v1714
      %v1746 = vadd.f32 %v1745, %v1715
      %v1747 = vadd.f32 %v1746, %v1716
      %v1748 = vadd.f32 %v1747, %v1717
      %v1749 = vadd.f32 %v1748, %v1718
      %v1750 = vadd.f32 %v1749, %v1719
      %v1751 = vadd.f32 %v1750, %v1720
      %v1752 = vadd.f32 %v1751, %v1721
      %v1753 = vadd.f32 %v1752, %v1722
      %v1754 = vadd.f32 %v1753, %v1723
      %v1755 = vadd.f32 %v1754, %v1724
      %v1756 = vadd.f32 %v1755, %v1725
      %v1757 = vadd.f32 %v1756, %v1726
      %v1758 = vadd.f32 %v1757, %v1727
      %v1759 = vadd.f32 %v1758, %v1728
      %v1760 = vadd.f32 %v1759, %v1729
      %v1761 = vadd.f32 %v1760, %v1730
      %v1762 = vadd.f32 %v1761, %v1731
      %v1763 = vadd.f32 %v1762, %v1732
      %v1764 = vadd.f32 %v1763, %v1733
      %v1765 = vadd.f32 %v1764, %v1734
      %v1766 = vadd.f32 %v1765, %v1735
      %v1767 = vadd.f32 %v1766, %v1736
      %v1768 = vadd.f32 %v1767, %v1737
      %v1769 = vadd.f32 %v1768, %v1738
      %v1770 = vrot.slane %v1769, 4
      %v1771 = vadd.f32 %v1769, %v1770
      %v1772 = vrot.slane %v1771, 2
      %v1773 = vadd.f32 %v1771, %v1772
      %v1774 = vrot.slane %v1773, 1
      %v1775 = vadd.f32 %v1773, %v1774
      %v1776 = vadd.f32 %v1775, 0.0
      %v1777 = vmul.f32 %v1707, %v1707
      %v1778 = vmul.f32 %v1708, %v1708
      %v1779 = vmul.f32 %v1709, %v1709
      %v1780 = vmul.f32 %v1710, %v1710
      %v1781 = vmul.f32 %v1711, %v1711
      %v1782 = vmul.f32 %v1712, %v1712
      %v1783 = vmul.f32 %v1713, %v1713
      %v1784 = vmul.f32 %v1714, %v1714
      %v1785 = vmul.f32 %v1715, %v1715
      %v1786 = vmul.f32 %v1716, %v1716
      %v1787 = vmul.f32 %v1717, %v1717
      %v1788 = vmul.f32 %v1718, %v1718
      %v1789 = vmul.f32 %v1719, %v1719
      %v1790 = vmul.f32 %v1720, %v1720
      %v1791 = vmul.f32 %v1721, %v1721
      %v1792 = vmul.f32 %v1722, %v1722
      %v1793 = vmul.f32 %v1723, %v1723
      %v1794 = vmul.f32 %v1724, %v1724
      %v1795 = vmul.f32 %v1725, %v1725
      %v1796 = vmul.f32 %v1726, %v1726
      %v1797 = vmul.f32 %v1727, %v1727
      %v1798 = vmul.f32 %v1728, %v1728
      %v1799 = vmul.f32 %v1729, %v1729
      %v1800 = vmul.f32 %v1730, %v1730
      %v1801 = vmul.f32 %v1731, %v1731
      %v1802 = vmul.f32 %v1732, %v1732
      %v1803 = vmul.f32 %v1733, %v1733
      %v1804 = vmul.f32 %v1734, %v1734
      %v1805 = vmul.f32 %v1735, %v1735
      %v1806 = vmul.f32 %v1736, %v1736
      %v1807 = vmul.f32 %v1737, %v1737
      %v1808 = vmul.f32 %v1738, %v1738
      %v1809 = vadd.f32 %v1777, %v1778
      %v1810 = vadd.f32 %v1809, %v1779
      %v1811 = vadd.f32 %v1810, %v1780
      %v1812 = vadd.f32 %v1811, %v1781
      %v1813 = vadd.f32 %v1812, %v1782
      %v1814 = vadd.f32 %v1813, %v1783
      %v1815 = vadd.f32 %v1814, %v1784
      %v1816 = vadd.f32 %v1815, %v1785
      %v1817 = vadd.f32 %v1816, %v1786
      %v1818 = vadd.f32 %v1817, %v1787
      %v1819 = vadd.f32 %v1818, %v1788
      %v1820 = vadd.f32 %v1819, %v1789
      %v1821 = vadd.f32 %v1820, %v1790
      %v1822 = vadd.f32 %v1821, %v1791
      %v1823 = vadd.f32 %v1822, %v1792
      %v1824 = vadd.f32 %v1823, %v1793
      %v1825 = vadd.f32 %v1824, %v1794
      %v1826 = vadd.f32 %v1825, %v1795
      %v1827 = vadd.f32 %v1826, %v1796
      %v1828 = vadd.f32 %v1827, %v1797
      %v1829 = vadd.f32 %v1828, %v1798
      %v1830 = vadd.f32 %v1829, %v1799
      %v1831 = vadd.f32 %v1830, %v1800
      %v1832 = vadd.f32 %v1831, %v1801
      %v1833 = vadd.f32 %v1832, %v1802
      %v1834 = vadd.f32 %v1833, %v1803
      %v1835 = vadd.f32 %v1834, %v1804
      %v1836 = vadd.f32 %v1835, %v1805
      %v1837 = vadd.f32 %v1836, %v1806
      %v1838 = vadd.f32 %v1837, %v1807
      %v1839 = vadd.f32 %v1838, %v1808
      %v1840 = vrot.slane %v1839, 4
      %v1841 = vadd.f32 %v1839, %v1840
      %v1842 = vrot.slane %v1841, 2
      %v1843 = vadd.f32 %v1841, %v1842
      %v1844 = vrot.slane %v1843, 1
      %v1845 = vadd.f32 %v1843, %v1844
      %v1846 = vadd.f32 %v1845, 0.0
      %v1847 = vpack.c.bf16 %v1708, %v1707
      %v1848 = vpack.c.bf16 %v1710, %v1709
      %v1849 = vpack.c.bf16 %v1712, %v1711
      %v1850 = vpack.c.bf16 %v1714, %v1713
      %v1851 = vpack.c.bf16 %v1716, %v1715
      %v1852 = vpack.c.bf16 %v1718, %v1717
      %v1853 = vpack.c.bf16 %v1720, %v1719
      %v1854 = vpack.c.bf16 %v1722, %v1721
      %v1855 = vpack.c.bf16 %v1724, %v1723
      %v1856 = vpack.c.bf16 %v1726, %v1725
      %v1857 = vpack.c.bf16 %v1728, %v1727
      %v1858 = vpack.c.bf16 %v1730, %v1729
      %v1859 = vpack.c.bf16 %v1732, %v1731
      %v1860 = vpack.c.bf16 %v1734, %v1733
      %v1861 = vpack.c.bf16 %v1736, %v1735
      %v1862 = vpack.c.bf16 %v1738, %v1737
      %s1863 = scalar_lea.vmem %s3, 128
      %v1864 = vld [vmem:[%s1863] sm:$0xf]
      %v1865 = vld [vmem:[%s1863 + $0x4] sm:$0xf]
      %v1866 = vld [vmem:[%s1863 + $0x8] sm:$0xf]
      %v1867 = vld [vmem:[%s1863 + $0xc] sm:$0xf]
      %v1868 = vld [vmem:[%s1863 + $0x10] sm:$0xf]
      %v1869 = vld [vmem:[%s1863 + $0x14] sm:$0xf]
      %v1870 = vld [vmem:[%s1863 + $0x18] sm:$0xf]
      %v1871 = vld [vmem:[%s1863 + $0x1c] sm:$0xf]
      %v1872 = vld [vmem:[%s1863 + $0x20] sm:$0xf]
      %v1873 = vld [vmem:[%s1863 + $0x24] sm:$0xf]
      %v1874 = vld [vmem:[%s1863 + $0x28] sm:$0xf]
      %v1875 = vld [vmem:[%s1863 + $0x2c] sm:$0xf]
      %v1876 = vld [vmem:[%s1863 + $0x30] sm:$0xf]
      %v1877 = vld [vmem:[%s1863 + $0x34] sm:$0xf]
      %v1878 = vld [vmem:[%s1863 + $0x38] sm:$0xf]
      %v1879 = vld [vmem:[%s1863 + $0x3c] sm:$0xf]
      %s1880 = scalar_lea.vmem %s3, 192
      %v1881 = vld [vmem:[%s1880] sm:$0xf]
      %v1882 = vld [vmem:[%s1880 + $0x4] sm:$0xf]
      %v1883 = vld [vmem:[%s1880 + $0x8] sm:$0xf]
      %v1884 = vld [vmem:[%s1880 + $0xc] sm:$0xf]
      %v1885 = vld [vmem:[%s1880 + $0x10] sm:$0xf]
      %v1886 = vld [vmem:[%s1880 + $0x14] sm:$0xf]
      %v1887 = vld [vmem:[%s1880 + $0x18] sm:$0xf]
      %v1888 = vld [vmem:[%s1880 + $0x1c] sm:$0xf]
      %v1889 = vld [vmem:[%s1880 + $0x20] sm:$0xf]
      %v1890 = vld [vmem:[%s1880 + $0x24] sm:$0xf]
      %v1891 = vld [vmem:[%s1880 + $0x28] sm:$0xf]
      %v1892 = vld [vmem:[%s1880 + $0x2c] sm:$0xf]
      %v1893 = vld [vmem:[%s1880 + $0x30] sm:$0xf]
      %v1894 = vld [vmem:[%s1880 + $0x34] sm:$0xf]
      %v1895 = vld [vmem:[%s1880 + $0x38] sm:$0xf]
      %v1896 = vld [vmem:[%s1880 + $0x3c] sm:$0xf]
      %v1913 = vunpack.c.l.b16 %v1881
      %v1914 = vunpack.c.l.b16 %v1882
      %v1915 = vunpack.c.l.b16 %v1883
      %v1916 = vunpack.c.l.b16 %v1884
      %v1917 = vunpack.c.l.b16 %v1885
      %v1918 = vunpack.c.l.b16 %v1886
      %v1919 = vunpack.c.l.b16 %v1887
      %v1920 = vunpack.c.l.b16 %v1888
      %v1921 = vunpack.c.l.b16 %v1889
      %v1922 = vunpack.c.l.b16 %v1890
      %v1923 = vunpack.c.l.b16 %v1891
      %v1924 = vunpack.c.l.b16 %v1892
      %v1925 = vunpack.c.l.b16 %v1893
      %v1926 = vunpack.c.l.b16 %v1894
      %v1927 = vunpack.c.l.b16 %v1895
      %v1928 = vunpack.c.l.b16 %v1896
      %v1929 = vpack.c.b16 %v1914, %v1913
      %v1930 = vpack.c.b16 %v1916, %v1915
      %v1931 = vpack.c.b16 %v1918, %v1917
      %v1932 = vpack.c.b16 %v1920, %v1919
      %v1933 = vpack.c.b16 %v1922, %v1921
      %v1934 = vpack.c.b16 %v1924, %v1923
      %v1935 = vpack.c.b16 %v1926, %v1925
      %v1936 = vpack.c.b16 %v1928, %v1927
      %1945 = vmatprep.subr.bf16.mxu0 0
      %1946 = vmatpush1.bf16.msra.mxu0 %v1929
      %1947 = vmatprep.subr.bf16.mxu0 0
      %1948 = vmatpush1.bf16.msra.mxu0 %v1930
      %1949 = vmatprep.subr.bf16.mxu0 0
      %1950 = vmatpush1.bf16.msra.mxu0 %v1931
      %1951 = vmatprep.subr.bf16.mxu0 0
      %1952 = vmatpush1.bf16.msra.mxu0 %v1932
      %1953 = vmatprep.subr.bf16.mxu0 0
      %1954 = vmatpush1.bf16.msra.mxu0 %v1933
      %1955 = vmatprep.subr.bf16.mxu0 0
      %1956 = vmatpush1.bf16.msra.mxu0 %v1934
      %1957 = vmatprep.subr.bf16.mxu0 0
      %1958 = vmatpush1.bf16.msra.mxu0 %v1935
      %1959 = vmatprep.subr.bf16.mxu0 0
      %1960 = vmatpush1.bf16.msra.mxu0 %v1936
      %1961 = vmatprep.subr.bf16.mxu0 0
      %1962 = vmatpush1.bf16.msra.mxu0 0
      %1963 = vmatprep.subr.bf16.mxu0 0
      %1964 = vmatpush1.bf16.msra.mxu0 0
      %1965 = vmatprep.subr.bf16.mxu0 0
      %1966 = vmatpush1.bf16.msra.mxu0 0
      %1967 = vmatprep.subr.bf16.mxu0 0
      %1968 = vmatpush1.bf16.msra.mxu0 0
      %1969 = vmatprep.subr.bf16.mxu0 0
      %1970 = vmatpush1.bf16.msra.mxu0 0
      %1971 = vmatprep.subr.bf16.mxu0 0
      %1972 = vmatpush1.bf16.msra.mxu0 0
      %1973 = vmatprep.subr.bf16.mxu0 0
      %1974 = vmatpush1.bf16.msra.mxu0 0
      %1975 = vmatprep.subr.bf16.mxu0 0
      %1976 = vmatpush1.bf16.msra.mxu0 0
      %1977 = vmatprep.mubr.bf16.mxu0 0
      %1978 = vmatmul.mubr.bf16.gmra.mrb[0].mxu0 %v1009
      %v1979 = vpop.f32.mrb[0].mxu0
      %v1980 = vadd.f32 0.0, %v1979
      %v1981 = vpop.f32.mrb[0].mxu0
      %v1982 = vpop.f32.mrb[0].mxu0
      %v1983 = vadd.f32 0.0, %v1982
      %v1984 = vpop.f32.mrb[0].mxu0
      %1985 = vmatprep.mubr.bf16.mxu0 0
      %1986 = vmatmul.mubr.bf16.gmra.mrb[0].mxu0 %v1019
      %v1987 = vpop.f32.mrb[0].mxu0
      %v1988 = vadd.f32 0.0, %v1987
      %v1989 = vpop.f32.mrb[0].mxu0
      %v1990 = vpop.f32.mrb[0].mxu0
      %v1991 = vadd.f32 0.0, %v1990
      %v1992 = vpop.f32.mrb[0].mxu0
      %1993 = vmatprep.mubr.bf16.mxu0 0
      %1994 = vmatmul.mubr.bf16.gmra.mrb[0].mxu0 %v1029
      %v1995 = vpop.f32.mrb[0].mxu0
      %v1996 = vadd.f32 0.0, %v1995
      %v1997 = vpop.f32.mrb[0].mxu0
      %v1998 = vpop.f32.mrb[0].mxu0
      %v1999 = vadd.f32 0.0, %v1998
      %v2000 = vpop.f32.mrb[0].mxu0
      %2001 = vmatprep.mubr.bf16.mxu0 0
      %2002 = vmatmul.mubr.bf16.gmra.mrb[0].mxu0 %v1039
      %v2003 = vpop.f32.mrb[0].mxu0
      %v2004 = vadd.f32 0.0, %v2003
      %v2005 = vpop.f32.mrb[0].mxu0
      %v2006 = vpop.f32.mrb[0].mxu0
      %v2007 = vadd.f32 0.0, %v2006
      %v2008 = vpop.f32.mrb[0].mxu0
      %2009 = vmatprep.mubr.bf16.mxu0 0
      %2010 = vmatmul.mubr.bf16.gmra.mrb[0].mxu0 %v1049
      %v2011 = vpop.f32.mrb[0].mxu0
      %v2012 = vadd.f32 0.0, %v2011
      %v2013 = vpop.f32.mrb[0].mxu0
      %v2014 = vpop.f32.mrb[0].mxu0
      %v2015 = vadd.f32 0.0, %v2014
      %v2016 = vpop.f32.mrb[0].mxu0
      %2017 = vmatprep.mubr.bf16.mxu0 0
      %2018 = vmatmul.mubr.bf16.gmra.mrb[0].mxu0 %v1059
      %v2019 = vpop.f32.mrb[0].mxu0
      %v2020 = vadd.f32 0.0, %v2019
      %v2021 = vpop.f32.mrb[0].mxu0
      %v2022 = vpop.f32.mrb[0].mxu0
      %v2023 = vadd.f32 0.0, %v2022
      %v2024 = vpop.f32.mrb[0].mxu0
      %2025 = vmatprep.mubr.bf16.mxu0 0
      %2026 = vmatmul.mubr.bf16.gmra.mrb[0].mxu0 %v1069
      %v2027 = vpop.f32.mrb[0].mxu0
      %v2028 = vadd.f32 0.0, %v2027
      %v2029 = vpop.f32.mrb[0].mxu0
      %v2030 = vpop.f32.mrb[0].mxu0
      %v2031 = vadd.f32 0.0, %v2030
      %v2032 = vpop.f32.mrb[0].mxu0
      %2033 = vmatprep.mubr.bf16.mxu0 0
      %2034 = vmatmul.mubr.bf16.gmra.mrb[0].mxu0 %v1079
      %v2035 = vpop.f32.mrb[0].mxu0
      %v2036 = vadd.f32 0.0, %v2035
      %v2037 = vpop.f32.mrb[0].mxu0
      %v2038 = vpop.f32.mrb[0].mxu0
      %v2039 = vadd.f32 0.0, %v2038
      %v2040 = vpop.f32.mrb[0].mxu0
      %2041 = vmatprep.mubr.bf16.mxu0 0
      %2042 = vmatmul.mubr.bf16.gmra.mrb[0].mxu0 %v1089
      %v2043 = vpop.f32.mrb[0].mxu0
      %v2044 = vadd.f32 0.0, %v2043
      %v2045 = vpop.f32.mrb[0].mxu0
      %v2046 = vpop.f32.mrb[0].mxu0
      %v2047 = vadd.f32 0.0, %v2046
      %v2048 = vpop.f32.mrb[0].mxu0
      %2049 = vmatprep.mubr.bf16.mxu0 0
      %2050 = vmatmul.mubr.bf16.gmra.mrb[0].mxu0 %v1099
      %v2051 = vpop.f32.mrb[0].mxu0
      %v2052 = vadd.f32 0.0, %v2051
      %v2053 = vpop.f32.mrb[0].mxu0
      %v2054 = vpop.f32.mrb[0].mxu0
      %v2055 = vadd.f32 0.0, %v2054
      %v2056 = vpop.f32.mrb[0].mxu0
      %2057 = vmatprep.mubr.bf16.mxu0 0
      %2058 = vmatmul.mubr.bf16.gmra.mrb[0].mxu0 %v1109
      %v2059 = vpop.f32.mrb[0].mxu0
      %v2060 = vadd.f32 0.0, %v2059
      %v2061 = vpop.f32.mrb[0].mxu0
      %v2062 = vpop.f32.mrb[0].mxu0
      %v2063 = vadd.f32 0.0, %v2062
      %v2064 = vpop.f32.mrb[0].mxu0
      %2065 = vmatprep.mubr.bf16.mxu0 0
      %2066 = vmatmul.mubr.bf16.gmra.mrb[0].mxu0 %v1119
      %v2067 = vpop.f32.mrb[0].mxu0
      %v2068 = vadd.f32 0.0, %v2067
      %v2069 = vpop.f32.mrb[0].mxu0
      %v2070 = vpop.f32.mrb[0].mxu0
      %v2071 = vadd.f32 0.0, %v2070
      %v2072 = vpop.f32.mrb[0].mxu0
      %2073 = vmatprep.mubr.bf16.mxu0 0
      %2074 = vmatmul.mubr.bf16.gmra.mrb[0].mxu0 %v1129
      %v2075 = vpop.f32.mrb[0].mxu0
      %v2076 = vadd.f32 0.0, %v2075
      %v2077 = vpop.f32.mrb[0].mxu0
      %v2078 = vpop.f32.mrb[0].mxu0
      %v2079 = vadd.f32 0.0, %v2078
      %v2080 = vpop.f32.mrb[0].mxu0
      %2081 = vmatprep.mubr.bf16.mxu0 0
      %2082 = vmatmul.mubr.bf16.gmra.mrb[0].mxu0 %v1139
      %v2083 = vpop.f32.mrb[0].mxu0
      %v2084 = vadd.f32 0.0, %v2083
      %v2085 = vpop.f32.mrb[0].mxu0
      %v2086 = vpop.f32.mrb[0].mxu0
      %v2087 = vadd.f32 0.0, %v2086
      %v2088 = vpop.f32.mrb[0].mxu0
      %2089 = vmatprep.mubr.bf16.mxu0 0
      %2090 = vmatmul.mubr.bf16.gmra.mrb[0].mxu0 %v1149
      %v2091 = vpop.f32.mrb[0].mxu0
      %v2092 = vadd.f32 0.0, %v2091
      %v2093 = vpop.f32.mrb[0].mxu0
      %v2094 = vpop.f32.mrb[0].mxu0
      %v2095 = vadd.f32 0.0, %v2094
      %v2096 = vpop.f32.mrb[0].mxu0
      %2097 = vmatprep.mubr.bf16.mxu0 0
      %2098 = vmatmul.mubr.bf16.gmra.mrb[0].mxu0 %v1206
      %v2099 = vpop.f32.mrb[0].mxu0
      %v2100 = vadd.f32 0.0, %v2099
      %v2101 = vpop.f32.mrb[0].mxu0
      %v2102 = vpop.f32.mrb[0].mxu0
      %v2103 = vadd.f32 0.0, %v2102
      %v2104 = vpop.f32.mrb[0].mxu0
      %2105 = vdwg.mxu0
      %v2122 = vunpack.c.l.b16 %v1864
      %v2123 = vunpack.c.l.b16 %v1865
      %v2124 = vunpack.c.l.b16 %v1866
      %v2125 = vunpack.c.l.b16 %v1867
      %v2126 = vunpack.c.l.b16 %v1868
      %v2127 = vunpack.c.l.b16 %v1869
      %v2128 = vunpack.c.l.b16 %v1870
      %v2129 = vunpack.c.l.b16 %v1871
      %v2130 = vunpack.c.l.b16 %v1872
      %v2131 = vunpack.c.l.b16 %v1873
      %v2132 = vunpack.c.l.b16 %v1874
      %v2133 = vunpack.c.l.b16 %v1875
      %v2134 = vunpack.c.l.b16 %v1876
      %v2135 = vunpack.c.l.b16 %v1877
      %v2136 = vunpack.c.l.b16 %v1878
      %v2137 = vunpack.c.l.b16 %v1879
      %v2138 = vpack.c.b16 %v2123, %v2122
      %v2139 = vpack.c.b16 %v2125, %v2124
      %v2140 = vpack.c.b16 %v2127, %v2126
      %v2141 = vpack.c.b16 %v2129, %v2128
      %v2142 = vpack.c.b16 %v2131, %v2130
      %v2143 = vpack.c.b16 %v2133, %v2132
      %v2144 = vpack.c.b16 %v2135, %v2134
      %v2145 = vpack.c.b16 %v2137, %v2136
      %2154 = vmatprep.subr.bf16.mxu0 0
      %2155 = vmatpush1.bf16.msra.mxu0 %v2138
      %2156 = vmatprep.subr.bf16.mxu0 0
      %2157 = vmatpush1.bf16.msra.mxu0 %v2139
      %2158 = vmatprep.subr.bf16.mxu0 0
      %2159 = vmatpush1.bf16.msra.mxu0 %v2140
      %2160 = vmatprep.subr.bf16.mxu0 0
      %2161 = vmatpush1.bf16.msra.mxu0 %v2141
      %2162 = vmatprep.subr.bf16.mxu0 0
      %2163 = vmatpush1.bf16.msra.mxu0 %v2142
      %2164 = vmatprep.subr.bf16.mxu0 0
      %2165 = vmatpush1.bf16.msra.mxu0 %v2143
      %2166 = vmatprep.subr.bf16.mxu0 0
      %2167 = vmatpush1.bf16.msra.mxu0 %v2144
      %2168 = vmatprep.subr.bf16.mxu0 0
      %2169 = vmatpush1.bf16.msra.mxu0 %v2145
      %2170 = vmatprep.subr.bf16.mxu0 0
      %2171 = vmatpush1.bf16.msra.mxu0 0
      %2172 = vmatprep.subr.bf16.mxu0 0
      %2173 = vmatpush1.bf16.msra.mxu0 0
      %2174 = vmatprep.subr.bf16.mxu0 0
      %2175 = vmatpush1.bf16.msra.mxu0 0
      %2176 = vmatprep.subr.bf16.mxu0 0
      %2177 = vmatpush1.bf16.msra.mxu0 0
      %2178 = vmatprep.subr.bf16.mxu0 0
      %2179 = vmatpush1.bf16.msra.mxu0 0
      %2180 = vmatprep.subr.bf16.mxu0 0
      %2181 = vmatpush1.bf16.msra.mxu0 0
      %2182 = vmatprep.subr.bf16.mxu0 0
      %2183 = vmatpush1.bf16.msra.mxu0 0
      %2184 = vmatprep.subr.bf16.mxu0 0
      %2185 = vmatpush1.bf16.msra.mxu0 0
      %2186 = vmatprep.mubr.bf16.mxu0 0
      %2187 = vmatmul.mubr.bf16.gmra.mrb[0].mxu0 %v999
      %v2188 = vpop.f32.mrb[0].mxu0
      %v2189 = vadd.f32 %v1980, %v2188
      %v2190 = vpop.f32.mrb[0].mxu0
      %v2191 = vpop.f32.mrb[0].mxu0
      %v2192 = vadd.f32 %v1983, %v2191
      %v2193 = vpop.f32.mrb[0].mxu0
      %2194 = vmatprep.mubr.bf16.mxu0 0
      %2195 = vmatmul.mubr.bf16.gmra.mrb[0].mxu0 %v1009
      %v2196 = vpop.f32.mrb[0].mxu0
      %v2197 = vadd.f32 %v1988, %v2196
      %v2198 = vpop.f32.mrb[0].mxu0
      %v2199 = vpop.f32.mrb[0].mxu0
      %v2200 = vadd.f32 %v1991, %v2199
      %v2201 = vpop.f32.mrb[0].mxu0
      %2202 = vmatprep.mubr.bf16.mxu0 0
      %2203 = vmatmul.mubr.bf16.gmra.mrb[0].mxu0 %v1019
      %v2204 = vpop.f32.mrb[0].mxu0
      %v2205 = vadd.f32 %v1996, %v2204
      %v2206 = vpop.f32.mrb[0].mxu0
      %v2207 = vpop.f32.mrb[0].mxu0
      %v2208 = vadd.f32 %v1999, %v2207
      %v2209 = vpop.f32.mrb[0].mxu0
      %2210 = vmatprep.mubr.bf16.mxu0 0
      %2211 = vmatmul.mubr.bf16.gmra.mrb[0].mxu0 %v1029
      %v2212 = vpop.f32.mrb[0].mxu0
      %v2213 = vadd.f32 %v2004, %v2212
      %v2214 = vpop.f32.mrb[0].mxu0
      %v2215 = vpop.f32.mrb[0].mxu0
      %v2216 = vadd.f32 %v2007, %v2215
      %v2217 = vpop.f32.mrb[0].mxu0
      %2218 = vmatprep.mubr.bf16.mxu0 0
      %2219 = vmatmul.mubr.bf16.gmra.mrb[0].mxu0 %v1039
      %v2220 = vpop.f32.mrb[0].mxu0
      %v2221 = vadd.f32 %v2012, %v2220
      %v2222 = vpop.f32.mrb[0].mxu0
      %v2223 = vpop.f32.mrb[0].mxu0
      %v2224 = vadd.f32 %v2015, %v2223
      %v2225 = vpop.f32.mrb[0].mxu0
      %2226 = vmatprep.mubr.bf16.mxu0 0
      %2227 = vmatmul.mubr.bf16.gmra.mrb[0].mxu0 %v1049
      %v2228 = vpop.f32.mrb[0].mxu0
      %v2229 = vadd.f32 %v2020, %v2228
      %v2230 = vpop.f32.mrb[0].mxu0
      %v2231 = vpop.f32.mrb[0].mxu0
      %v2232 = vadd.f32 %v2023, %v2231
      %v2233 = vpop.f32.mrb[0].mxu0
      %2234 = vmatprep.mubr.bf16.mxu0 0
      %2235 = vmatmul.mubr.bf16.gmra.mrb[0].mxu0 %v1059
      %v2236 = vpop.f32.mrb[0].mxu0
      %v2237 = vadd.f32 %v2028, %v2236
      %v2238 = vpop.f32.mrb[0].mxu0
      %v2239 = vpop.f32.mrb[0].mxu0
      %v2240 = vadd.f32 %v2031, %v2239
      %v2241 = vpop.f32.mrb[0].mxu0
      %2242 = vmatprep.mubr.bf16.mxu0 0
      %2243 = vmatmul.mubr.bf16.gmra.mrb[0].mxu0 %v1069
      %v2244 = vpop.f32.mrb[0].mxu0
      %v2245 = vadd.f32 %v2036, %v2244
      %v2246 = vpop.f32.mrb[0].mxu0
      %v2247 = vpop.f32.mrb[0].mxu0
      %v2248 = vadd.f32 %v2039, %v2247
      %v2249 = vpop.f32.mrb[0].mxu0
      %2250 = vmatprep.mubr.bf16.mxu0 0
      %2251 = vmatmul.mubr.bf16.gmra.mrb[0].mxu0 %v1079
      %v2252 = vpop.f32.mrb[0].mxu0
      %v2253 = vadd.f32 %v2044, %v2252
      %v2254 = vpop.f32.mrb[0].mxu0
      %v2255 = vpop.f32.mrb[0].mxu0
      %v2256 = vadd.f32 %v2047, %v2255
      %v2257 = vpop.f32.mrb[0].mxu0
      %2258 = vmatprep.mubr.bf16.mxu0 0
      %2259 = vmatmul.mubr.bf16.gmra.mrb[0].mxu0 %v1089
      %v2260 = vpop.f32.mrb[0].mxu0
      %v2261 = vadd.f32 %v2052, %v2260
      %v2262 = vpop.f32.mrb[0].mxu0
      %v2263 = vpop.f32.mrb[0].mxu0
      %v2264 = vadd.f32 %v2055, %v2263
      %v2265 = vpop.f32.mrb[0].mxu0
      %2266 = vmatprep.mubr.bf16.mxu0 0
      %2267 = vmatmul.mubr.bf16.gmra.mrb[0].mxu0 %v1099
      %v2268 = vpop.f32.mrb[0].mxu0
      %v2269 = vadd.f32 %v2060, %v2268
      %v2270 = vpop.f32.mrb[0].mxu0
      %v2271 = vpop.f32.mrb[0].mxu0
      %v2272 = vadd.f32 %v2063, %v2271
      %v2273 = vpop.f32.mrb[0].mxu0
      %2274 = vmatprep.mubr.bf16.mxu0 0
      %2275 = vmatmul.mubr.bf16.gmra.mrb[0].mxu0 %v1109
      %v2276 = vpop.f32.mrb[0].mxu0
      %v2277 = vadd.f32 %v2068, %v2276
      %v2278 = vpop.f32.mrb[0].mxu0
      %v2279 = vpop.f32.mrb[0].mxu0
      %v2280 = vadd.f32 %v2071, %v2279
      %v2281 = vpop.f32.mrb[0].mxu0
      %2282 = vmatprep.mubr.bf16.mxu0 0
      %2283 = vmatmul.mubr.bf16.gmra.mrb[0].mxu0 %v1119
      %v2284 = vpop.f32.mrb[0].mxu0
      %v2285 = vadd.f32 %v2076, %v2284
      %v2286 = vpop.f32.mrb[0].mxu0
      %v2287 = vpop.f32.mrb[0].mxu0
      %v2288 = vadd.f32 %v2079, %v2287
      %v2289 = vpop.f32.mrb[0].mxu0
      %2290 = vmatprep.mubr.bf16.mxu0 0
      %2291 = vmatmul.mubr.bf16.gmra.mrb[0].mxu0 %v1129
      %v2292 = vpop.f32.mrb[0].mxu0
      %v2293 = vadd.f32 %v2084, %v2292
      %v2294 = vpop.f32.mrb[0].mxu0
      %v2295 = vpop.f32.mrb[0].mxu0
      %v2296 = vadd.f32 %v2087, %v2295
      %v2297 = vpop.f32.mrb[0].mxu0
      %2298 = vmatprep.mubr.bf16.mxu0 0
      %2299 = vmatmul.mubr.bf16.gmra.mrb[0].mxu0 %v1139
      %v2300 = vpop.f32.mrb[0].mxu0
      %v2301 = vadd.f32 %v2092, %v2300
      %v2302 = vpop.f32.mrb[0].mxu0
      %v2303 = vpop.f32.mrb[0].mxu0
      %v2304 = vadd.f32 %v2095, %v2303
      %v2305 = vpop.f32.mrb[0].mxu0
      %2306 = vmatprep.mubr.bf16.mxu0 0
      %2307 = vmatmul.mubr.bf16.gmra.mrb[0].mxu0 %v1149
      %v2308 = vpop.f32.mrb[0].mxu0
      %v2309 = vadd.f32 %v2100, %v2308
      %v2310 = vpop.f32.mrb[0].mxu0
      %v2311 = vpop.f32.mrb[0].mxu0
      %v2312 = vadd.f32 %v2103, %v2311
      %v2313 = vpop.f32.mrb[0].mxu0
      %2314 = vdwg.mxu0
      %v2315 = vadd.f32 %v2189, %v1705
      %v2316 = vadd.f32 %v2192, %v1705
      %v2317 = vadd.f32 %v2197, %v1705
      %v2318 = vadd.f32 %v2200, %v1705
      %v2319 = vadd.f32 %v2205, %v1705
      %v2320 = vadd.f32 %v2208, %v1705
      %v2321 = vadd.f32 %v2213, %v1705
      %v2322 = vadd.f32 %v2216, %v1705
      %v2323 = vadd.f32 %v2221, %v1705
      %v2324 = vadd.f32 %v2224, %v1705
      %v2325 = vadd.f32 %v2229, %v1705
      %v2326 = vadd.f32 %v2232, %v1705
      %v2327 = vadd.f32 %v2237, %v1705
      %v2328 = vadd.f32 %v2240, %v1705
      %v2329 = vadd.f32 %v2245, %v1705
      %v2330 = vadd.f32 %v2248, %v1705
      %v2331 = vadd.f32 %v2253, %v1705
      %v2332 = vadd.f32 %v2256, %v1705
      %v2333 = vadd.f32 %v2261, %v1705
      %v2334 = vadd.f32 %v2264, %v1705
      %v2335 = vadd.f32 %v2269, %v1705
      %v2336 = vadd.f32 %v2272, %v1705
      %v2337 = vadd.f32 %v2277, %v1705
      %v2338 = vadd.f32 %v2280, %v1705
      %v2339 = vadd.f32 %v2285, %v1705
      %v2340 = vadd.f32 %v2288, %v1705
      %v2341 = vadd.f32 %v2293, %v1705
      %v2342 = vadd.f32 %v2296, %v1705
      %v2343 = vadd.f32 %v2301, %v1705
      %v2344 = vadd.f32 %v2304, %v1705
      %v2345 = vadd.f32 %v2309, %v1705
      %v2346 = vadd.f32 %v2312, %v1705
      %v2347 = vadd.f32 %v2315, %v2316
      %v2348 = vadd.f32 %v2347, %v2317
      %v2349 = vadd.f32 %v2348, %v2318
      %v2350 = vadd.f32 %v2349, %v2319
      %v2351 = vadd.f32 %v2350, %v2320
      %v2352 = vadd.f32 %v2351, %v2321
      %v2353 = vadd.f32 %v2352, %v2322
      %v2354 = vadd.f32 %v2353, %v2323
      %v2355 = vadd.f32 %v2354, %v2324
      %v2356 = vadd.f32 %v2355, %v2325
      %v2357 = vadd.f32 %v2356, %v2326
      %v2358 = vadd.f32 %v2357, %v2327
      %v2359 = vadd.f32 %v2358, %v2328
      %v2360 = vadd.f32 %v2359, %v2329
      %v2361 = vadd.f32 %v2360, %v2330
      %v2362 = vadd.f32 %v2361, %v2331
      %v2363 = vadd.f32 %v2362, %v2332
      %v2364 = vadd.f32 %v2363, %v2333
      %v2365 = vadd.f32 %v2364, %v2334
      %v2366 = vadd.f32 %v2365, %v2335
      %v2367 = vadd.f32 %v2366, %v2336
      %v2368 = vadd.f32 %v2367, %v2337
      %v2369 = vadd.f32 %v2368, %v2338
      %v2370 = vadd.f32 %v2369, %v2339
      %v2371 = vadd.f32 %v2370, %v2340
      %v2372 = vadd.f32 %v2371, %v2341
      %v2373 = vadd.f32 %v2372, %v2342
      %v2374 = vadd.f32 %v2373, %v2343
      %v2375 = vadd.f32 %v2374, %v2344
      %v2376 = vadd.f32 %v2375, %v2345
      %v2377 = vadd.f32 %v2376, %v2346
      %v2378 = vrot.slane %v2377, 4
      %v2379 = vadd.f32 %v2377, %v2378
      %v2380 = vrot.slane %v2379, 2
      %v2381 = vadd.f32 %v2379, %v2380
      %v2382 = vrot.slane %v2381, 1
      %v2383 = vadd.f32 %v2381, %v2382
      %v2384 = vadd.f32 %v1776, %v2383
      %v2385 = vmul.f32 %v2315, %v2315
      %v2386 = vmul.f32 %v2316, %v2316
      %v2387 = vmul.f32 %v2317, %v2317
      %v2388 = vmul.f32 %v2318, %v2318
      %v2389 = vmul.f32 %v2319, %v2319
      %v2390 = vmul.f32 %v2320, %v2320
      %v2391 = vmul.f32 %v2321, %v2321
      %v2392 = vmul.f32 %v2322, %v2322
      %v2393 = vmul.f32 %v2323, %v2323
      %v2394 = vmul.f32 %v2324, %v2324
      %v2395 = vmul.f32 %v2325, %v2325
      %v2396 = vmul.f32 %v2326, %v2326
      %v2397 = vmul.f32 %v2327, %v2327
      %v2398 = vmul.f32 %v2328, %v2328
      %v2399 = vmul.f32 %v2329, %v2329
      %v2400 = vmul.f32 %v2330, %v2330
      %v2401 = vmul.f32 %v2331, %v2331
      %v2402 = vmul.f32 %v2332, %v2332
      %v2403 = vmul.f32 %v2333, %v2333
      %v2404 = vmul.f32 %v2334, %v2334
      %v2405 = vmul.f32 %v2335, %v2335
      %v2406 = vmul.f32 %v2336, %v2336
      %v2407 = vmul.f32 %v2337, %v2337
      %v2408 = vmul.f32 %v2338, %v2338
      %v2409 = vmul.f32 %v2339, %v2339
      %v2410 = vmul.f32 %v2340, %v2340
      %v2411 = vmul.f32 %v2341, %v2341
      %v2412 = vmul.f32 %v2342, %v2342
      %v2413 = vmul.f32 %v2343, %v2343
      %v2414 = vmul.f32 %v2344, %v2344
      %v2415 = vmul.f32 %v2345, %v2345
      %v2416 = vmul.f32 %v2346, %v2346
      %v2417 = vadd.f32 %v2385, %v2386
      %v2418 = vadd.f32 %v2417, %v2387
      %v2419 = vadd.f32 %v2418, %v2388
      %v2420 = vadd.f32 %v2419, %v2389
      %v2421 = vadd.f32 %v2420, %v2390
      %v2422 = vadd.f32 %v2421, %v2391
      %v2423 = vadd.f32 %v2422, %v2392
      %v2424 = vadd.f32 %v2423, %v2393
      %v2425 = vadd.f32 %v2424, %v2394
      %v2426 = vadd.f32 %v2425, %v2395
      %v2427 = vadd.f32 %v2426, %v2396
      %v2428 = vadd.f32 %v2427, %v2397
      %v2429 = vadd.f32 %v2428, %v2398
      %v2430 = vadd.f32 %v2429, %v2399
      %v2431 = vadd.f32 %v2430, %v2400
      %v2432 = vadd.f32 %v2431, %v2401
      %v2433 = vadd.f32 %v2432, %v2402
      %v2434 = vadd.f32 %v2433, %v2403
      %v2435 = vadd.f32 %v2434, %v2404
      %v2436 = vadd.f32 %v2435, %v2405
      %v2437 = vadd.f32 %v2436, %v2406
      %v2438 = vadd.f32 %v2437, %v2407
      %v2439 = vadd.f32 %v2438, %v2408
      %v2440 = vadd.f32 %v2439, %v2409
      %v2441 = vadd.f32 %v2440, %v2410
      %v2442 = vadd.f32 %v2441, %v2411
      %v2443 = vadd.f32 %v2442, %v2412
      %v2444 = vadd.f32 %v2443, %v2413
      %v2445 = vadd.f32 %v2444, %v2414
      %v2446 = vadd.f32 %v2445, %v2415
      %v2447 = vadd.f32 %v2446, %v2416
      %v2448 = vrot.slane %v2447, 4
      %v2449 = vadd.f32 %v2447, %v2448
      %v2450 = vrot.slane %v2449, 2
      %v2451 = vadd.f32 %v2449, %v2450
      %v2452 = vrot.slane %v2451, 1
      %v2453 = vadd.f32 %v2451, %v2452
      %v2454 = vadd.f32 %v1846, %v2453
      %v2455 = vpack.c.bf16 %v2316, %v2315
      %v2456 = vpack.c.bf16 %v2318, %v2317
      %v2457 = vpack.c.bf16 %v2320, %v2319
      %v2458 = vpack.c.bf16 %v2322, %v2321
      %v2459 = vpack.c.bf16 %v2324, %v2323
      %v2460 = vpack.c.bf16 %v2326, %v2325
      %v2461 = vpack.c.bf16 %v2328, %v2327
      %v2462 = vpack.c.bf16 %v2330, %v2329
      %v2463 = vpack.c.bf16 %v2332, %v2331
      %v2464 = vpack.c.bf16 %v2334, %v2333
      %v2465 = vpack.c.bf16 %v2336, %v2335
      %v2466 = vpack.c.bf16 %v2338, %v2337
      %v2467 = vpack.c.bf16 %v2340, %v2339
      %v2468 = vpack.c.bf16 %v2342, %v2341
      %v2469 = vpack.c.bf16 %v2344, %v2343
      %v2470 = vpack.c.bf16 %v2346, %v2345
      %v2503 = vunpack.c.l.b16 %v1847
      %v2504 = vunpack.c.l.b16 %v2455
      %v2505 = vunpack.c.h.b16 %v1847
      %v2506 = vunpack.c.h.b16 %v2455
      %v2507 = vunpack.c.l.b16 %v1848
      %v2508 = vunpack.c.l.b16 %v2456
      %v2509 = vunpack.c.h.b16 %v1848
      %v2510 = vunpack.c.h.b16 %v2456
      %v2511 = vunpack.c.l.b16 %v1849
      %v2512 = vunpack.c.l.b16 %v2457
      %v2513 = vunpack.c.h.b16 %v1849
      %v2514 = vunpack.c.h.b16 %v2457
      %v2515 = vunpack.c.l.b16 %v1850
      %v2516 = vunpack.c.l.b16 %v2458
      %v2517 = vunpack.c.h.b16 %v1850
      %v2518 = vunpack.c.h.b16 %v2458
      %v2519 = vunpack.c.l.b16 %v1851
      %v2520 = vunpack.c.l.b16 %v2459
      %v2521 = vunpack.c.h.b16 %v1851
      %v2522 = vunpack.c.h.b16 %v2459
      %v2523 = vunpack.c.l.b16 %v1852
      %v2524 = vunpack.c.l.b16 %v2460
      %v2525 = vunpack.c.h.b16 %v1852
      %v2526 = vunpack.c.h.b16 %v2460
      %v2527 = vunpack.c.l.b16 %v1853
      %v2528 = vunpack.c.l.b16 %v2461
      %v2529 = vunpack.c.h.b16 %v1853
      %v2530 = vunpack.c.h.b16 %v2461
      %v2531 = vunpack.c.l.b16 %v1854
      %v2532 = vunpack.c.l.b16 %v2462
      %v2533 = vunpack.c.h.b16 %v1854
      %v2534 = vunpack.c.h.b16 %v2462
      %v2535 = vunpack.c.l.b16 %v1855
      %v2536 = vunpack.c.l.b16 %v2463
      %v2537 = vunpack.c.h.b16 %v1855
      %v2538 = vunpack.c.h.b16 %v2463
      %v2539 = vunpack.c.l.b16 %v1856
      %v2540 = vunpack.c.l.b16 %v2464
      %v2541 = vunpack.c.h.b16 %v1856
      %v2542 = vunpack.c.h.b16 %v2464
      %v2543 = vunpack.c.l.b16 %v1857
      %v2544 = vunpack.c.l.b16 %v2465
      %v2545 = vunpack.c.h.b16 %v1857
      %v2546 = vunpack.c.h.b16 %v2465
      %v2547 = vunpack.c.l.b16 %v1858
      %v2548 = vunpack.c.l.b16 %v2466
      %v2549 = vunpack.c.h.b16 %v1858
      %v2550 = vunpack.c.h.b16 %v2466
      %v2551 = vunpack.c.l.b16 %v1859
      %v2552 = vunpack.c.l.b16 %v2467
      %v2553 = vunpack.c.h.b16 %v1859
      %v2554 = vunpack.c.h.b16 %v2467
      %v2555 = vunpack.c.l.b16 %v1860
      %v2556 = vunpack.c.l.b16 %v2468
      %v2557 = vunpack.c.h.b16 %v1860
      %v2558 = vunpack.c.h.b16 %v2468
      %v2559 = vunpack.c.l.b16 %v1861
      %v2560 = vunpack.c.l.b16 %v2469
      %v2561 = vunpack.c.h.b16 %v1861
      %v2562 = vunpack.c.h.b16 %v2469
      %v2563 = vunpack.c.l.b16 %v1862
      %v2564 = vunpack.c.l.b16 %v2470
      %v2565 = vunpack.c.h.b16 %v1862
      %v2566 = vunpack.c.h.b16 %v2470
      %v2567 = vpack.c.b16 %v2504, %v2503
      %v2568 = vpack.c.b16 %v2506, %v2505
      %v2569 = vpack.c.b16 %v2508, %v2507
      %v2570 = vpack.c.b16 %v2510, %v2509
      %v2571 = vpack.c.b16 %v2512, %v2511
      %v2572 = vpack.c.b16 %v2514, %v2513
      %v2573 = vpack.c.b16 %v2516, %v2515
      %v2574 = vpack.c.b16 %v2518, %v2517
      %v2575 = vpack.c.b16 %v2520, %v2519
      %v2576 = vpack.c.b16 %v2522, %v2521
      %v2577 = vpack.c.b16 %v2524, %v2523
      %v2578 = vpack.c.b16 %v2526, %v2525
      %v2579 = vpack.c.b16 %v2528, %v2527
      %v2580 = vpack.c.b16 %v2530, %v2529
      %v2581 = vpack.c.b16 %v2532, %v2531
      %v2582 = vpack.c.b16 %v2534, %v2533
      %v2583 = vpack.c.b16 %v2536, %v2535
      %v2584 = vpack.c.b16 %v2538, %v2537
      %v2585 = vpack.c.b16 %v2540, %v2539
      %v2586 = vpack.c.b16 %v2542, %v2541
      %v2587 = vpack.c.b16 %v2544, %v2543
      %v2588 = vpack.c.b16 %v2546, %v2545
      %v2589 = vpack.c.b16 %v2548, %v2547
      %v2590 = vpack.c.b16 %v2550, %v2549
      %v2591 = vpack.c.b16 %v2552, %v2551
      %v2592 = vpack.c.b16 %v2554, %v2553
      %v2593 = vpack.c.b16 %v2556, %v2555
      %v2594 = vpack.c.b16 %v2558, %v2557
      %v2595 = vpack.c.b16 %v2560, %v2559
      %v2596 = vpack.c.b16 %v2562, %v2561
      %v2597 = vpack.c.b16 %v2564, %v2563
      %v2598 = vpack.c.b16 %v2566, %v2565
      %2631 = vst [vmem:[%s427] sm:$0xff] %v2567
      %2632 = vst [vmem:[%s427 + $0x8] sm:$0xff] %v2568
      %2633 = vst [vmem:[%s427 + $0x20] sm:$0xff] %v2569
      %2634 = vst [vmem:[%s427 + $0x28] sm:$0xff] %v2570
      %2635 = vst [vmem:[%s427 + $0x40] sm:$0xff] %v2571
      %2636 = vst [vmem:[%s427 + $0x48] sm:$0xff] %v2572
      %2637 = vst [vmem:[%s427 + $0x60] sm:$0xff] %v2573
      %2638 = vst [vmem:[%s427 + $0x68] sm:$0xff] %v2574
      %2639 = vst [vmem:[%s427 + $0x80] sm:$0xff] %v2575
      %2640 = vst [vmem:[%s427 + $0x88] sm:$0xff] %v2576
      %2641 = vst [vmem:[%s427 + $0xa0] sm:$0xff] %v2577
      %2642 = vst [vmem:[%s427 + $0xa8] sm:$0xff] %v2578
      %2643 = vst [vmem:[%s427 + $0xc0] sm:$0xff] %v2579
      %2644 = vst [vmem:[%s427 + $0xc8] sm:$0xff] %v2580
      %2645 = vst [vmem:[%s427 + $0xe0] sm:$0xff] %v2581
      %2646 = vst [vmem:[%s427 + $0xe8] sm:$0xff] %v2582
      %2647 = vst [vmem:[%s427 + $0x100] sm:$0xff] %v2583
      %2648 = vst [vmem:[%s427 + $0x108] sm:$0xff] %v2584
      %2649 = vst [vmem:[%s427 + $0x120] sm:$0xff] %v2585
      %2650 = vst [vmem:[%s427 + $0x128] sm:$0xff] %v2586
      %2651 = vst [vmem:[%s427 + $0x140] sm:$0xff] %v2587
      %2652 = vst [vmem:[%s427 + $0x148] sm:$0xff] %v2588
      %2653 = vst [vmem:[%s427 + $0x160] sm:$0xff] %v2589
      %2654 = vst [vmem:[%s427 + $0x168] sm:$0xff] %v2590
      %2655 = vst [vmem:[%s427 + $0x180] sm:$0xff] %v2591
      %2656 = vst [vmem:[%s427 + $0x188] sm:$0xff] %v2592
      %2657 = vst [vmem:[%s427 + $0x1a0] sm:$0xff] %v2593
      %2658 = vst [vmem:[%s427 + $0x1a8] sm:$0xff] %v2594
      %2659 = vst [vmem:[%s427 + $0x1c0] sm:$0xff] %v2595
      %2660 = vst [vmem:[%s427 + $0x1c8] sm:$0xff] %v2596
      %2661 = vst [vmem:[%s427 + $0x1e0] sm:$0xff] %v2597
      %2662 = vst [vmem:[%s427 + $0x1e8] sm:$0xff] %v2598
      %s2663 = scalar_lea.vmem %s3, 256
      %v2664 = vld [vmem:[%s2663] sm:$0xf]
      %v2665 = vld [vmem:[%s2663 + $0x4] sm:$0xf]
      %v2666 = vld [vmem:[%s2663 + $0x8] sm:$0xf]
      %v2667 = vld [vmem:[%s2663 + $0xc] sm:$0xf]
      %v2668 = vld [vmem:[%s2663 + $0x10] sm:$0xf]
      %v2669 = vld [vmem:[%s2663 + $0x14] sm:$0xf]
      %v2670 = vld [vmem:[%s2663 + $0x18] sm:$0xf]
      %v2671 = vld [vmem:[%s2663 + $0x1c] sm:$0xf]
      %v2672 = vld [vmem:[%s2663 + $0x20] sm:$0xf]
      %v2673 = vld [vmem:[%s2663 + $0x24] sm:$0xf]
      %v2674 = vld [vmem:[%s2663 + $0x28] sm:$0xf]
      %v2675 = vld [vmem:[%s2663 + $0x2c] sm:$0xf]
      %v2676 = vld [vmem:[%s2663 + $0x30] sm:$0xf]
      %v2677 = vld [vmem:[%s2663 + $0x34] sm:$0xf]
      %v2678 = vld [vmem:[%s2663 + $0x38] sm:$0xf]
      %v2679 = vld [vmem:[%s2663 + $0x3c] sm:$0xf]
      %s2680 = scalar_lea.vmem %s3, 320
      %v2681 = vld [vmem:[%s2680] sm:$0xf]
      %v2682 = vld [vmem:[%s2680 + $0x4] sm:$0xf]
      %v2683 = vld [vmem:[%s2680 + $0x8] sm:$0xf]
      %v2684 = vld [vmem:[%s2680 + $0xc] sm:$0xf]
      %v2685 = vld [vmem:[%s2680 + $0x10] sm:$0xf]
      %v2686 = vld [vmem:[%s2680 + $0x14] sm:$0xf]
      %v2687 = vld [vmem:[%s2680 + $0x18] sm:$0xf]
      %v2688 = vld [vmem:[%s2680 + $0x1c] sm:$0xf]
      %v2689 = vld [vmem:[%s2680 + $0x20] sm:$0xf]
      %v2690 = vld [vmem:[%s2680 + $0x24] sm:$0xf]
      %v2691 = vld [vmem:[%s2680 + $0x28] sm:$0xf]
      %v2692 = vld [vmem:[%s2680 + $0x2c] sm:$0xf]
      %v2693 = vld [vmem:[%s2680 + $0x30] sm:$0xf]
      %v2694 = vld [vmem:[%s2680 + $0x34] sm:$0xf]
      %v2695 = vld [vmem:[%s2680 + $0x38] sm:$0xf]
      %v2696 = vld [vmem:[%s2680 + $0x3c] sm:$0xf]
      %v2713 = vunpack.c.l.b16 %v2681
      %v2714 = vunpack.c.l.b16 %v2682
      %v2715 = vunpack.c.l.b16 %v2683
      %v2716 = vunpack.c.l.b16 %v2684
      %v2717 = vunpack.c.l.b16 %v2685
      %v2718 = vunpack.c.l.b16 %v2686
      %v2719 = vunpack.c.l.b16 %v2687
      %v2720 = vunpack.c.l.b16 %v2688
      %v2721 = vunpack.c.l.b16 %v2689
      %v2722 = vunpack.c.l.b16 %v2690
      %v2723 = vunpack.c.l.b16 %v2691
      %v2724 = vunpack.c.l.b16 %v2692
      %v2725 = vunpack.c.l.b16 %v2693
      %v2726 = vunpack.c.l.b16 %v2694
      %v2727 = vunpack.c.l.b16 %v2695
      %v2728 = vunpack.c.l.b16 %v2696
      %v2729 = vpack.c.b16 %v2714, %v2713
      %v2730 = vpack.c.b16 %v2716, %v2715
      %v2731 = vpack.c.b16 %v2718, %v2717
      %v2732 = vpack.c.b16 %v2720, %v2719
      %v2733 = vpack.c.b16 %v2722, %v2721
      %v2734 = vpack.c.b16 %v2724, %v2723
      %v2735 = vpack.c.b16 %v2726, %v2725
      %v2736 = vpack.c.b16 %v2728, %v2727
      %2745 = vmatprep.subr.bf16.mxu0 0
      %2746 = vmatpush1.bf16.msra.mxu0 %v2729
      %2747 = vmatprep.subr.bf16.mxu0 0
      %2748 = vmatpush1.bf16.msra.mxu0 %v2730
      %2749 = vmatprep.subr.bf16.mxu0 0
      %2750 = vmatpush1.bf16.msra.mxu0 %v2731
      %2751 = vmatprep.subr.bf16.mxu0 0
      %2752 = vmatpush1.bf16.msra.mxu0 %v2732
      %2753 = vmatprep.subr.bf16.mxu0 0
      %2754 = vmatpush1.bf16.msra.mxu0 %v2733
      %2755 = vmatprep.subr.bf16.mxu0 0
      %2756 = vmatpush1.bf16.msra.mxu0 %v2734
      %2757 = vmatprep.subr.bf16.mxu0 0
      %2758 = vmatpush1.bf16.msra.mxu0 %v2735
      %2759 = vmatprep.subr.bf16.mxu0 0
      %2760 = vmatpush1.bf16.msra.mxu0 %v2736
      %2761 = vmatprep.subr.bf16.mxu0 0
      %2762 = vmatpush1.bf16.msra.mxu0 0
      %2763 = vmatprep.subr.bf16.mxu0 0
      %2764 = vmatpush1.bf16.msra.mxu0 0
      %2765 = vmatprep.subr.bf16.mxu0 0
      %2766 = vmatpush1.bf16.msra.mxu0 0
      %2767 = vmatprep.subr.bf16.mxu0 0
      %2768 = vmatpush1.bf16.msra.mxu0 0
      %2769 = vmatprep.subr.bf16.mxu0 0
      %2770 = vmatpush1.bf16.msra.mxu0 0
      %2771 = vmatprep.subr.bf16.mxu0 0
      %2772 = vmatpush1.bf16.msra.mxu0 0
      %2773 = vmatprep.subr.bf16.mxu0 0
      %2774 = vmatpush1.bf16.msra.mxu0 0
      %2775 = vmatprep.subr.bf16.mxu0 0
      %2776 = vmatpush1.bf16.msra.mxu0 0
      %2777 = vmatprep.mubr.bf16.mxu0 0
      %2778 = vmatmul.mubr.bf16.gmra.mrb[0].mxu0 %v853
      %v2779 = vpop.f32.mrb[0].mxu0
      %v2780 = vadd.f32 0.0, %v2779
      %v2781 = vpop.f32.mrb[0].mxu0
      %v2782 = vpop.f32.mrb[0].mxu0
      %v2783 = vadd.f32 0.0, %v2782
      %v2784 = vpop.f32.mrb[0].mxu0
      %2785 = vmatprep.mubr.bf16.mxu0 0
      %2786 = vmatmul.mubr.bf16.gmra.mrb[0].mxu0 %v856
      %v2787 = vpop.f32.mrb[0].mxu0
      %v2788 = vadd.f32 0.0, %v2787
      %v2789 = vpop.f32.mrb[0].mxu0
      %v2790 = vpop.f32.mrb[0].mxu0
      %v2791 = vadd.f32 0.0, %v2790
      %v2792 = vpop.f32.mrb[0].mxu0
      %2793 = vmatprep.mubr.bf16.mxu0 0
      %2794 = vmatmul.mubr.bf16.gmra.mrb[0].mxu0 %v859
      %v2795 = vpop.f32.mrb[0].mxu0
      %v2796 = vadd.f32 0.0, %v2795
      %v2797 = vpop.f32.mrb[0].mxu0
      %v2798 = vpop.f32.mrb[0].mxu0
      %v2799 = vadd.f32 0.0, %v2798
      %v2800 = vpop.f32.mrb[0].mxu0
      %2801 = vmatprep.mubr.bf16.mxu0 0
      %2802 = vmatmul.mubr.bf16.gmra.mrb[0].mxu0 %v862
      %v2803 = vpop.f32.mrb[0].mxu0
      %v2804 = vadd.f32 0.0, %v2803
      %v2805 = vpop.f32.mrb[0].mxu0
      %v2806 = vpop.f32.mrb[0].mxu0
      %v2807 = vadd.f32 0.0, %v2806
      %v2808 = vpop.f32.mrb[0].mxu0
      %2809 = vmatprep.mubr.bf16.mxu0 0
      %2810 = vmatmul.mubr.bf16.gmra.mrb[0].mxu0 %v865
      %v2811 = vpop.f32.mrb[0].mxu0
      %v2812 = vadd.f32 0.0, %v2811
      %v2813 = vpop.f32.mrb[0].mxu0
      %v2814 = vpop.f32.mrb[0].mxu0
      %v2815 = vadd.f32 0.0, %v2814
      %v2816 = vpop.f32.mrb[0].mxu0
      %2817 = vmatprep.mubr.bf16.mxu0 0
      %2818 = vmatmul.mubr.bf16.gmra.mrb[0].mxu0 %v868
      %v2819 = vpop.f32.mrb[0].mxu0
      %v2820 = vadd.f32 0.0, %v2819
      %v2821 = vpop.f32.mrb[0].mxu0
      %v2822 = vpop.f32.mrb[0].mxu0
      %v2823 = vadd.f32 0.0, %v2822
      %v2824 = vpop.f32.mrb[0].mxu0
      %2825 = vmatprep.mubr.bf16.mxu0 0
      %2826 = vmatmul.mubr.bf16.gmra.mrb[0].mxu0 %v871
      %v2827 = vpop.f32.mrb[0].mxu0
      %v2828 = vadd.f32 0.0, %v2827
      %v2829 = vpop.f32.mrb[0].mxu0
      %v2830 = vpop.f32.mrb[0].mxu0
      %v2831 = vadd.f32 0.0, %v2830
      %v2832 = vpop.f32.mrb[0].mxu0
      %2833 = vmatprep.mubr.bf16.mxu0 0
      %2834 = vmatmul.mubr.bf16.gmra.mrb[0].mxu0 %v874
      %v2835 = vpop.f32.mrb[0].mxu0
      %v2836 = vadd.f32 0.0, %v2835
      %v2837 = vpop.f32.mrb[0].mxu0
      %v2838 = vpop.f32.mrb[0].mxu0
      %v2839 = vadd.f32 0.0, %v2838
      %v2840 = vpop.f32.mrb[0].mxu0
      %2841 = vmatprep.mubr.bf16.mxu0 0
      %2842 = vmatmul.mubr.bf16.gmra.mrb[0].mxu0 %v877
      %v2843 = vpop.f32.mrb[0].mxu0
      %v2844 = vadd.f32 0.0, %v2843
      %v2845 = vpop.f32.mrb[0].mxu0
      %v2846 = vpop.f32.mrb[0].mxu0
      %v2847 = vadd.f32 0.0, %v2846
      %v2848 = vpop.f32.mrb[0].mxu0
      %2849 = vmatprep.mubr.bf16.mxu0 0
      %2850 = vmatmul.mubr.bf16.gmra.mrb[0].mxu0 %v880
      %v2851 = vpop.f32.mrb[0].mxu0
      %v2852 = vadd.f32 0.0, %v2851
      %v2853 = vpop.f32.mrb[0].mxu0
      %v2854 = vpop.f32.mrb[0].mxu0
      %v2855 = vadd.f32 0.0, %v2854
      %v2856 = vpop.f32.mrb[0].mxu0
      %2857 = vmatprep.mubr.bf16.mxu0 0
      %2858 = vmatmul.mubr.bf16.gmra.mrb[0].mxu0 %v883
      %v2859 = vpop.f32.mrb[0].mxu0
      %v2860 = vadd.f32 0.0, %v2859
      %v2861 = vpop.f32.mrb[0].mxu0
      %v2862 = vpop.f32.mrb[0].mxu0
      %v2863 = vadd.f32 0.0, %v2862
      %v2864 = vpop.f32.mrb[0].mxu0
      %2865 = vmatprep.mubr.bf16.mxu0 0
      %2866 = vmatmul.mubr.bf16.gmra.mrb[0].mxu0 %v886
      %v2867 = vpop.f32.mrb[0].mxu0
      %v2868 = vadd.f32 0.0, %v2867
      %v2869 = vpop.f32.mrb[0].mxu0
      %v2870 = vpop.f32.mrb[0].mxu0
      %v2871 = vadd.f32 0.0, %v2870
      %v2872 = vpop.f32.mrb[0].mxu0
      %2873 = vmatprep.mubr.bf16.mxu0 0
      %2874 = vmatmul.mubr.bf16.gmra.mrb[0].mxu0 %v889
      %v2875 = vpop.f32.mrb[0].mxu0
      %v2876 = vadd.f32 0.0, %v2875
      %v2877 = vpop.f32.mrb[0].mxu0
      %v2878 = vpop.f32.mrb[0].mxu0
      %v2879 = vadd.f32 0.0, %v2878
      %v2880 = vpop.f32.mrb[0].mxu0
      %2881 = vmatprep.mubr.bf16.mxu0 0
      %2882 = vmatmul.mubr.bf16.gmra.mrb[0].mxu0 %v892
      %v2883 = vpop.f32.mrb[0].mxu0
      %v2884 = vadd.f32 0.0, %v2883
      %v2885 = vpop.f32.mrb[0].mxu0
      %v2886 = vpop.f32.mrb[0].mxu0
      %v2887 = vadd.f32 0.0, %v2886
      %v2888 = vpop.f32.mrb[0].mxu0
      %2889 = vmatprep.mubr.bf16.mxu0 0
      %2890 = vmatmul.mubr.bf16.gmra.mrb[0].mxu0 %v1189
      %v2891 = vpop.f32.mrb[0].mxu0
      %v2892 = vadd.f32 0.0, %v2891
      %v2893 = vpop.f32.mrb[0].mxu0
      %v2894 = vpop.f32.mrb[0].mxu0
      %v2895 = vadd.f32 0.0, %v2894
      %v2896 = vpop.f32.mrb[0].mxu0
      %2897 = vmatprep.mubr.bf16.mxu0 0
      %2898 = vmatmul.mubr.bf16.gmra.mrb[0].mxu0 %v1231
      %v2899 = vpop.f32.mrb[0].mxu0
      %v2900 = vadd.f32 0.0, %v2899
      %v2901 = vpop.f32.mrb[0].mxu0
      %v2902 = vpop.f32.mrb[0].mxu0
      %v2903 = vadd.f32 0.0, %v2902
      %v2904 = vpop.f32.mrb[0].mxu0
      %2905 = vdwg.mxu0
      %v2922 = vunpack.c.l.b16 %v2664
      %v2923 = vunpack.c.l.b16 %v2665
      %v2924 = vunpack.c.l.b16 %v2666
      %v2925 = vunpack.c.l.b16 %v2667
      %v2926 = vunpack.c.l.b16 %v2668
      %v2927 = vunpack.c.l.b16 %v2669
      %v2928 = vunpack.c.l.b16 %v2670
      %v2929 = vunpack.c.l.b16 %v2671
      %v2930 = vunpack.c.l.b16 %v2672
      %v2931 = vunpack.c.l.b16 %v2673
      %v2932 = vunpack.c.l.b16 %v2674
      %v2933 = vunpack.c.l.b16 %v2675
      %v2934 = vunpack.c.l.b16 %v2676
      %v2935 = vunpack.c.l.b16 %v2677
      %v2936 = vunpack.c.l.b16 %v2678
      %v2937 = vunpack.c.l.b16 %v2679
      %v2938 = vpack.c.b16 %v2923, %v2922
      %v2939 = vpack.c.b16 %v2925, %v2924
      %v2940 = vpack.c.b16 %v2927, %v2926
      %v2941 = vpack.c.b16 %v2929, %v2928
      %v2942 = vpack.c.b16 %v2931, %v2930
      %v2943 = vpack.c.b16 %v2933, %v2932
      %v2944 = vpack.c.b16 %v2935, %v2934
      %v2945 = vpack.c.b16 %v2937, %v2936
      %2954 = vmatprep.subr.bf16.mxu0 0
      %2955 = vmatpush1.bf16.msra.mxu0 %v2938
      %2956 = vmatprep.subr.bf16.mxu0 0
      %2957 = vmatpush1.bf16.msra.mxu0 %v2939
      %2958 = vmatprep.subr.bf16.mxu0 0
      %2959 = vmatpush1.bf16.msra.mxu0 %v2940
      %2960 = vmatprep.subr.bf16.mxu0 0
      %2961 = vmatpush1.bf16.msra.mxu0 %v2941
      %2962 = vmatprep.subr.bf16.mxu0 0
      %2963 = vmatpush1.bf16.msra.mxu0 %v2942
      %2964 = vmatprep.subr.bf16.mxu0 0
      %2965 = vmatpush1.bf16.msra.mxu0 %v2943
      %2966 = vmatprep.subr.bf16.mxu0 0
      %2967 = vmatpush1.bf16.msra.mxu0 %v2944
      %2968 = vmatprep.subr.bf16.mxu0 0
      %2969 = vmatpush1.bf16.msra.mxu0 %v2945
      %2970 = vmatprep.subr.bf16.mxu0 0
      %2971 = vmatpush1.bf16.msra.mxu0 0
      %2972 = vmatprep.subr.bf16.mxu0 0
      %2973 = vmatpush1.bf16.msra.mxu0 0
      %2974 = vmatprep.subr.bf16.mxu0 0
      %2975 = vmatpush1.bf16.msra.mxu0 0
      %2976 = vmatprep.subr.bf16.mxu0 0
      %2977 = vmatpush1.bf16.msra.mxu0 0
      %2978 = vmatprep.subr.bf16.mxu0 0
      %2979 = vmatpush1.bf16.msra.mxu0 0
      %2980 = vmatprep.subr.bf16.mxu0 0
      %2981 = vmatpush1.bf16.msra.mxu0 0
      %2982 = vmatprep.subr.bf16.mxu0 0
      %2983 = vmatpush1.bf16.msra.mxu0 0
      %2984 = vmatprep.subr.bf16.mxu0 0
      %2985 = vmatpush1.bf16.msra.mxu0 0
      %2986 = vmatprep.mubr.bf16.mxu0 0
      %2987 = vmatmul.mubr.bf16.gmra.mrb[0].mxu0 %v850
      %v2988 = vpop.f32.mrb[0].mxu0
      %v2989 = vadd.f32 %v2780, %v2988
      %v2990 = vpop.f32.mrb[0].mxu0
      %v2991 = vpop.f32.mrb[0].mxu0
      %v2992 = vadd.f32 %v2783, %v2991
      %v2993 = vpop.f32.mrb[0].mxu0
      %2994 = vmatprep.mubr.bf16.mxu0 0
      %2995 = vmatmul.mubr.bf16.gmra.mrb[0].mxu0 %v853
      %v2996 = vpop.f32.mrb[0].mxu0
      %v2997 = vadd.f32 %v2788, %v2996
      %v2998 = vpop.f32.mrb[0].mxu0
      %v2999 = vpop.f32.mrb[0].mxu0
      %v3000 = vadd.f32 %v2791, %v2999
      %v3001 = vpop.f32.mrb[0].mxu0
      %3002 = vmatprep.mubr.bf16.mxu0 0
      %3003 = vmatmul.mubr.bf16.gmra.mrb[0].mxu0 %v856
      %v3004 = vpop.f32.mrb[0].mxu0
      %v3005 = vadd.f32 %v2796, %v3004
      %v3006 = vpop.f32.mrb[0].mxu0
      %v3007 = vpop.f32.mrb[0].mxu0
      %v3008 = vadd.f32 %v2799, %v3007
      %v3009 = vpop.f32.mrb[0].mxu0
      %3010 = vmatprep.mubr.bf16.mxu0 0
      %3011 = vmatmul.mubr.bf16.gmra.mrb[0].mxu0 %v859
      %v3012 = vpop.f32.mrb[0].mxu0
      %v3013 = vadd.f32 %v2804, %v3012
      %v3014 = vpop.f32.mrb[0].mxu0
      %v3015 = vpop.f32.mrb[0].mxu0
      %v3016 = vadd.f32 %v2807, %v3015
      %v3017 = vpop.f32.mrb[0].mxu0
      %3018 = vmatprep.mubr.bf16.mxu0 0
      %3019 = vmatmul.mubr.bf16.gmra.mrb[0].mxu0 %v862
      %v3020 = vpop.f32.mrb[0].mxu0
      %v3021 = vadd.f32 %v2812, %v3020
      %v3022 = vpop.f32.mrb[0].mxu0
      %v3023 = vpop.f32.mrb[0].mxu0
      %v3024 = vadd.f32 %v2815, %v3023
      %v3025 = vpop.f32.mrb[0].mxu0
      %3026 = vmatprep.mubr.bf16.mxu0 0
      %3027 = vmatmul.mubr.bf16.gmra.mrb[0].mxu0 %v865
      %v3028 = vpop.f32.mrb[0].mxu0
      %v3029 = vadd.f32 %v2820, %v3028
      %v3030 = vpop.f32.mrb[0].mxu0
      %v3031 = vpop.f32.mrb[0].mxu0
      %v3032 = vadd.f32 %v2823, %v3031
      %v3033 = vpop.f32.mrb[0].mxu0
      %3034 = vmatprep.mubr.bf16.mxu0 0
      %3035 = vmatmul.mubr.bf16.gmra.mrb[0].mxu0 %v868
      %v3036 = vpop.f32.mrb[0].mxu0
      %v3037 = vadd.f32 %v2828, %v3036
      %v3038 = vpop.f32.mrb[0].mxu0
      %v3039 = vpop.f32.mrb[0].mxu0
      %v3040 = vadd.f32 %v2831, %v3039
      %v3041 = vpop.f32.mrb[0].mxu0
      %3042 = vmatprep.mubr.bf16.mxu0 0
      %3043 = vmatmul.mubr.bf16.gmra.mrb[0].mxu0 %v871
      %v3044 = vpop.f32.mrb[0].mxu0
      %v3045 = vadd.f32 %v2836, %v3044
      %v3046 = vpop.f32.mrb[0].mxu0
      %v3047 = vpop.f32.mrb[0].mxu0
      %v3048 = vadd.f32 %v2839, %v3047
      %v3049 = vpop.f32.mrb[0].mxu0
      %3050 = vmatprep.mubr.bf16.mxu0 0
      %3051 = vmatmul.mubr.bf16.gmra.mrb[0].mxu0 %v874
      %v3052 = vpop.f32.mrb[0].mxu0
      %v3053 = vadd.f32 %v2844, %v3052
      %v3054 = vpop.f32.mrb[0].mxu0
      %v3055 = vpop.f32.mrb[0].mxu0
      %v3056 = vadd.f32 %v2847, %v3055
      %v3057 = vpop.f32.mrb[0].mxu0
      %3058 = vmatprep.mubr.bf16.mxu0 0
      %3059 = vmatmul.mubr.bf16.gmra.mrb[0].mxu0 %v877
      %v3060 = vpop.f32.mrb[0].mxu0
      %v3061 = vadd.f32 %v2852, %v3060
      %v3062 = vpop.f32.mrb[0].mxu0
      %v3063 = vpop.f32.mrb[0].mxu0
      %v3064 = vadd.f32 %v2855, %v3063
      %v3065 = vpop.f32.mrb[0].mxu0
      %3066 = vmatprep.mubr.bf16.mxu0 0
      %3067 = vmatmul.mubr.bf16.gmra.mrb[0].mxu0 %v880
      %v3068 = vpop.f32.mrb[0].mxu0
      %v3069 = vadd.f32 %v2860, %v3068
      %v3070 = vpop.f32.mrb[0].mxu0
      %v3071 = vpop.f32.mrb[0].mxu0
      %v3072 = vadd.f32 %v2863, %v3071
      %v3073 = vpop.f32.mrb[0].mxu0
      %3074 = vmatprep.mubr.bf16.mxu0 0
      %3075 = vmatmul.mubr.bf16.gmra.mrb[0].mxu0 %v883
      %v3076 = vpop.f32.mrb[0].mxu0
      %v3077 = vadd.f32 %v2868, %v3076
      %v3078 = vpop.f32.mrb[0].mxu0
      %v3079 = vpop.f32.mrb[0].mxu0
      %v3080 = vadd.f32 %v2871, %v3079
      %v3081 = vpop.f32.mrb[0].mxu0
      %3082 = vmatprep.mubr.bf16.mxu0 0
      %3083 = vmatmul.mubr.bf16.gmra.mrb[0].mxu0 %v886
      %v3084 = vpop.f32.mrb[0].mxu0
      %v3085 = vadd.f32 %v2876, %v3084
      %v3086 = vpop.f32.mrb[0].mxu0
      %v3087 = vpop.f32.mrb[0].mxu0
      %v3088 = vadd.f32 %v2879, %v3087
      %v3089 = vpop.f32.mrb[0].mxu0
      %3090 = vmatprep.mubr.bf16.mxu0 0
      %3091 = vmatmul.mubr.bf16.gmra.mrb[0].mxu0 %v889
      %v3092 = vpop.f32.mrb[0].mxu0
      %v3093 = vadd.f32 %v2884, %v3092
      %v3094 = vpop.f32.mrb[0].mxu0
      %v3095 = vpop.f32.mrb[0].mxu0
      %v3096 = vadd.f32 %v2887, %v3095
      %v3097 = vpop.f32.mrb[0].mxu0
      %3098 = vmatprep.mubr.bf16.mxu0 0
      %3099 = vmatmul.mubr.bf16.gmra.mrb[0].mxu0 %v892
      %v3100 = vpop.f32.mrb[0].mxu0
      %v3101 = vadd.f32 %v2892, %v3100
      %v3102 = vpop.f32.mrb[0].mxu0
      %v3103 = vpop.f32.mrb[0].mxu0
      %v3104 = vadd.f32 %v2895, %v3103
      %v3105 = vpop.f32.mrb[0].mxu0
      %3106 = vmatprep.mubr.bf16.mxu0 0
      %3107 = vmatmul.mubr.bf16.gmra.mrb[0].mxu0 %v1189
      %v3108 = vpop.f32.mrb[0].mxu0
      %v3109 = vadd.f32 %v2900, %v3108
      %v3110 = vpop.f32.mrb[0].mxu0
      %v3111 = vpop.f32.mrb[0].mxu0
      %v3112 = vadd.f32 %v2903, %v3111
      %v3113 = vpop.f32.mrb[0].mxu0
      %3114 = vdwg.mxu0
      %v3115 = vadd.f32 %v2989, %v1705
      %v3116 = vadd.f32 %v2992, %v1705
      %v3117 = vadd.f32 %v2997, %v1705
      %v3118 = vadd.f32 %v3000, %v1705
      %v3119 = vadd.f32 %v3005, %v1705
      %v3120 = vadd.f32 %v3008, %v1705
      %v3121 = vadd.f32 %v3013, %v1705
      %v3122 = vadd.f32 %v3016, %v1705
      %v3123 = vadd.f32 %v3021, %v1705
      %v3124 = vadd.f32 %v3024, %v1705
      %v3125 = vadd.f32 %v3029, %v1705
      %v3126 = vadd.f32 %v3032, %v1705
      %v3127 = vadd.f32 %v3037, %v1705
      %v3128 = vadd.f32 %v3040, %v1705
      %v3129 = vadd.f32 %v3045, %v1705
      %v3130 = vadd.f32 %v3048, %v1705
      %v3131 = vadd.f32 %v3053, %v1705
      %v3132 = vadd.f32 %v3056, %v1705
      %v3133 = vadd.f32 %v3061, %v1705
      %v3134 = vadd.f32 %v3064, %v1705
      %v3135 = vadd.f32 %v3069, %v1705
      %v3136 = vadd.f32 %v3072, %v1705
      %v3137 = vadd.f32 %v3077, %v1705
      %v3138 = vadd.f32 %v3080, %v1705
      %v3139 = vadd.f32 %v3085, %v1705
      %v3140 = vadd.f32 %v3088, %v1705
      %v3141 = vadd.f32 %v3093, %v1705
      %v3142 = vadd.f32 %v3096, %v1705
      %v3143 = vadd.f32 %v3101, %v1705
      %v3144 = vadd.f32 %v3104, %v1705
      %v3145 = vadd.f32 %v3109, %v1705
      %v3146 = vadd.f32 %v3112, %v1705
      %v3147 = vadd.f32 %v3115, %v3116
      %v3148 = vadd.f32 %v3147, %v3117
      %v3149 = vadd.f32 %v3148, %v3118
      %v3150 = vadd.f32 %v3149, %v3119
      %v3151 = vadd.f32 %v3150, %v3120
      %v3152 = vadd.f32 %v3151, %v3121
      %v3153 = vadd.f32 %v3152, %v3122
      %v3154 = vadd.f32 %v3153, %v3123
      %v3155 = vadd.f32 %v3154, %v3124
      %v3156 = vadd.f32 %v3155, %v3125
      %v3157 = vadd.f32 %v3156, %v3126
      %v3158 = vadd.f32 %v3157, %v3127
      %v3159 = vadd.f32 %v3158, %v3128
      %v3160 = vadd.f32 %v3159, %v3129
      %v3161 = vadd.f32 %v3160, %v3130
      %v3162 = vadd.f32 %v3161, %v3131
      %v3163 = vadd.f32 %v3162, %v3132
      %v3164 = vadd.f32 %v3163, %v3133
      %v3165 = vadd.f32 %v3164, %v3134
      %v3166 = vadd.f32 %v3165, %v3135
      %v3167 = vadd.f32 %v3166, %v3136
      %v3168 = vadd.f32 %v3167, %v3137
      %v3169 = vadd.f32 %v3168, %v3138
      %v3170 = vadd.f32 %v3169, %v3139
      %v3171 = vadd.f32 %v3170, %v3140
      %v3172 = vadd.f32 %v3171, %v3141
      %v3173 = vadd.f32 %v3172, %v3142
      %v3174 = vadd.f32 %v3173, %v3143
      %v3175 = vadd.f32 %v3174, %v3144
      %v3176 = vadd.f32 %v3175, %v3145
      %v3177 = vadd.f32 %v3176, %v3146
      %v3178 = vrot.slane %v3177, 4
      %v3179 = vadd.f32 %v3177, %v3178
      %v3180 = vrot.slane %v3179, 2
      %v3181 = vadd.f32 %v3179, %v3180
      %v3182 = vrot.slane %v3181, 1
      %v3183 = vadd.f32 %v3181, %v3182
      %v3184 = vadd.f32 %v2384, %v3183
      %v3185 = vmul.f32 %v3115, %v3115
      %v3186 = vmul.f32 %v3116, %v3116
      %v3187 = vmul.f32 %v3117, %v3117
      %v3188 = vmul.f32 %v3118, %v3118
      %v3189 = vmul.f32 %v3119, %v3119
      %v3190 = vmul.f32 %v3120, %v3120
      %v3191 = vmul.f32 %v3121, %v3121
      %v3192 = vmul.f32 %v3122, %v3122
      %v3193 = vmul.f32 %v3123, %v3123
      %v3194 = vmul.f32 %v3124, %v3124
      %v3195 = vmul.f32 %v3125, %v3125
      %v3196 = vmul.f32 %v3126, %v3126
      %v3197 = vmul.f32 %v3127, %v3127
      %v3198 = vmul.f32 %v3128, %v3128
      %v3199 = vmul.f32 %v3129, %v3129
      %v3200 = vmul.f32 %v3130, %v3130
      %v3201 = vmul.f32 %v3131, %v3131
      %v3202 = vmul.f32 %v3132, %v3132
      %v3203 = vmul.f32 %v3133, %v3133
      %v3204 = vmul.f32 %v3134, %v3134
      %v3205 = vmul.f32 %v3135, %v3135
      %v3206 = vmul.f32 %v3136, %v3136
      %v3207 = vmul.f32 %v3137, %v3137
      %v3208 = vmul.f32 %v3138, %v3138
      %v3209 = vmul.f32 %v3139, %v3139
      %v3210 = vmul.f32 %v3140, %v3140
      %v3211 = vmul.f32 %v3141, %v3141
      %v3212 = vmul.f32 %v3142, %v3142
      %v3213 = vmul.f32 %v3143, %v3143
      %v3214 = vmul.f32 %v3144, %v3144
      %v3215 = vmul.f32 %v3145, %v3145
      %v3216 = vmul.f32 %v3146, %v3146
      %v3217 = vadd.f32 %v3185, %v3186
      %v3218 = vadd.f32 %v3217, %v3187
      %v3219 = vadd.f32 %v3218, %v3188
      %v3220 = vadd.f32 %v3219, %v3189
      %v3221 = vadd.f32 %v3220, %v3190
      %v3222 = vadd.f32 %v3221, %v3191
      %v3223 = vadd.f32 %v3222, %v3192
      %v3224 = vadd.f32 %v3223, %v3193
      %v3225 = vadd.f32 %v3224, %v3194
      %v3226 = vadd.f32 %v3225, %v3195
      %v3227 = vadd.f32 %v3226, %v3196
      %v3228 = vadd.f32 %v3227, %v3197
      %v3229 = vadd.f32 %v3228, %v3198
      %v3230 = vadd.f32 %v3229, %v3199
      %v3231 = vadd.f32 %v3230, %v3200
      %v3232 = vadd.f32 %v3231, %v3201
      %v3233 = vadd.f32 %v3232, %v3202
      %v3234 = vadd.f32 %v3233, %v3203
      %v3235 = vadd.f32 %v3234, %v3204
      %v3236 = vadd.f32 %v3235, %v3205
      %v3237 = vadd.f32 %v3236, %v3206
      %v3238 = vadd.f32 %v3237, %v3207
      %v3239 = vadd.f32 %v3238, %v3208
      %v3240 = vadd.f32 %v3239, %v3209
      %v3241 = vadd.f32 %v3240, %v3210
      %v3242 = vadd.f32 %v3241, %v3211
      %v3243 = vadd.f32 %v3242, %v3212
      %v3244 = vadd.f32 %v3243, %v3213
      %v3245 = vadd.f32 %v3244, %v3214
      %v3246 = vadd.f32 %v3245, %v3215
      %v3247 = vadd.f32 %v3246, %v3216
      %v3248 = vrot.slane %v3247, 4
      %v3249 = vadd.f32 %v3247, %v3248
      %v3250 = vrot.slane %v3249, 2
      %v3251 = vadd.f32 %v3249, %v3250
      %v3252 = vrot.slane %v3251, 1
      %v3253 = vadd.f32 %v3251, %v3252
      %v3254 = vadd.f32 %v2454, %v3253
      %v3255 = vpack.c.bf16 %v3116, %v3115
      %v3256 = vpack.c.bf16 %v3118, %v3117
      %v3257 = vpack.c.bf16 %v3120, %v3119
      %v3258 = vpack.c.bf16 %v3122, %v3121
      %v3259 = vpack.c.bf16 %v3124, %v3123
      %v3260 = vpack.c.bf16 %v3126, %v3125
      %v3261 = vpack.c.bf16 %v3128, %v3127
      %v3262 = vpack.c.bf16 %v3130, %v3129
      %v3263 = vpack.c.bf16 %v3132, %v3131
      %v3264 = vpack.c.bf16 %v3134, %v3133
      %v3265 = vpack.c.bf16 %v3136, %v3135
      %v3266 = vpack.c.bf16 %v3138, %v3137
      %v3267 = vpack.c.bf16 %v3140, %v3139
      %v3268 = vpack.c.bf16 %v3142, %v3141
      %v3269 = vpack.c.bf16 %v3144, %v3143
      %v3270 = vpack.c.bf16 %v3146, %v3145
      %s3271 = scalar_lea.vmem %s3, 384
      %v3272 = vld [vmem:[%s3271] sm:$0xf]
      %v3273 = vld [vmem:[%s3271 + $0x4] sm:$0xf]
      %v3274 = vld [vmem:[%s3271 + $0x8] sm:$0xf]
      %v3275 = vld [vmem:[%s3271 + $0xc] sm:$0xf]
      %v3276 = vld [vmem:[%s3271 + $0x10] sm:$0xf]
      %v3277 = vld [vmem:[%s3271 + $0x14] sm:$0xf]
      %v3278 = vld [vmem:[%s3271 + $0x18] sm:$0xf]
      %v3279 = vld [vmem:[%s3271 + $0x1c] sm:$0xf]
      %v3280 = vld [vmem:[%s3271 + $0x20] sm:$0xf]
      %v3281 = vld [vmem:[%s3271 + $0x24] sm:$0xf]
      %v3282 = vld [vmem:[%s3271 + $0x28] sm:$0xf]
      %v3283 = vld [vmem:[%s3271 + $0x2c] sm:$0xf]
      %v3284 = vld [vmem:[%s3271 + $0x30] sm:$0xf]
      %v3285 = vld [vmem:[%s3271 + $0x34] sm:$0xf]
      %v3286 = vld [vmem:[%s3271 + $0x38] sm:$0xf]
      %v3287 = vld [vmem:[%s3271 + $0x3c] sm:$0xf]
      %s3288 = scalar_lea.vmem %s3, 448
      %v3289 = vld [vmem:[%s3288] sm:$0xf]
      %v3290 = vld [vmem:[%s3288 + $0x4] sm:$0xf]
      %v3291 = vld [vmem:[%s3288 + $0x8] sm:$0xf]
      %v3292 = vld [vmem:[%s3288 + $0xc] sm:$0xf]
      %v3293 = vld [vmem:[%s3288 + $0x10] sm:$0xf]
      %v3294 = vld [vmem:[%s3288 + $0x14] sm:$0xf]
      %v3295 = vld [vmem:[%s3288 + $0x18] sm:$0xf]
      %v3296 = vld [vmem:[%s3288 + $0x1c] sm:$0xf]
      %v3297 = vld [vmem:[%s3288 + $0x20] sm:$0xf]
      %v3298 = vld [vmem:[%s3288 + $0x24] sm:$0xf]
      %v3299 = vld [vmem:[%s3288 + $0x28] sm:$0xf]
      %v3300 = vld [vmem:[%s3288 + $0x2c] sm:$0xf]
      %v3301 = vld [vmem:[%s3288 + $0x30] sm:$0xf]
      %v3302 = vld [vmem:[%s3288 + $0x34] sm:$0xf]
      %v3303 = vld [vmem:[%s3288 + $0x38] sm:$0xf]
      %v3304 = vld [vmem:[%s3288 + $0x3c] sm:$0xf]
      %v3321 = vunpack.c.l.b16 %v3289
      %v3322 = vunpack.c.l.b16 %v3290
      %v3323 = vunpack.c.l.b16 %v3291
      %v3324 = vunpack.c.l.b16 %v3292
      %v3325 = vunpack.c.l.b16 %v3293
      %v3326 = vunpack.c.l.b16 %v3294
      %v3327 = vunpack.c.l.b16 %v3295
      %v3328 = vunpack.c.l.b16 %v3296
      %v3329 = vunpack.c.l.b16 %v3297
      %v3330 = vunpack.c.l.b16 %v3298
      %v3331 = vunpack.c.l.b16 %v3299
      %v3332 = vunpack.c.l.b16 %v3300
      %v3333 = vunpack.c.l.b16 %v3301
      %v3334 = vunpack.c.l.b16 %v3302
      %v3335 = vunpack.c.l.b16 %v3303
      %v3336 = vunpack.c.l.b16 %v3304
      %v3337 = vpack.c.b16 %v3322, %v3321
      %v3338 = vpack.c.b16 %v3324, %v3323
      %v3339 = vpack.c.b16 %v3326, %v3325
      %v3340 = vpack.c.b16 %v3328, %v3327
      %v3341 = vpack.c.b16 %v3330, %v3329
      %v3342 = vpack.c.b16 %v3332, %v3331
      %v3343 = vpack.c.b16 %v3334, %v3333
      %v3344 = vpack.c.b16 %v3336, %v3335
      %3353 = vmatprep.subr.bf16.mxu0 0
      %3354 = vmatpush1.bf16.msra.mxu0 %v3337
      %3355 = vmatprep.subr.bf16.mxu0 0
      %3356 = vmatpush1.bf16.msra.mxu0 %v3338
      %3357 = vmatprep.subr.bf16.mxu0 0
      %3358 = vmatpush1.bf16.msra.mxu0 %v3339
      %3359 = vmatprep.subr.bf16.mxu0 0
      %3360 = vmatpush1.bf16.msra.mxu0 %v3340
      %3361 = vmatprep.subr.bf16.mxu0 0
      %3362 = vmatpush1.bf16.msra.mxu0 %v3341
      %3363 = vmatprep.subr.bf16.mxu0 0
      %3364 = vmatpush1.bf16.msra.mxu0 %v3342
      %3365 = vmatprep.subr.bf16.mxu0 0
      %3366 = vmatpush1.bf16.msra.mxu0 %v3343
      %3367 = vmatprep.subr.bf16.mxu0 0
      %3368 = vmatpush1.bf16.msra.mxu0 %v3344
      %3369 = vmatprep.subr.bf16.mxu0 0
      %3370 = vmatpush1.bf16.msra.mxu0 0
      %3371 = vmatprep.subr.bf16.mxu0 0
      %3372 = vmatpush1.bf16.msra.mxu0 0
      %3373 = vmatprep.subr.bf16.mxu0 0
      %3374 = vmatpush1.bf16.msra.mxu0 0
      %3375 = vmatprep.subr.bf16.mxu0 0
      %3376 = vmatpush1.bf16.msra.mxu0 0
      %3377 = vmatprep.subr.bf16.mxu0 0
      %3378 = vmatpush1.bf16.msra.mxu0 0
      %3379 = vmatprep.subr.bf16.mxu0 0
      %3380 = vmatpush1.bf16.msra.mxu0 0
      %3381 = vmatprep.subr.bf16.mxu0 0
      %3382 = vmatpush1.bf16.msra.mxu0 0
      %3383 = vmatprep.subr.bf16.mxu0 0
      %3384 = vmatpush1.bf16.msra.mxu0 0
      %3385 = vmatprep.mubr.bf16.mxu0 0
      %3386 = vmatmul.mubr.bf16.gmra.mrb[0].mxu0 %v1019
      %v3387 = vpop.f32.mrb[0].mxu0
      %v3388 = vadd.f32 0.0, %v3387
      %v3389 = vpop.f32.mrb[0].mxu0
      %v3390 = vpop.f32.mrb[0].mxu0
      %v3391 = vadd.f32 0.0, %v3390
      %v3392 = vpop.f32.mrb[0].mxu0
      %3393 = vmatprep.mubr.bf16.mxu0 0
      %3394 = vmatmul.mubr.bf16.gmra.mrb[0].mxu0 %v1029
      %v3395 = vpop.f32.mrb[0].mxu0
      %v3396 = vadd.f32 0.0, %v3395
      %v3397 = vpop.f32.mrb[0].mxu0
      %v3398 = vpop.f32.mrb[0].mxu0
      %v3399 = vadd.f32 0.0, %v3398
      %v3400 = vpop.f32.mrb[0].mxu0
      %3401 = vmatprep.mubr.bf16.mxu0 0
      %3402 = vmatmul.mubr.bf16.gmra.mrb[0].mxu0 %v1039
      %v3403 = vpop.f32.mrb[0].mxu0
      %v3404 = vadd.f32 0.0, %v3403
      %v3405 = vpop.f32.mrb[0].mxu0
      %v3406 = vpop.f32.mrb[0].mxu0
      %v3407 = vadd.f32 0.0, %v3406
      %v3408 = vpop.f32.mrb[0].mxu0
      %3409 = vmatprep.mubr.bf16.mxu0 0
      %3410 = vmatmul.mubr.bf16.gmra.mrb[0].mxu0 %v1049
      %v3411 = vpop.f32.mrb[0].mxu0
      %v3412 = vadd.f32 0.0, %v3411
      %v3413 = vpop.f32.mrb[0].mxu0
      %v3414 = vpop.f32.mrb[0].mxu0
      %v3415 = vadd.f32 0.0, %v3414
      %v3416 = vpop.f32.mrb[0].mxu0
      %3417 = vmatprep.mubr.bf16.mxu0 0
      %3418 = vmatmul.mubr.bf16.gmra.mrb[0].mxu0 %v1059
      %v3419 = vpop.f32.mrb[0].mxu0
      %v3420 = vadd.f32 0.0, %v3419
      %v3421 = vpop.f32.mrb[0].mxu0
      %v3422 = vpop.f32.mrb[0].mxu0
      %v3423 = vadd.f32 0.0, %v3422
      %v3424 = vpop.f32.mrb[0].mxu0
      %3425 = vmatprep.mubr.bf16.mxu0 0
      %3426 = vmatmul.mubr.bf16.gmra.mrb[0].mxu0 %v1069
      %v3427 = vpop.f32.mrb[0].mxu0
      %v3428 = vadd.f32 0.0, %v3427
      %v3429 = vpop.f32.mrb[0].mxu0
      %v3430 = vpop.f32.mrb[0].mxu0
      %v3431 = vadd.f32 0.0, %v3430
      %v3432 = vpop.f32.mrb[0].mxu0
      %3433 = vmatprep.mubr.bf16.mxu0 0
      %3434 = vmatmul.mubr.bf16.gmra.mrb[0].mxu0 %v1079
      %v3435 = vpop.f32.mrb[0].mxu0
      %v3436 = vadd.f32 0.0, %v3435
      %v3437 = vpop.f32.mrb[0].mxu0
      %v3438 = vpop.f32.mrb[0].mxu0
      %v3439 = vadd.f32 0.0, %v3438
      %v3440 = vpop.f32.mrb[0].mxu0
      %3441 = vmatprep.mubr.bf16.mxu0 0
      %3442 = vmatmul.mubr.bf16.gmra.mrb[0].mxu0 %v1089
      %v3443 = vpop.f32.mrb[0].mxu0
      %v3444 = vadd.f32 0.0, %v3443
      %v3445 = vpop.f32.mrb[0].mxu0
      %v3446 = vpop.f32.mrb[0].mxu0
      %v3447 = vadd.f32 0.0, %v3446
      %v3448 = vpop.f32.mrb[0].mxu0
      %3449 = vmatprep.mubr.bf16.mxu0 0
      %3450 = vmatmul.mubr.bf16.gmra.mrb[0].mxu0 %v1099
      %v3451 = vpop.f32.mrb[0].mxu0
      %v3452 = vadd.f32 0.0, %v3451
      %v3453 = vpop.f32.mrb[0].mxu0
      %v3454 = vpop.f32.mrb[0].mxu0
      %v3455 = vadd.f32 0.0, %v3454
      %v3456 = vpop.f32.mrb[0].mxu0
      %3457 = vmatprep.mubr.bf16.mxu0 0
      %3458 = vmatmul.mubr.bf16.gmra.mrb[0].mxu0 %v1109
      %v3459 = vpop.f32.mrb[0].mxu0
      %v3460 = vadd.f32 0.0, %v3459
      %v3461 = vpop.f32.mrb[0].mxu0
      %v3462 = vpop.f32.mrb[0].mxu0
      %v3463 = vadd.f32 0.0, %v3462
      %v3464 = vpop.f32.mrb[0].mxu0
      %3465 = vmatprep.mubr.bf16.mxu0 0
      %3466 = vmatmul.mubr.bf16.gmra.mrb[0].mxu0 %v1119
      %v3467 = vpop.f32.mrb[0].mxu0
      %v3468 = vadd.f32 0.0, %v3467
      %v3469 = vpop.f32.mrb[0].mxu0
      %v3470 = vpop.f32.mrb[0].mxu0
      %v3471 = vadd.f32 0.0, %v3470
      %v3472 = vpop.f32.mrb[0].mxu0
      %3473 = vmatprep.mubr.bf16.mxu0 0
      %3474 = vmatmul.mubr.bf16.gmra.mrb[0].mxu0 %v1129
      %v3475 = vpop.f32.mrb[0].mxu0
      %v3476 = vadd.f32 0.0, %v3475
      %v3477 = vpop.f32.mrb[0].mxu0
      %v3478 = vpop.f32.mrb[0].mxu0
      %v3479 = vadd.f32 0.0, %v3478
      %v3480 = vpop.f32.mrb[0].mxu0
      %3481 = vmatprep.mubr.bf16.mxu0 0
      %3482 = vmatmul.mubr.bf16.gmra.mrb[0].mxu0 %v1139
      %v3483 = vpop.f32.mrb[0].mxu0
      %v3484 = vadd.f32 0.0, %v3483
      %v3485 = vpop.f32.mrb[0].mxu0
      %v3486 = vpop.f32.mrb[0].mxu0
      %v3487 = vadd.f32 0.0, %v3486
      %v3488 = vpop.f32.mrb[0].mxu0
      %3489 = vmatprep.mubr.bf16.mxu0 0
      %3490 = vmatmul.mubr.bf16.gmra.mrb[0].mxu0 %v1149
      %v3491 = vpop.f32.mrb[0].mxu0
      %v3492 = vadd.f32 0.0, %v3491
      %v3493 = vpop.f32.mrb[0].mxu0
      %v3494 = vpop.f32.mrb[0].mxu0
      %v3495 = vadd.f32 0.0, %v3494
      %v3496 = vpop.f32.mrb[0].mxu0
      %3497 = vmatprep.mubr.bf16.mxu0 0
      %3498 = vmatmul.mubr.bf16.gmra.mrb[0].mxu0 %v1206
      %v3499 = vpop.f32.mrb[0].mxu0
      %v3500 = vadd.f32 0.0, %v3499
      %v3501 = vpop.f32.mrb[0].mxu0
      %v3502 = vpop.f32.mrb[0].mxu0
      %v3503 = vadd.f32 0.0, %v3502
      %v3504 = vpop.f32.mrb[0].mxu0
      %3505 = vmatprep.mubr.bf16.mxu0 0
      %3506 = vmatmul.mubr.bf16.gmra.mrb[0].mxu0 %v1248
      %v3507 = vpop.f32.mrb[0].mxu0
      %v3508 = vadd.f32 0.0, %v3507
      %v3509 = vpop.f32.mrb[0].mxu0
      %v3510 = vpop.f32.mrb[0].mxu0
      %v3511 = vadd.f32 0.0, %v3510
      %v3512 = vpop.f32.mrb[0].mxu0
      %3513 = vdwg.mxu0
      %v3530 = vunpack.c.l.b16 %v3272
      %v3531 = vunpack.c.l.b16 %v3273
      %v3532 = vunpack.c.l.b16 %v3274
      %v3533 = vunpack.c.l.b16 %v3275
      %v3534 = vunpack.c.l.b16 %v3276
      %v3535 = vunpack.c.l.b16 %v3277
      %v3536 = vunpack.c.l.b16 %v3278
      %v3537 = vunpack.c.l.b16 %v3279
      %v3538 = vunpack.c.l.b16 %v3280
      %v3539 = vunpack.c.l.b16 %v3281
      %v3540 = vunpack.c.l.b16 %v3282
      %v3541 = vunpack.c.l.b16 %v3283
      %v3542 = vunpack.c.l.b16 %v3284
      %v3543 = vunpack.c.l.b16 %v3285
      %v3544 = vunpack.c.l.b16 %v3286
      %v3545 = vunpack.c.l.b16 %v3287
      %v3546 = vpack.c.b16 %v3531, %v3530
      %v3547 = vpack.c.b16 %v3533, %v3532
      %v3548 = vpack.c.b16 %v3535, %v3534
      %v3549 = vpack.c.b16 %v3537, %v3536
      %v3550 = vpack.c.b16 %v3539, %v3538
      %v3551 = vpack.c.b16 %v3541, %v3540
      %v3552 = vpack.c.b16 %v3543, %v3542
      %v3553 = vpack.c.b16 %v3545, %v3544
      %3562 = vmatprep.subr.bf16.mxu0 0
      %3563 = vmatpush1.bf16.msra.mxu0 %v3546
      %3564 = vmatprep.subr.bf16.mxu0 0
      %3565 = vmatpush1.bf16.msra.mxu0 %v3547
      %3566 = vmatprep.subr.bf16.mxu0 0
      %3567 = vmatpush1.bf16.msra.mxu0 %v3548
      %3568 = vmatprep.subr.bf16.mxu0 0
      %3569 = vmatpush1.bf16.msra.mxu0 %v3549
      %3570 = vmatprep.subr.bf16.mxu0 0
      %3571 = vmatpush1.bf16.msra.mxu0 %v3550
      %3572 = vmatprep.subr.bf16.mxu0 0
      %3573 = vmatpush1.bf16.msra.mxu0 %v3551
      %3574 = vmatprep.subr.bf16.mxu0 0
      %3575 = vmatpush1.bf16.msra.mxu0 %v3552
      %3576 = vmatprep.subr.bf16.mxu0 0
      %3577 = vmatpush1.bf16.msra.mxu0 %v3553
      %3578 = vmatprep.subr.bf16.mxu0 0
      %3579 = vmatpush1.bf16.msra.mxu0 0
      %3580 = vmatprep.subr.bf16.mxu0 0
      %3581 = vmatpush1.bf16.msra.mxu0 0
      %3582 = vmatprep.subr.bf16.mxu0 0
      %3583 = vmatpush1.bf16.msra.mxu0 0
      %3584 = vmatprep.subr.bf16.mxu0 0
      %3585 = vmatpush1.bf16.msra.mxu0 0
      %3586 = vmatprep.subr.bf16.mxu0 0
      %3587 = vmatpush1.bf16.msra.mxu0 0
      %3588 = vmatprep.subr.bf16.mxu0 0
      %3589 = vmatpush1.bf16.msra.mxu0 0
      %3590 = vmatprep.subr.bf16.mxu0 0
      %3591 = vmatpush1.bf16.msra.mxu0 0
      %3592 = vmatprep.subr.bf16.mxu0 0
      %3593 = vmatpush1.bf16.msra.mxu0 0
      %3594 = vmatprep.mubr.bf16.mxu0 0
      %3595 = vmatmul.mubr.bf16.gmra.mrb[0].mxu0 %v1009
      %v3596 = vpop.f32.mrb[0].mxu0
      %v3597 = vadd.f32 %v3388, %v3596
      %v3598 = vpop.f32.mrb[0].mxu0
      %v3599 = vpop.f32.mrb[0].mxu0
      %v3600 = vadd.f32 %v3391, %v3599
      %v3601 = vpop.f32.mrb[0].mxu0
      %3602 = vmatprep.mubr.bf16.mxu0 0
      %3603 = vmatmul.mubr.bf16.gmra.mrb[0].mxu0 %v1019
      %v3604 = vpop.f32.mrb[0].mxu0
      %v3605 = vadd.f32 %v3396, %v3604
      %v3606 = vpop.f32.mrb[0].mxu0
      %v3607 = vpop.f32.mrb[0].mxu0
      %v3608 = vadd.f32 %v3399, %v3607
      %v3609 = vpop.f32.mrb[0].mxu0
      %3610 = vmatprep.mubr.bf16.mxu0 0
      %3611 = vmatmul.mubr.bf16.gmra.mrb[0].mxu0 %v1029
      %v3612 = vpop.f32.mrb[0].mxu0
      %v3613 = vadd.f32 %v3404, %v3612
      %v3614 = vpop.f32.mrb[0].mxu0
      %v3615 = vpop.f32.mrb[0].mxu0
      %v3616 = vadd.f32 %v3407, %v3615
      %v3617 = vpop.f32.mrb[0].mxu0
      %3618 = vmatprep.mubr.bf16.mxu0 0
      %3619 = vmatmul.mubr.bf16.gmra.mrb[0].mxu0 %v1039
      %v3620 = vpop.f32.mrb[0].mxu0
      %v3621 = vadd.f32 %v3412, %v3620
      %v3622 = vpop.f32.mrb[0].mxu0
      %v3623 = vpop.f32.mrb[0].mxu0
      %v3624 = vadd.f32 %v3415, %v3623
      %v3625 = vpop.f32.mrb[0].mxu0
      %3626 = vmatprep.mubr.bf16.mxu0 0
      %3627 = vmatmul.mubr.bf16.gmra.mrb[0].mxu0 %v1049
      %v3628 = vpop.f32.mrb[0].mxu0
      %v3629 = vadd.f32 %v3420, %v3628
      %v3630 = vpop.f32.mrb[0].mxu0
      %v3631 = vpop.f32.mrb[0].mxu0
      %v3632 = vadd.f32 %v3423, %v3631
      %v3633 = vpop.f32.mrb[0].mxu0
      %3634 = vmatprep.mubr.bf16.mxu0 0
      %3635 = vmatmul.mubr.bf16.gmra.mrb[0].mxu0 %v1059
      %v3636 = vpop.f32.mrb[0].mxu0
      %v3637 = vadd.f32 %v3428, %v3636
      %v3638 = vpop.f32.mrb[0].mxu0
      %v3639 = vpop.f32.mrb[0].mxu0
      %v3640 = vadd.f32 %v3431, %v3639
      %v3641 = vpop.f32.mrb[0].mxu0
      %3642 = vmatprep.mubr.bf16.mxu0 0
      %3643 = vmatmul.mubr.bf16.gmra.mrb[0].mxu0 %v1069
      %v3644 = vpop.f32.mrb[0].mxu0
      %v3645 = vadd.f32 %v3436, %v3644
      %v3646 = vpop.f32.mrb[0].mxu0
      %v3647 = vpop.f32.mrb[0].mxu0
      %v3648 = vadd.f32 %v3439, %v3647
      %v3649 = vpop.f32.mrb[0].mxu0
      %3650 = vmatprep.mubr.bf16.mxu0 0
      %3651 = vmatmul.mubr.bf16.gmra.mrb[0].mxu0 %v1079
      %v3652 = vpop.f32.mrb[0].mxu0
      %v3653 = vadd.f32 %v3444, %v3652
      %v3654 = vpop.f32.mrb[0].mxu0
      %v3655 = vpop.f32.mrb[0].mxu0
      %v3656 = vadd.f32 %v3447, %v3655
      %v3657 = vpop.f32.mrb[0].mxu0
      %3658 = vmatprep.mubr.bf16.mxu0 0
      %3659 = vmatmul.mubr.bf16.gmra.mrb[0].mxu0 %v1089
      %v3660 = vpop.f32.mrb[0].mxu0
      %v3661 = vadd.f32 %v3452, %v3660
      %v3662 = vpop.f32.mrb[0].mxu0
      %v3663 = vpop.f32.mrb[0].mxu0
      %v3664 = vadd.f32 %v3455, %v3663
      %v3665 = vpop.f32.mrb[0].mxu0
      %3666 = vmatprep.mubr.bf16.mxu0 0
      %3667 = vmatmul.mubr.bf16.gmra.mrb[0].mxu0 %v1099
      %v3668 = vpop.f32.mrb[0].mxu0
      %v3669 = vadd.f32 %v3460, %v3668
      %v3670 = vpop.f32.mrb[0].mxu0
      %v3671 = vpop.f32.mrb[0].mxu0
      %v3672 = vadd.f32 %v3463, %v3671
      %v3673 = vpop.f32.mrb[0].mxu0
      %3674 = vmatprep.mubr.bf16.mxu0 0
      %3675 = vmatmul.mubr.bf16.gmra.mrb[0].mxu0 %v1109
      %v3676 = vpop.f32.mrb[0].mxu0
      %v3677 = vadd.f32 %v3468, %v3676
      %v3678 = vpop.f32.mrb[0].mxu0
      %v3679 = vpop.f32.mrb[0].mxu0
      %v3680 = vadd.f32 %v3471, %v3679
      %v3681 = vpop.f32.mrb[0].mxu0
      %3682 = vmatprep.mubr.bf16.mxu0 0
      %3683 = vmatmul.mubr.bf16.gmra.mrb[0].mxu0 %v1119
      %v3684 = vpop.f32.mrb[0].mxu0
      %v3685 = vadd.f32 %v3476, %v3684
      %v3686 = vpop.f32.mrb[0].mxu0
      %v3687 = vpop.f32.mrb[0].mxu0
      %v3688 = vadd.f32 %v3479, %v3687
      %v3689 = vpop.f32.mrb[0].mxu0
      %3690 = vmatprep.mubr.bf16.mxu0 0
      %3691 = vmatmul.mubr.bf16.gmra.mrb[0].mxu0 %v1129
      %v3692 = vpop.f32.mrb[0].mxu0
      %v3693 = vadd.f32 %v3484, %v3692
      %v3694 = vpop.f32.mrb[0].mxu0
      %v3695 = vpop.f32.mrb[0].mxu0
      %v3696 = vadd.f32 %v3487, %v3695
      %v3697 = vpop.f32.mrb[0].mxu0
      %3698 = vmatprep.mubr.bf16.mxu0 0
      %3699 = vmatmul.mubr.bf16.gmra.mrb[0].mxu0 %v1139
      %v3700 = vpop.f32.mrb[0].mxu0
      %v3701 = vadd.f32 %v3492, %v3700
      %v3702 = vpop.f32.mrb[0].mxu0
      %v3703 = vpop.f32.mrb[0].mxu0
      %v3704 = vadd.f32 %v3495, %v3703
      %v3705 = vpop.f32.mrb[0].mxu0
      %3706 = vmatprep.mubr.bf16.mxu0 0
      %3707 = vmatmul.mubr.bf16.gmra.mrb[0].mxu0 %v1149
      %v3708 = vpop.f32.mrb[0].mxu0
      %v3709 = vadd.f32 %v3500, %v3708
      %v3710 = vpop.f32.mrb[0].mxu0
      %v3711 = vpop.f32.mrb[0].mxu0
      %v3712 = vadd.f32 %v3503, %v3711
      %v3713 = vpop.f32.mrb[0].mxu0
      %3714 = vmatprep.mubr.bf16.mxu0 0
      %3715 = vmatmul.mubr.bf16.gmra.mrb[0].mxu0 %v1206
      %v3716 = vpop.f32.mrb[0].mxu0
      %v3717 = vadd.f32 %v3508, %v3716
      %v3718 = vpop.f32.mrb[0].mxu0
      %v3719 = vpop.f32.mrb[0].mxu0
      %v3720 = vadd.f32 %v3511, %v3719
      %v3721 = vpop.f32.mrb[0].mxu0
      %3722 = vdwg.mxu0
      %v3723 = vadd.f32 %v3597, %v1705
      %v3724 = vadd.f32 %v3600, %v1705
      %v3725 = vadd.f32 %v3605, %v1705
      %v3726 = vadd.f32 %v3608, %v1705
      %v3727 = vadd.f32 %v3613, %v1705
      %v3728 = vadd.f32 %v3616, %v1705
      %v3729 = vadd.f32 %v3621, %v1705
      %v3730 = vadd.f32 %v3624, %v1705
      %v3731 = vadd.f32 %v3629, %v1705
      %v3732 = vadd.f32 %v3632, %v1705
      %v3733 = vadd.f32 %v3637, %v1705
      %v3734 = vadd.f32 %v3640, %v1705
      %v3735 = vadd.f32 %v3645, %v1705
      %v3736 = vadd.f32 %v3648, %v1705
      %v3737 = vadd.f32 %v3653, %v1705
      %v3738 = vadd.f32 %v3656, %v1705
      %v3739 = vadd.f32 %v3661, %v1705
      %v3740 = vadd.f32 %v3664, %v1705
      %v3741 = vadd.f32 %v3669, %v1705
      %v3742 = vadd.f32 %v3672, %v1705
      %v3743 = vadd.f32 %v3677, %v1705
      %v3744 = vadd.f32 %v3680, %v1705
      %v3745 = vadd.f32 %v3685, %v1705
      %v3746 = vadd.f32 %v3688, %v1705
      %v3747 = vadd.f32 %v3693, %v1705
      %v3748 = vadd.f32 %v3696, %v1705
      %v3749 = vadd.f32 %v3701, %v1705
      %v3750 = vadd.f32 %v3704, %v1705
      %v3751 = vadd.f32 %v3709, %v1705
      %v3752 = vadd.f32 %v3712, %v1705
      %v3753 = vadd.f32 %v3717, %v1705
      %v3754 = vadd.f32 %v3720, %v1705
      %v3755 = vadd.f32 %v3723, %v3724
      %v3756 = vadd.f32 %v3755, %v3725
      %v3757 = vadd.f32 %v3756, %v3726
      %v3758 = vadd.f32 %v3757, %v3727
      %v3759 = vadd.f32 %v3758, %v3728
      %v3760 = vadd.f32 %v3759, %v3729
      %v3761 = vadd.f32 %v3760, %v3730
      %v3762 = vadd.f32 %v3761, %v3731
      %v3763 = vadd.f32 %v3762, %v3732
      %v3764 = vadd.f32 %v3763, %v3733
      %v3765 = vadd.f32 %v3764, %v3734
      %v3766 = vadd.f32 %v3765, %v3735
      %v3767 = vadd.f32 %v3766, %v3736
      %v3768 = vadd.f32 %v3767, %v3737
      %v3769 = vadd.f32 %v3768, %v3738
      %v3770 = vadd.f32 %v3769, %v3739
      %v3771 = vadd.f32 %v3770, %v3740
      %v3772 = vadd.f32 %v3771, %v3741
      %v3773 = vadd.f32 %v3772, %v3742
      %v3774 = vadd.f32 %v3773, %v3743
      %v3775 = vadd.f32 %v3774, %v3744
      %v3776 = vadd.f32 %v3775, %v3745
      %v3777 = vadd.f32 %v3776, %v3746
      %v3778 = vadd.f32 %v3777, %v3747
      %v3779 = vadd.f32 %v3778, %v3748
      %v3780 = vadd.f32 %v3779, %v3749
      %v3781 = vadd.f32 %v3780, %v3750
      %v3782 = vadd.f32 %v3781, %v3751
      %v3783 = vadd.f32 %v3782, %v3752
      %v3784 = vadd.f32 %v3783, %v3753
      %v3785 = vadd.f32 %v3784, %v3754
      %v3786 = vrot.slane %v3785, 4
      %v3787 = vadd.f32 %v3785, %v3786
      %v3788 = vrot.slane %v3787, 2
      %v3789 = vadd.f32 %v3787, %v3788
      %v3790 = vrot.slane %v3789, 1
      %v3791 = vadd.f32 %v3789, %v3790
      %v3792 = vadd.f32 %v3184, %v3791
      %v3793 = vmul.f32 %v3723, %v3723
      %v3794 = vmul.f32 %v3724, %v3724
      %v3795 = vmul.f32 %v3725, %v3725
      %v3796 = vmul.f32 %v3726, %v3726
      %v3797 = vmul.f32 %v3727, %v3727
      %v3798 = vmul.f32 %v3728, %v3728
      %v3799 = vmul.f32 %v3729, %v3729
      %v3800 = vmul.f32 %v3730, %v3730
      %v3801 = vmul.f32 %v3731, %v3731
      %v3802 = vmul.f32 %v3732, %v3732
      %v3803 = vmul.f32 %v3733, %v3733
      %v3804 = vmul.f32 %v3734, %v3734
      %v3805 = vmul.f32 %v3735, %v3735
      %v3806 = vmul.f32 %v3736, %v3736
      %v3807 = vmul.f32 %v3737, %v3737
      %v3808 = vmul.f32 %v3738, %v3738
      %v3809 = vmul.f32 %v3739, %v3739
      %v3810 = vmul.f32 %v3740, %v3740
      %v3811 = vmul.f32 %v3741, %v3741
      %v3812 = vmul.f32 %v3742, %v3742
      %v3813 = vmul.f32 %v3743, %v3743
      %v3814 = vmul.f32 %v3744, %v3744
      %v3815 = vmul.f32 %v3745, %v3745
      %v3816 = vmul.f32 %v3746, %v3746
      %v3817 = vmul.f32 %v3747, %v3747
      %v3818 = vmul.f32 %v3748, %v3748
      %v3819 = vmul.f32 %v3749, %v3749
      %v3820 = vmul.f32 %v3750, %v3750
      %v3821 = vmul.f32 %v3751, %v3751
      %v3822 = vmul.f32 %v3752, %v3752
      %v3823 = vmul.f32 %v3753, %v3753
      %v3824 = vmul.f32 %v3754, %v3754
      %v3825 = vadd.f32 %v3793, %v3794
      %v3826 = vadd.f32 %v3825, %v3795
      %v3827 = vadd.f32 %v3826, %v3796
      %v3828 = vadd.f32 %v3827, %v3797
      %v3829 = vadd.f32 %v3828, %v3798
      %v3830 = vadd.f32 %v3829, %v3799
      %v3831 = vadd.f32 %v3830, %v3800
      %v3832 = vadd.f32 %v3831, %v3801
      %v3833 = vadd.f32 %v3832, %v3802
      %v3834 = vadd.f32 %v3833, %v3803
      %v3835 = vadd.f32 %v3834, %v3804
      %v3836 = vadd.f32 %v3835, %v3805
      %v3837 = vadd.f32 %v3836, %v3806
      %v3838 = vadd.f32 %v3837, %v3807
      %v3839 = vadd.f32 %v3838, %v3808
      %v3840 = vadd.f32 %v3839, %v3809
      %v3841 = vadd.f32 %v3840, %v3810
      %v3842 = vadd.f32 %v3841, %v3811
      %v3843 = vadd.f32 %v3842, %v3812
      %v3844 = vadd.f32 %v3843, %v3813
      %v3845 = vadd.f32 %v3844, %v3814
      %v3846 = vadd.f32 %v3845, %v3815
      %v3847 = vadd.f32 %v3846, %v3816
      %v3848 = vadd.f32 %v3847, %v3817
      %v3849 = vadd.f32 %v3848, %v3818
      %v3850 = vadd.f32 %v3849, %v3819
      %v3851 = vadd.f32 %v3850, %v3820
      %v3852 = vadd.f32 %v3851, %v3821
      %v3853 = vadd.f32 %v3852, %v3822
      %v3854 = vadd.f32 %v3853, %v3823
      %v3855 = vadd.f32 %v3854, %v3824
      %v3856 = vrot.slane %v3855, 4
      %v3857 = vadd.f32 %v3855, %v3856
      %v3858 = vrot.slane %v3857, 2
      %v3859 = vadd.f32 %v3857, %v3858
      %v3860 = vrot.slane %v3859, 1
      %v3861 = vadd.f32 %v3859, %v3860
      %v3862 = vadd.f32 %v3254, %v3861
      %v3863 = vpack.c.bf16 %v3724, %v3723
      %v3864 = vpack.c.bf16 %v3726, %v3725
      %v3865 = vpack.c.bf16 %v3728, %v3727
      %v3866 = vpack.c.bf16 %v3730, %v3729
      %v3867 = vpack.c.bf16 %v3732, %v3731
      %v3868 = vpack.c.bf16 %v3734, %v3733
      %v3869 = vpack.c.bf16 %v3736, %v3735
      %v3870 = vpack.c.bf16 %v3738, %v3737
      %v3871 = vpack.c.bf16 %v3740, %v3739
      %v3872 = vpack.c.bf16 %v3742, %v3741
      %v3873 = vpack.c.bf16 %v3744, %v3743
      %v3874 = vpack.c.bf16 %v3746, %v3745
      %v3875 = vpack.c.bf16 %v3748, %v3747
      %v3876 = vpack.c.bf16 %v3750, %v3749
      %v3877 = vpack.c.bf16 %v3752, %v3751
      %v3878 = vpack.c.bf16 %v3754, %v3753
      %v3911 = vunpack.c.l.b16 %v3255
      %v3912 = vunpack.c.l.b16 %v3863
      %v3913 = vunpack.c.h.b16 %v3255
      %v3914 = vunpack.c.h.b16 %v3863
      %v3915 = vunpack.c.l.b16 %v3256
      %v3916 = vunpack.c.l.b16 %v3864
      %v3917 = vunpack.c.h.b16 %v3256
      %v3918 = vunpack.c.h.b16 %v3864
      %v3919 = vunpack.c.l.b16 %v3257
      %v3920 = vunpack.c.l.b16 %v3865
      %v3921 = vunpack.c.h.b16 %v3257
      %v3922 = vunpack.c.h.b16 %v3865
      %v3923 = vunpack.c.l.b16 %v3258
      %v3924 = vunpack.c.l.b16 %v3866
      %v3925 = vunpack.c.h.b16 %v3258
      %v3926 = vunpack.c.h.b16 %v3866
      %v3927 = vunpack.c.l.b16 %v3259
      %v3928 = vunpack.c.l.b16 %v3867
      %v3929 = vunpack.c.h.b16 %v3259
      %v3930 = vunpack.c.h.b16 %v3867
      %v3931 = vunpack.c.l.b16 %v3260
      %v3932 = vunpack.c.l.b16 %v3868
      %v3933 = vunpack.c.h.b16 %v3260
      %v3934 = vunpack.c.h.b16 %v3868
      %v3935 = vunpack.c.l.b16 %v3261
      %v3936 = vunpack.c.l.b16 %v3869
      %v3937 = vunpack.c.h.b16 %v3261
      %v3938 = vunpack.c.h.b16 %v3869
      %v3939 = vunpack.c.l.b16 %v3262
      %v3940 = vunpack.c.l.b16 %v3870
      %v3941 = vunpack.c.h.b16 %v3262
      %v3942 = vunpack.c.h.b16 %v3870
      %v3943 = vunpack.c.l.b16 %v3263
      %v3944 = vunpack.c.l.b16 %v3871
      %v3945 = vunpack.c.h.b16 %v3263
      %v3946 = vunpack.c.h.b16 %v3871
      %v3947 = vunpack.c.l.b16 %v3264
      %v3948 = vunpack.c.l.b16 %v3872
      %v3949 = vunpack.c.h.b16 %v3264
      %v3950 = vunpack.c.h.b16 %v3872
      %v3951 = vunpack.c.l.b16 %v3265
      %v3952 = vunpack.c.l.b16 %v3873
      %v3953 = vunpack.c.h.b16 %v3265
      %v3954 = vunpack.c.h.b16 %v3873
      %v3955 = vunpack.c.l.b16 %v3266
      %v3956 = vunpack.c.l.b16 %v3874
      %v3957 = vunpack.c.h.b16 %v3266
      %v3958 = vunpack.c.h.b16 %v3874
      %v3959 = vunpack.c.l.b16 %v3267
      %v3960 = vunpack.c.l.b16 %v3875
      %v3961 = vunpack.c.h.b16 %v3267
      %v3962 = vunpack.c.h.b16 %v3875
      %v3963 = vunpack.c.l.b16 %v3268
      %v3964 = vunpack.c.l.b16 %v3876
      %v3965 = vunpack.c.h.b16 %v3268
      %v3966 = vunpack.c.h.b16 %v3876
      %v3967 = vunpack.c.l.b16 %v3269
      %v3968 = vunpack.c.l.b16 %v3877
      %v3969 = vunpack.c.h.b16 %v3269
      %v3970 = vunpack.c.h.b16 %v3877
      %v3971 = vunpack.c.l.b16 %v3270
      %v3972 = vunpack.c.l.b16 %v3878
      %v3973 = vunpack.c.h.b16 %v3270
      %v3974 = vunpack.c.h.b16 %v3878
      %v3975 = vpack.c.b16 %v3912, %v3911
      %v3976 = vpack.c.b16 %v3914, %v3913
      %v3977 = vpack.c.b16 %v3916, %v3915
      %v3978 = vpack.c.b16 %v3918, %v3917
      %v3979 = vpack.c.b16 %v3920, %v3919
      %v3980 = vpack.c.b16 %v3922, %v3921
      %v3981 = vpack.c.b16 %v3924, %v3923
      %v3982 = vpack.c.b16 %v3926, %v3925
      %v3983 = vpack.c.b16 %v3928, %v3927
      %v3984 = vpack.c.b16 %v3930, %v3929
      %v3985 = vpack.c.b16 %v3932, %v3931
      %v3986 = vpack.c.b16 %v3934, %v3933
      %v3987 = vpack.c.b16 %v3936, %v3935
      %v3988 = vpack.c.b16 %v3938, %v3937
      %v3989 = vpack.c.b16 %v3940, %v3939
      %v3990 = vpack.c.b16 %v3942, %v3941
      %v3991 = vpack.c.b16 %v3944, %v3943
      %v3992 = vpack.c.b16 %v3946, %v3945
      %v3993 = vpack.c.b16 %v3948, %v3947
      %v3994 = vpack.c.b16 %v3950, %v3949
      %v3995 = vpack.c.b16 %v3952, %v3951
      %v3996 = vpack.c.b16 %v3954, %v3953
      %v3997 = vpack.c.b16 %v3956, %v3955
      %v3998 = vpack.c.b16 %v3958, %v3957
      %v3999 = vpack.c.b16 %v3960, %v3959
      %v4000 = vpack.c.b16 %v3962, %v3961
      %v4001 = vpack.c.b16 %v3964, %v3963
      %v4002 = vpack.c.b16 %v3966, %v3965
      %v4003 = vpack.c.b16 %v3968, %v3967
      %v4004 = vpack.c.b16 %v3970, %v3969
      %v4005 = vpack.c.b16 %v3972, %v3971
      %v4006 = vpack.c.b16 %v3974, %v3973
      %s4039 = scalar_lea.vmem %s427, 16
      %4040 = vst [vmem:[%s4039] sm:$0xff] %v3975
      %4041 = vst [vmem:[%s4039 + $0x8] sm:$0xff] %v3976
      %4042 = vst [vmem:[%s4039 + $0x20] sm:$0xff] %v3977
      %4043 = vst [vmem:[%s4039 + $0x28] sm:$0xff] %v3978
      %4044 = vst [vmem:[%s4039 + $0x40] sm:$0xff] %v3979
      %4045 = vst [vmem:[%s4039 + $0x48] sm:$0xff] %v3980
      %4046 = vst [vmem:[%s4039 + $0x60] sm:$0xff] %v3981
      %4047 = vst [vmem:[%s4039 + $0x68] sm:$0xff] %v3982
      %4048 = vst [vmem:[%s4039 + $0x80] sm:$0xff] %v3983
      %4049 = vst [vmem:[%s4039 + $0x88] sm:$0xff] %v3984
      %4050 = vst [vmem:[%s4039 + $0xa0] sm:$0xff] %v3985
      %4051 = vst [vmem:[%s4039 + $0xa8] sm:$0xff] %v3986
      %4052 = vst [vmem:[%s4039 + $0xc0] sm:$0xff] %v3987
      %4053 = vst [vmem:[%s4039 + $0xc8] sm:$0xff] %v3988
      %4054 = vst [vmem:[%s4039 + $0xe0] sm:$0xff] %v3989
      %4055 = vst [vmem:[%s4039 + $0xe8] sm:$0xff] %v3990
      %4056 = vst [vmem:[%s4039 + $0x100] sm:$0xff] %v3991
      %4057 = vst [vmem:[%s4039 + $0x108] sm:$0xff] %v3992
      %4058 = vst [vmem:[%s4039 + $0x120] sm:$0xff] %v3993
      %4059 = vst [vmem:[%s4039 + $0x128] sm:$0xff] %v3994
      %4060 = vst [vmem:[%s4039 + $0x140] sm:$0xff] %v3995
      %4061 = vst [vmem:[%s4039 + $0x148] sm:$0xff] %v3996
      %4062 = vst [vmem:[%s4039 + $0x160] sm:$0xff] %v3997
      %4063 = vst [vmem:[%s4039 + $0x168] sm:$0xff] %v3998
      %4064 = vst [vmem:[%s4039 + $0x180] sm:$0xff] %v3999
      %4065 = vst [vmem:[%s4039 + $0x188] sm:$0xff] %v4000
      %4066 = vst [vmem:[%s4039 + $0x1a0] sm:$0xff] %v4001
      %4067 = vst [vmem:[%s4039 + $0x1a8] sm:$0xff] %v4002
      %4068 = vst [vmem:[%s4039 + $0x1c0] sm:$0xff] %v4003
      %4069 = vst [vmem:[%s4039 + $0x1c8] sm:$0xff] %v4004
      %4070 = vst [vmem:[%s4039 + $0x1e0] sm:$0xff] %v4005
      %4071 = vst [vmem:[%s4039 + $0x1e8] sm:$0xff] %v4006
      %vm4072 = vcmask 1040384
      %v4073 = vsel %vm4072, %v3792, %v3862
      %4074 = vst [vmem:[%s435] sm:$0x3] %v4073
      %s4075 = smul.u32 16, %s23
      %p4076 = scmp.lt.s32.totalorder %s22, 1
      %s4077 = scalar_select %p4076, %s22, 1
      %p4078 = scmp.lt.s32.totalorder %s4075, 15
      %s4079 = scalar_select %p4078, %s4075, 15
      %s4080 = smul.addr %s4079, 8
      %s4081 = smul.addr %s4077, 128
      %s4082 = sadd.s32 %s4080, %s4081
      %s4083 = smul.addr %s4082, 4
      %s4084 = scalar_lea.vmem %s5, %s4083
      %p4085 = scmp.lt.s32.totalorder %s22, 1
      %s4086 = scalar_select %p4085, %s22, 1
      %p4087 = scmp.lt.s32.totalorder %s23, 0
      %s4088 = scalar_select %p4087, %s23, 0
      %s4089 = sadd.s32 %s4088, %s4086
      %s4090 = smul.addr %s4089, 2
      %s4091 = scalar_lea.vmem %s6, %s4090
      // Predicated region
      $region41: #{deconv_block_forward.2} parent=39 // pred_check
        %p4092 = pneg %p184
      $region42: #{deconv_block_forward.2} parent=39 // pred_check_branch
        %4094 = sbr.rel (%p4092) target = $region44
      $region43: #{deconv_block_forward.2} parent=39 // pred_region
        %s4095 = smul.u32 16, %s23
      $region44: #{deconv_block_forward.2} parent=39 // pred_fallthru
        _
      // Predicated region
      $region45: #{deconv_block_forward.2} parent=39 // pred_check
        %p4096 = pneg %p212
      $region46: #{deconv_block_forward.2} parent=39 // pred_check_branch
        %4098 = sbr.rel (%p4096) target = $region48
      $region47: #{deconv_block_forward.2} parent=39 // pred_region
        _
      $region48: #{deconv_block_forward.2} parent=39 // pred_fallthru
        _
    $region40: #{deconv_block_forward.2} parent=5 // pred_fallthru
      _
    %p4099 = scmp.le.s32.totalorder 2, %s13
    // Predicated region
    $region49: #{deconv_block_forward.2} parent=5 // pred_check
      %p4100 = pneg %p4099
    $region50: #{deconv_block_forward.2} parent=5 // pred_check_branch
      %4102 = sbr.rel (%p4100) target = $region52
    $region51: #{deconv_block_forward.2} parent=5 // pred_region
      %s4103 = ssub.s32 %s13, 2
      // Predicated region
      $region53: #{deconv_block_forward.2} parent=51 // pred_check
        %p4104 = pneg %p190
      $region54: #{deconv_block_forward.2} parent=51 // pred_check_branch
        %4106 = sbr.rel (%p4104) target = $region56
      $region55: #{deconv_block_forward.2} parent=51 // pred_region
        %s4107 = smul.u32 16, %s25
        %p4108 = scmp.lt.s32.totalorder %s24, 1
        %s4109 = scalar_select %p4108, %s24, 1
        %p4110 = scmp.lt.s32.totalorder %s4107, 15
        %s4111 = scalar_select %p4110, %s4107, 15
        %s4112 = smul.addr %s4111, 8
        %s4113 = smul.addr %s4109, 128
        %s4114 = sadd.s32 %s4112, %s4113
        %s4115 = smul.addr %s4114, 4
        %s4116 = scalar_lea.vmem %s5, %s4115
      $region56: #{deconv_block_forward.2} parent=51 // pred_fallthru
        _
      // Predicated region
      $region57: #{deconv_block_forward.2} parent=51 // pred_check
        %p4117 = pneg %p218
      $region58: #{deconv_block_forward.2} parent=51 // pred_check_branch
        %4119 = sbr.rel (%p4117) target = $region60
      $region59: #{deconv_block_forward.2} parent=51 // pred_region
        %p4120 = scmp.lt.s32.totalorder %s24, 1
        %s4121 = scalar_select %p4120, %s24, 1
        %p4122 = scmp.lt.s32.totalorder %s25, 0
        %s4123 = scalar_select %p4122, %s25, 0
        %s4124 = sadd.s32 %s4123, %s4121
        %s4125 = smul.addr %s4124, 2
        %s4126 = scalar_lea.vmem %s6, %s4125
      $region60: #{deconv_block_forward.2} parent=51 // pred_fallthru
        _
    $region52: #{deconv_block_forward.2} parent=5 // pred_fallthru
      _
  $region6: #{deconv_block_forward.2} parent=0 // loop_footer
    %s17 = sadd.s32 1, %s13
  $region7: #{deconv_block_forward.2} parent=0 // loop_footer_branch
    %12 = sbr.rel target = $region3
  $region8: #{deconv_block_forward.2} parent=0 // loop_exit
    _

</llo_original>
